<compile_context>
chip_gen: v7x
topology: tpu7x:2x2x1
jax: 0.10.0
libtpu: 0.0.40
codegen_flags: <defaults>
</compile_context>

<pallas_src>
import jax
import jax.numpy as jnp
from jax.experimental import pallas as pl
from jax.experimental.pallas import tpu as pltpu


def _make_clip_kernel(tn, slice_track_cols):
    """Build the kernel body.  `slice_track_cols` is True when the track
    features are VMEM-resident as a whole (D, N) block and the kernel must
    slice out the current (D, TN) column window itself."""

    def kernel(scale_ref, m_ref, t_ref,
               row_lse_ref, col_max_ref, col_sum_ref,
               ms_ref, rmax_ref, rsum_ref):
        # scale_ref   : (1, 1) f32 SMEM (whole array)          -- logit scale
        # m_ref       : (TM, D) f32 VMEM block, mixture row tile (index (i, 0))
        # t_ref       : (D, TN) or (D, N) bf16 VMEM block, track features^T
        # row_lse_ref : (TM, 1) f32 out block -> row-wise LSE of L
        # col_max_ref : (1, 1, TN) f32 out block -> per-tile column offset
        # col_sum_ref : (1, 1, TN) f32 out block -> per-tile column sum-exp
        # ms_ref      : (TM, D) bf16 scratch -- scaled + cast mixture tile
        # rmax_ref    : (TM, 1) f32 scratch  -- running row max
        # rsum_ref    : (TM, 1) f32 scratch  -- running row sum-exp
        j = pl.program_id(1)

        @pl.when(j == 0)
        def _init():
            # Hoisted once per row tile: scale + bf16 cast of the resident
            # mixture tile (bf16 LHS halves operand reads; f32 MXU accumulate).
            ms_ref[...] = (m_ref[...] * scale_ref[0, 0]).astype(ms_ref.dtype)
            rmax_ref[...] = jnp.full(rmax_ref.shape, -jnp.inf, dtype=jnp.float32)
            rsum_ref[...] = jnp.zeros(rsum_ref.shape, dtype=jnp.float32)

        if slice_track_cols:
            # Whole track resident in VMEM: slice the lane-aligned column window.
            col0 = pl.multiple_of(j * tn, tn)
            t_tile = t_ref[:, pl.ds(col0, tn)]                 # (D, TN) bf16
        else:
            t_tile = t_ref[...]                                # (D, TN) bf16

        # MXU: (TM, D) @ (D, TN), bf16 operands, f32 accumulation.  Track is
        # pre-transposed in the wrapper, so the RHS is already (K, N)-oriented.
        logits = jax.lax.dot_general(
            ms_ref[...], t_tile, (((1,), (0,)), ((), ())),
            preferred_element_type=jnp.float32)                # (TM, TN) f32

        # ---- single exp pass over the tile (EUP is the scarce unit) ----
        tile_rmax = jnp.max(logits, axis=1, keepdims=True)     # (TM, 1)
        p = jnp.exp(logits - tile_rmax)                        # (TM, TN), <= 1
        # TODO(synk): on v6e/v7x computing p in bf16 (sums kept f32) is ~2x EUP
        # if the EUP is still binding; kept f32 here for v5e portability.

        # ---- row direction: flash-style online log-sum-exp ----
        p_rsum = jnp.sum(p, axis=1, keepdims=True)             # (TM, 1)
        new_rmax = jnp.maximum(rmax_ref[...], tile_rmax)
        rsum_ref[...] = (jnp.exp(rmax_ref[...] - new_rmax) * rsum_ref[...]
                         + jnp.exp(tile_rmax - new_rmax) * p_rsum)
        rmax_ref[...] = new_rmax
        # Valid partial LSE every step; only the last column step's value is
        # written back to HBM (block index (i, 0)), so the output buffer is
        # never left uninitialized.
        row_lse_ref[...] = rmax_ref[...] + jnp.log(rsum_ref[...])

        # ---- column direction: per-tile scalar offset + MXU column sums ----
        # col_sum[b] = sum_a exp(L[a,b] - s) = (ones(1,TM) @ (w * P))[b].
        # Assumes the within-tile logit spread stays < ~80 so exp(L - s) never
        # underflows a column's own maximum; holds for L2-normalized features
        # at CLIP's default logit scale (spread <= 2*scale ~ 29).
        s = jnp.max(tile_rmax)                                  # scalar tile max
        w = jnp.exp(tile_rmax - s)                              # (TM, 1), <= 1
        ones_row = jnp.ones((1, p.shape[0]), jnp.float32)
        csum = jax.lax.dot_general(
            ones_row, w * p, (((1,), (0,)), ((), ())),
            preferred_element_type=jnp.float32)                 # (1, TN)
        col_sum_ref[...] = csum[None]                           # (1, 1, TN)
        col_max_ref[...] = jnp.full(col_max_ref.shape, s, dtype=jnp.float32)

    return kernel


def _pick_tile(n, preferred):
    for t in preferred:
        if n % t == 0:
            return t
    return n  # ragged batch: single full-extent tile


def _default_tiles(n):
    # TM sets the arithmetic intensity (~TM bf16-flops per streamed HBM byte):
    # prefer >= 1024 (v6e roofline), >= 512 (v7x), >= 256 (v5e); multiples of
    # 256 fill the 256x256 MXU on v6e/v7x.  Cap TM so the 'parallel' row axis
    # has >= 2 tiles (keeps v7x's second TensorCore busy).
    prefs_m = (1024, 512, 256, 128)
    capped = [t for t in prefs_m if n % t == 0 and 2 * t <= n]
    tm = capped[0] if capped else _pick_tile(n, prefs_m)
    # TN >= 256 amortizes the ~0.35us/step overhead; TN <= 512 bounds the
    # (TM, TN) f32 softmax temporaries in VMEM.
    tn = _pick_tile(n, (512, 256, 128))
    return tm, tn


def clip_loss(mixture_features, track_features, logit_scale_m, *,
              block_m=None, block_n=None, resident_track=None, interpret=False):
    """ClipLoss.forward for world_size=1, mlp_loss=False, weight_loss_kappa=0."""
    n, d = mixture_features.shape
    assert track_features.shape == (n, d)

    mix_f32 = mixture_features.astype(jnp.float32)
    trk_f32 = track_features.astype(jnp.float32)

    tm_d, tn_d = _default_tiles(n)
    tm = block_m if block_m is not None else tm_d
    tn = block_n if block_n is not None else tn_d
    assert n % tm == 0 and n % tn == 0, "tile sizes must divide N"
    nr, nc = n // tm, n // tn

    # RHS operand: bf16 (halves HBM->VMEM traffic for the streamed side) and
    # pre-transposed to (D, N) so the MXU sees a (K, N)-oriented operand
    # (no per-tile transpose work on the XLU).
    trk_bf16_t = trk_f32.T.astype(jnp.bfloat16)                 # (D, N)

    if resident_track is None:
        # Keep the track features fully VMEM-resident when they fit with room
        # to spare (budget counts the default double buffer), dropping their
        # HBM traffic from nr*N*D to N*D.  Biggest relative win on v5e.
        resident_track = (n * d * 2) * 2 <= (8 * 1024 * 1024)

    if resident_track:
        # Constant block index -> DMA'd once, reused for every grid step.
        # (pl.Buffered(1) would halve the footprint; default buffering kept for
        # portability -- the 2x is accounted for in the budget above.)
        t_spec = pl.BlockSpec((d, n), lambda i, j: (0, 0))
    else:
        t_spec = pl.BlockSpec((d, tn), lambda i, j: (0, j))

    scale = jnp.asarray(logit_scale_m, dtype=jnp.float32).reshape(1, 1)

    grid_spec = pltpu.PrefetchScalarGridSpec(
        num_scalar_prefetch=0,
        grid=(nr, nc),
        in_specs=[
            pl.BlockSpec(memory_space=pltpu.MemorySpace.SMEM),   # logit scale
            pl.BlockSpec((tm, d), lambda i, j: (i, 0)),          # mixture (f32)
            t_spec,                                              # track.T (bf16)
        ],
        out_specs=[
            pl.BlockSpec((tm, 1), lambda i, j: (i, 0)),          # row LSE
            pl.BlockSpec((1, 1, tn), lambda i, j: (i, 0, j)),    # col offsets
            pl.BlockSpec((1, 1, tn), lambda i, j: (i, 0, j)),    # col partial sums
        ],
        scratch_shapes=[
            pltpu.VMEM((tm, d), jnp.bfloat16),   # scaled + cast mixture tile
            pltpu.VMEM((tm, 1), jnp.float32),    # running row max
            pltpu.VMEM((tm, 1), jnp.float32),    # running row sum-exp
        ],
    )

    kernel = _make_clip_kernel(tn=tn,
                               slice_track_cols=(resident_track and nc > 1))

    row_lse, col_max_p, col_sum_p = pl.pallas_call(
        kernel,
        out_shape=(
            jax.ShapeDtypeStruct((n, 1), jnp.float32),
            jax.ShapeDtypeStruct((nr, 1, n), jnp.float32),
            jax.ShapeDtypeStruct((nr, 1, n), jnp.float32),
        ),
        grid_spec=grid_spec,
        compiler_params=pltpu.CompilerParams(
            # Row tiles independent -> sharded across v7x's two TensorCores;
            # column axis carries the online-LSE accumulators -> arbitrary.
            dimension_semantics=("parallel", "arbitrary"),
            # <= ~48 MiB keeps v7x (64 MiB/TC) safe; plenty on v5e/v6e too.
            vmem_limit_bytes=48 * 1024 * 1024,
        ),
        interpret=interpret,
    )(scale, mix_f32, trk_bf16_t)

    # ---- tiny O(NR * N) epilogue in plain JAX ----
    row_lse = row_lse[:, 0]                                     # (N,)
    cmax_p = col_max_p[:, 0, :]                                 # (NR, N)
    csum_p = col_sum_p[:, 0, :]                                 # (NR, N)
    cmax = jnp.max(cmax_p, axis=0)                              # (N,)
    col_lse = jnp.log(jnp.sum(csum_p * jnp.exp(cmax_p - cmax[None, :]),
                              axis=0)) + cmax                   # (N,)

    # Diagonal (labels) term, shared by both CE directions.  Kept exact f32 in
    # the wrapper (O(N*D), tiny).  TODO(synk): could be fused into i==j tiles.
    scale_f = jnp.asarray(logit_scale_m, jnp.float32)
    diag = scale_f * jnp.sum(mix_f32 * trk_f32, axis=-1)        # (N,)

    loss_mix = jnp.mean(row_lse - diag)    # CE(logits_per_mixture, labels)
    loss_trk = jnp.mean(col_lse - diag)    # CE(logits_per_track,  labels)
    return 0.5 * (loss_mix + loss_trk)


def clip_loss_ref(mixture_features, track_features, logit_scale_m):
    """Pure-JAX f32 reference of the PyTorch forward (same default-config path)."""
    hp = jax.lax.Precision.HIGHEST
    logits_pm = logit_scale_m * jnp.matmul(
        mixture_features, track_features.T, precision=hp)
    logits_pt = logit_scale_m * jnp.matmul(
        track_features, mixture_features.T, precision=hp)
    labels = jnp.arange(logits_pm.shape[0])

    def ce(logits):
        lse = jax.scipy.special.logsumexp(logits, axis=1)
        tgt = logits[jnp.arange(logits.shape[0]), labels]
        return jnp.mean(lse - tgt)

    return 0.5 * (ce(logits_pm) + ce(logits_pt))


if __name__ == "__main__":
    key = jax.random.PRNGKey(0)
    k1, k2 = jax.random.split(key)

    N, D = 512, 128   # batch (num logits) and embedding dim
    mixture = jax.random.normal(k1, (N, D), dtype=jnp.float32)
    track = jax.random.normal(k2, (N, D), dtype=jnp.float32)
    # CLIP convention: features are L2-normalized before the contrastive loss.
    mixture = mixture / jnp.linalg.norm(mixture, axis=-1, keepdims=True)
    track = track / jnp.linalg.norm(track, axis=-1, keepdims=True)
    logit_scale_m = jnp.float32(1.0 / 0.07)   # CLIP default init

    ref = clip_loss_ref(mixture, track, logit_scale_m)

    # 1) Default config: auto tiles (TM=256, TN=512), track VMEM-resident.
    loss_resident = clip_loss(mixture, track, logit_scale_m)
    jax.block_until_ready(loss_resident)

    # 2) Resident track with a 2x2 grid: exercises the in-kernel column
    #    slicing of the resident (D, N) block and the online row LSE.
    loss_resident_tiled = clip_loss(mixture, track, logit_scale_m,
                                    block_m=256, block_n=256,
                                    resident_track=True)
    jax.block_until_ready(loss_resident_tiled)

    # 3) Streamed-track path with a 4x4 grid: exercises the streamed (D, TN)
    #    BlockSpec and the column partial-stat merge across row tiles.
    loss_streamed = clip_loss(mixture, track, logit_scale_m,
                              block_m=128, block_n=128, resident_track=False)
    jax.block_until_ready(loss_streamed)

    # bf16 MXU operands (f32 accumulation) -> ~1e-3-level differences vs the
    # all-f32 reference; tolerance relaxed accordingly.
    assert jnp.allclose(loss_resident, ref, rtol=1e-2, atol=1e-2), (loss_resident, ref)
    assert jnp.allclose(loss_resident_tiled, ref, rtol=1e-2, atol=1e-2), (loss_resident_tiled, ref)
    assert jnp.allclose(loss_streamed, ref, rtol=1e-2, atol=1e-2), (loss_streamed, ref)

    print("KERNEL_OK")
</pallas_src>

<mosaic_0001>
module attributes {stable_mosaic.version = 11 : i64} {
  func.func @kernel(%arg0: i32, %arg1: i32, %arg2: memref<1x1xf32, #tpu.memory_space<smem>>, %arg3: memref<256x128xf32, #tpu.memory_space<vmem>>, %arg4: memref<128x512xbf16, #tpu.memory_space<vmem>>, %arg5: memref<256x1xf32, #tpu.memory_space<vmem>>, %arg6: memref<1x1x512xf32, #tpu.memory_space<vmem>>, %arg7: memref<1x1x512xf32, #tpu.memory_space<vmem>>, %arg8: memref<256x128xbf16, #tpu.memory_space<vmem>>, %arg9: memref<256x1xf32, #tpu.memory_space<vmem>>, %arg10: memref<256x1xf32, #tpu.memory_space<vmem>>) attributes {dimension_semantics = [#tpu.dimension_semantics<parallel>, #tpu.dimension_semantics<arbitrary>], iteration_bounds = array<i64: 2, 1>, scalar_prefetch = 0 : i64, scratch_operands = 3 : i64, tpu.core_type = #tpu.core_type<tc>, window_params = [{transform_indices = @transform_0, window_bounds = array<i64: 1, 1>}, {transform_indices = @transform_1, window_bounds = array<i64: 256, 128>}, {pipeline_mode = #tpu.pipeline_mode<synchronous>, transform_indices = @transform_2, window_bounds = array<i64: 128, 512>}, {transform_indices = @transform_3, window_bounds = array<i64: 256, 1>}, {transform_indices = @transform_4, window_bounds = array<i64: 1, 1, 512>}, {transform_indices = @transform_5, window_bounds = array<i64: 1, 1, 512>}]} {
    %c0_i32 = arith.constant 0 : i32
    %0 = arith.cmpi eq, %arg1, %c0_i32 : i32
    %1 = arith.extui %0 : i1 to i32
    %c0_i32_0 = arith.constant 0 : i32
    %2 = arith.cmpi ne, %1, %c0_i32_0 : i32
    scf.if %2 {
      %c0_31 = arith.constant 0 : index
      %c0_32 = arith.constant 0 : index
      %46 = vector.load %arg3[%c0_31, %c0_32] : memref<256x128xf32, #tpu.memory_space<vmem>>, vector<256x128xf32>
      %c0_33 = arith.constant 0 : index
      %c0_34 = arith.constant 0 : index
      %47 = memref.load %arg2[%c0_33, %c0_34] : memref<1x1xf32, #tpu.memory_space<smem>>
      %48 = vector.broadcast %47 : f32 to vector<256x128xf32>
      %49 = arith.mulf %46, %48 : vector<256x128xf32>
      %50 = arith.truncf %49 : vector<256x128xf32> to vector<256x128xbf16>
      %c0_35 = arith.constant 0 : index
      %c0_36 = arith.constant 0 : index
      %51 = vector.load %arg8[%c0_35, %c0_36] : memref<256x128xbf16, #tpu.memory_space<vmem>>, vector<256x128xbf16>
      tpu.vector_store %arg8[%c0_35, %c0_36], %50 {strides = array<i32>} : memref<256x128xbf16, #tpu.memory_space<vmem>>, vector<256x128xbf16>,
      %cst_37 = arith.constant 0xFF800000 : f32
      %52 = vector.broadcast %cst_37 : f32 to vector<256x1xf32>
      %c0_38 = arith.constant 0 : index
      %c0_39 = arith.constant 0 : index
      %53 = vector.load %arg9[%c0_38, %c0_39] : memref<256x1xf32, #tpu.memory_space<vmem>>, vector<256x1xf32>
      tpu.vector_store %arg9[%c0_38, %c0_39], %52 {strides = array<i32>} : memref<256x1xf32, #tpu.memory_space<vmem>>, vector<256x1xf32>,
      %cst_40 = arith.constant 0.000000e+00 : f32
      %54 = vector.broadcast %cst_40 : f32 to vector<256x1xf32>
      %c0_41 = arith.constant 0 : index
      %c0_42 = arith.constant 0 : index
      %55 = vector.load %arg10[%c0_41, %c0_42] : memref<256x1xf32, #tpu.memory_space<vmem>>, vector<256x1xf32>
      tpu.vector_store %arg10[%c0_41, %c0_42], %54 {strides = array<i32>} : memref<256x1xf32, #tpu.memory_space<vmem>>, vector<256x1xf32>,
    } else {
    }
    %c0 = arith.constant 0 : index
    %c0_1 = arith.constant 0 : index
    %3 = vector.load %arg4[%c0, %c0_1] : memref<128x512xbf16, #tpu.memory_space<vmem>>, vector<128x512xbf16>
    %c0_2 = arith.constant 0 : index
    %c0_3 = arith.constant 0 : index
    %4 = vector.load %arg8[%c0_2, %c0_3] : memref<256x128xbf16, #tpu.memory_space<vmem>>, vector<256x128xbf16>
    %cst = arith.constant dense<0.000000e+00> : vector<256x512xf32>
    %5 = tpu.matmul %4, %3, %cst {dimension_numbers = #tpu.dot_dimension_numbers<[1], [0], [0], [1], [0, 0, 1, 1], [], []>} : vector<256x128xbf16>, vector<128x512xbf16>, vector<256x512xf32> -> vector<256x512xf32>
    %cst_4 = arith.constant dense<0xFF800000> : vector<256xf32>
    %6 = vector.multi_reduction <maximumf>, %5, %cst_4 [1] : vector<256x512xf32> to vector<256xf32>
    %7 = vector.shape_cast %6 : vector<256xf32> to vector<256x1xf32>
    %8 = vector.broadcast %7 : vector<256x1xf32> to vector<256x512xf32>
    %9 = arith.subf %5, %8 : vector<256x512xf32>
    %10 = math.exp %9 : vector<256x512xf32>
    %cst_5 = arith.constant dense<0.000000e+00> : vector<256xf32>
    %11 = vector.multi_reduction <add>, %10, %cst_5 [1] : vector<256x512xf32> to vector<256xf32>
    %12 = vector.shape_cast %11 : vector<256xf32> to vector<256x1xf32>
    %c0_6 = arith.constant 0 : index
    %c0_7 = arith.constant 0 : index
    %13 = vector.load %arg9[%c0_6, %c0_7] : memref<256x1xf32, #tpu.memory_space<vmem>>, vector<256x1xf32>
    %14 = arith.maximumf %13, %7 : vector<256x1xf32>
    %c0_8 = arith.constant 0 : index
    %c0_9 = arith.constant 0 : index
    %15 = vector.load %arg9[%c0_8, %c0_9] : memref<256x1xf32, #tpu.memory_space<vmem>>, vector<256x1xf32>
    %16 = arith.subf %15, %14 : vector<256x1xf32>
    %17 = math.exp %16 : vector<256x1xf32>
    %c0_10 = arith.constant 0 : index
    %c0_11 = arith.constant 0 : index
    %18 = vector.load %arg10[%c0_10, %c0_11] : memref<256x1xf32, #tpu.memory_space<vmem>>, vector<256x1xf32>
    %19 = arith.mulf %17, %18 : vector<256x1xf32>
    %20 = arith.subf %7, %14 : vector<256x1xf32>
    %21 = math.exp %20 : vector<256x1xf32>
    %22 = arith.mulf %21, %12 : vector<256x1xf32>
    %23 = arith.addf %19, %22 : vector<256x1xf32>
    %c0_12 = arith.constant 0 : index
    %c0_13 = arith.constant 0 : index
    %24 = vector.load %arg10[%c0_12, %c0_13] : memref<256x1xf32, #tpu.memory_space<vmem>>, vector<256x1xf32>
    tpu.vector_store %arg10[%c0_12, %c0_13], %23 {strides = array<i32>} : memref<256x1xf32, #tpu.memory_space<vmem>>, vector<256x1xf32>,
    %c0_14 = arith.constant 0 : index
    %c0_15 = arith.constant 0 : index
    %25 = vector.load %arg9[%c0_14, %c0_15] : memref<256x1xf32, #tpu.memory_space<vmem>>, vector<256x1xf32>
    tpu.vector_store %arg9[%c0_14, %c0_15], %14 {strides = array<i32>} : memref<256x1xf32, #tpu.memory_space<vmem>>, vector<256x1xf32>,
    %c0_16 = arith.constant 0 : index
    %c0_17 = arith.constant 0 : index
    %26 = vector.load %arg9[%c0_16, %c0_17] : memref<256x1xf32, #tpu.memory_space<vmem>>, vector<256x1xf32>
    %c0_18 = arith.constant 0 : index
    %c0_19 = arith.constant 0 : index
    %27 = vector.load %arg10[%c0_18, %c0_19] : memref<256x1xf32, #tpu.memory_space<vmem>>, vector<256x1xf32>
    %28 = math.log %27 : vector<256x1xf32>
    %29 = arith.addf %26, %28 : vector<256x1xf32>
    %c0_20 = arith.constant 0 : index
    %c0_21 = arith.constant 0 : index
    %30 = vector.load %arg5[%c0_20, %c0_21] : memref<256x1xf32, #tpu.memory_space<vmem>>, vector<256x1xf32>
    tpu.vector_store %arg5[%c0_20, %c0_21], %29 {strides = array<i32>} : memref<256x1xf32, #tpu.memory_space<vmem>>, vector<256x1xf32>,
    %31 = vector.shape_cast %7 : vector<256x1xf32> to vector<1x256x1xf32>
    %cst_22 = arith.constant dense<0xFF800000> : vector<1xf32>
    %32 = vector.multi_reduction <maximumf>, %31, %cst_22 [1, 2] : vector<1x256x1xf32> to vector<1xf32>
    %33 = vector.shape_cast %32 : vector<1xf32> to vector<1x1x1xf32>
    %34 = vector.extract %33[0, 0, 0] : f32 from vector<1x1x1xf32>
    %35 = vector.broadcast %34 : f32 to vector<256x1xf32>
    %36 = arith.subf %7, %35 : vector<256x1xf32>
    %37 = math.exp %36 : vector<256x1xf32>
    %cst_23 = arith.constant 1.000000e+00 : f32
    %38 = vector.broadcast %cst_23 : f32 to vector<1x256xf32>
    %39 = vector.broadcast %37 : vector<256x1xf32> to vector<256x512xf32>
    %40 = arith.mulf %39, %10 : vector<256x512xf32>
    %cst_24 = arith.constant dense<0.000000e+00> : vector<1x512xf32>
    %41 = tpu.matmul %38, %40, %cst_24 {dimension_numbers = #tpu.dot_dimension_numbers<[1], [0], [0], [1], [0, 0, 1, 1], [], []>} : vector<1x256xf32>, vector<256x512xf32>, vector<1x512xf32> -> vector<1x512xf32>
    %42 = vector.shape_cast %41 : vector<1x512xf32> to vector<1x1x512xf32>
    %c0_25 = arith.constant 0 : index
    %c0_26 = arith.constant 0 : index
    %c0_27 = arith.constant 0 : index
    %43 = vector.load %arg7[%c0_25, %c0_26, %c0_27] : memref<1x1x512xf32, #tpu.memory_space<vmem>>, vector<1x1x512xf32>
    tpu.vector_store %arg7[%c0_25, %c0_26, %c0_27], %42 {strides = array<i32>} : memref<1x1x512xf32, #tpu.memory_space<vmem>>, vector<1x1x512xf32>,
    %44 = vector.broadcast %34 : f32 to vector<1x1x512xf32>
    %c0_28 = arith.constant 0 : index
    %c0_29 = arith.constant 0 : index
    %c0_30 = arith.constant 0 : index
    %45 = vector.load %arg6[%c0_28, %c0_29, %c0_30] : memref<1x1x512xf32, #tpu.memory_space<vmem>>, vector<1x1x512xf32>
    tpu.vector_store %arg6[%c0_28, %c0_29, %c0_30], %44 {strides = array<i32>} : memref<1x1x512xf32, #tpu.memory_space<vmem>>, vector<1x1x512xf32>,
    return
  }
  func.func @transform_0(%arg0: i32, %arg1: i32) -> (i32, i32) {
    %c0_i32 = arith.constant 0 : i32
    %c0_i32_0 = arith.constant 0 : i32
    %c0_i32_1 = arith.constant 0 : i32
    return %c0_i32, %c0_i32_0 : i32, i32
  }
  func.func @transform_1(%arg0: i32, %arg1: i32) -> (i32, i32) {
    %c0_i32 = arith.constant 0 : i32
    %c0_i32_0 = arith.constant 0 : i32
    return %arg0, %c0_i32 : i32, i32
  }
  func.func @transform_2(%arg0: i32, %arg1: i32) -> (i32, i32) {
    %c0_i32 = arith.constant 0 : i32
    %c0_i32_0 = arith.constant 0 : i32
    %c0_i32_1 = arith.constant 0 : i32
    return %c0_i32, %c0_i32_0 : i32, i32
  }
  func.func @transform_3(%arg0: i32, %arg1: i32) -> (i32, i32) {
    %c0_i32 = arith.constant 0 : i32
    %c0_i32_0 = arith.constant 0 : i32
    return %arg0, %c0_i32 : i32, i32
  }
  func.func @transform_4(%arg0: i32, %arg1: i32) -> (i32, i32, i32) {
    %c0_i32 = arith.constant 0 : i32
    %c0_i32_0 = arith.constant 0 : i32
    return %arg0, %c0_i32, %arg1 : i32, i32, i32
  }
  func.func @transform_5(%arg0: i32, %arg1: i32) -> (i32, i32, i32) {
    %c0_i32 = arith.constant 0 : i32
    %c0_i32_0 = arith.constant 0 : i32
    return %arg0, %c0_i32, %arg1 : i32, i32, i32
  }
}

</mosaic_0001>

<llo_original>
// kernel: tpu_custom_call.1
$region0: #{tpu_custom_call.1}
  #allocation0 [shape = 'u32[]', space=smem, size = 0x4, offset = 0x4, fixed_abs, tag = 'smem constant byte address 0x4 - core index']
  #allocation1 [shape = 'u32[144,128]{1,0:T(1,128)}', space=vmem, size = 0x12000, scoped, tag = 'internal scratch']
  #allocation2 [shape = 'bf16[256,128]{1,0:T(16,128)(2,1)}', space=vmem, size = 0x10000, scoped, tag = 'scratch operand']
  #allocation3 [shape = 'f32[256,1]{1,0:T(8,128)}', space=vmem, size = 0x20000, scoped, tag = 'scratch operand']
  #allocation4 [shape = 'f32[256,1]{1,0:T(8,128)}', space=vmem, size = 0x20000, scoped, tag = 'scratch operand']
  #allocation5 [shape = 'f32[1,1]{1,0:T(1,128)S(6)}', space=smem, size = 0x200, scoped, tag = 'scoped memory for tpu_custom_call.1']
  %s0 = inlined_call_operand.<no memory space> [shape: f32[1,1], index: 0, kind: input, shape index: {}]
  %s1 = inlined_call_operand.hbm [shape: f32[512,128], index: 1, kind: input, shape index: {}]
  %s2 = inlined_call_operand.hbm [shape: bf16[128,512], index: 2, kind: input, shape index: {}]
  %s3 = inlined_call_operand.vmem [shape: f32[512,1], index: 3, kind: output, shape index: {0}]
  %s4 = inlined_call_operand.hbm [shape: f32[2,1,512], index: 4, kind: output, shape index: {1}]
  %s5 = inlined_call_operand.hbm [shape: f32[2,1,512], index: 5, kind: output, shape index: {2}]
  %6 = xla_tuple %s3, %s4, %s5
  %s7 = sld [smem:[#allocation0]]
  $region73: #{tpu_custom_call.1} parent=0
    _
  %s9 = ssub.s32 1, %s7
  %s10 = scalar_select 0, %s9, %s7
  %11 = sst [smem:[#allocation5]] %s0
  $region1: #{tpu_custom_call.1} parent=0
    #allocation6 [shape = 'u8[262144]{0}', space=vmem, size = 0x40000, scoped, tag = 'input window, operand 1']
    #allocation7 [shape = 's32[2]{0}', space=sflag, size = 0x8, scoped, tag = 'scoped memory for tpu_custom_call.1']
    #allocation8 [shape = 's32[2]{0}', space=sflag, size = 0x8, scoped, tag = 'scoped memory for tpu_custom_call.1']
    #allocation9 [shape = 'u8[131072]{0}', space=vmem, size = 0x20000, scoped, tag = 'input window, operand 2, single buffered']
    #allocation10 [shape = 's32[1]{0}', space=sflag, size = 0x4, scoped, tag = 'scoped memory for tpu_custom_call.1']
    #allocation11 [shape = 'u8[4096]{0}', space=vmem, size = 0x1000, scoped, tag = 'output window, operand 1']
    #allocation12 [shape = 'u8[4096]{0}', space=vmem, size = 0x1000, scoped, tag = 'output window, operand 2']
    #allocation13 [shape = 's32[2]{0}', space=sflag, size = 0x8, scoped, tag = 'scoped memory for tpu_custom_call.1']
    %12 = vsyncpa [#allocation7], 0
    %s13 = scalar_lea.sflag [#allocation7], 1
    %14 = vsyncpa %s13, 0
    %15 = vsyncpa [#allocation10], 0
    %16 = vsyncpa [#allocation8], 0
    %s17 = scalar_lea.sflag [#allocation8], 1
    %18 = vsyncpa %s17, 0
    %19 = vsyncpa [#allocation13], 0
    %s20 = scalar_lea.sflag [#allocation13], 1
    %21 = vsyncpa %s20, 0
    loop: start=0, step=1, limit=4
    $region2: #{tpu_custom_call.1} parent=1 // loop_pre_header
      _
    $region3: #{tpu_custom_call.1} parent=1 // loop_header
      %s23 = sphi 0, %s27
      %p24 = scmp.ge.s32.totalorder %s23, 4
      %s30 = sphi 0, %s42
      %s31 = sphi 0, %s38
      %s32 = sphi 0, %s30
      %s33 = sphi 0, %s31
      %s34 = sphi 0, %s32
      %s35 = sphi 0, %s33
      %s43 = sphi 0, %s43
      %s45 = sphi 0, %s43
      %s46 = sphi 0, %s45
      %s60 = sphi 0, %s46
      %s66 = sphi 0, %s68
      %s69 = sphi 0, %s66
      %s70 = sphi 0, %s69
      %s86 = sphi 0, %s70
      %s90 = sphi 0, %s90
      %s92 = sphi 0, %s90
      %s93 = sphi 0, %s92
      %s107 = sphi 0, %s93
      %s113 = sphi 0, %s115
      %s116 = sphi 0, %s113
      %s117 = sphi 0, %s116
      %s133 = sphi 0, %s117
      %s141 = sphi 0, %s143
      %s144 = sphi 0, %s141
      %s145 = sphi 0, %s144
      %s161 = sphi 0, %s145
      %s169 = sphi 0, %s171
      %s172 = sphi 0, %s169
      %s173 = sphi 0, %s172
      %s189 = sphi 0, %s173
    $region4: #{tpu_custom_call.1} parent=1 // loop_header_branch
      %26 = sbr.rel (%p24) target = $region8
    $region5: #{tpu_custom_call.1} parent=1 // loop_body
      %s28 = ssub.s32 %s23, 1
      %s29 = ssub.s32 %s23, 2
      %s36 = sadd.s32 1, %s31
      %p37 = scmp.ge.s32.totalorder %s36, 1
      %s38 = scalar_select %p37, 0, %s36
      %s39 = sadd.s32 1, %s30
      %s40 = scalar_select %p37, %s39, %s30
      %p41 = scmp.ge.s32.totalorder %s40, 2
      %s42 = scalar_select %p41, 0, %s40
      %s44 = sadd.s32 %s43, 1
      %p47 = scmp.eq.s32.totalorder %s23, 1
      %p48 = scmp.ne.s32.totalorder %s43, %s45
      %p49 = scmp.eq.s32.totalorder %s23, 0
      %p50 = por %p48, %p49
      %p51 = scmp.ne.s32.totalorder %s43, %s45
      %p52 = scmp.eq.s32.totalorder %s28, 1
      %p53 = por %p51, %p52
      %p54 = scmp.ne.s32.totalorder %s45, %s46
      %p55 = scmp.eq.s32.totalorder %s28, 0
      %p56 = por %p54, %p55
      %p57 = scmp.ne.s32.totalorder %s45, %s46
      %p58 = scmp.eq.s32.totalorder %s29, 1
      %p59 = por %p57, %p58
      %p61 = scmp.ne.s32.totalorder %s46, %s60
      %p62 = scmp.eq.s32.totalorder %s29, 0
      %p63 = por %p61, %p62
      %s64 = ssub.s32 %s30, %s42
      %p65 = scmp.eq.s32.totalorder %s64, 0
      %s67 = sadd.s32 %s66, 1
      %s68 = scalar_select %p65, %s66, %s67
      %p71 = pneg %p65
      %p72 = scmp.eq.s32.totalorder %s23, 1
      %p73 = por %p71, %p72
      %p74 = scmp.ne.s32.totalorder %s66, %s69
      %p75 = scmp.eq.s32.totalorder %s23, 0
      %p76 = por %p74, %p75
      %p77 = scmp.ne.s32.totalorder %s66, %s69
      %p78 = scmp.eq.s32.totalorder %s28, 1
      %p79 = por %p77, %p78
      %p80 = scmp.ne.s32.totalorder %s69, %s70
      %p81 = scmp.eq.s32.totalorder %s28, 0
      %p82 = por %p80, %p81
      %p83 = scmp.ne.s32.totalorder %s69, %s70
      %p84 = scmp.eq.s32.totalorder %s29, 1
      %p85 = por %p83, %p84
      %p87 = scmp.ne.s32.totalorder %s70, %s86
      %p88 = scmp.eq.s32.totalorder %s29, 0
      %p89 = por %p87, %p88
      %s91 = sadd.s32 %s90, 1
      %p94 = scmp.eq.s32.totalorder %s23, 1
      %p95 = scmp.ne.s32.totalorder %s90, %s92
      %p96 = scmp.eq.s32.totalorder %s23, 0
      %p97 = por %p95, %p96
      %p98 = scmp.ne.s32.totalorder %s90, %s92
      %p99 = scmp.eq.s32.totalorder %s28, 1
      %p100 = por %p98, %p99
      %p101 = scmp.ne.s32.totalorder %s92, %s93
      %p102 = scmp.eq.s32.totalorder %s28, 0
      %p103 = por %p101, %p102
      %p104 = scmp.ne.s32.totalorder %s92, %s93
      %p105 = scmp.eq.s32.totalorder %s29, 1
      %p106 = por %p104, %p105
      %p108 = scmp.ne.s32.totalorder %s93, %s107
      %p109 = scmp.eq.s32.totalorder %s29, 0
      %p110 = por %p108, %p109
      %s111 = ssub.s32 %s30, %s42
      %p112 = scmp.eq.s32.totalorder %s111, 0
      %s114 = sadd.s32 %s113, 1
      %s115 = scalar_select %p112, %s113, %s114
      %p118 = pneg %p112
      %p119 = scmp.eq.s32.totalorder %s23, 1
      %p120 = por %p118, %p119
      %p121 = scmp.ne.s32.totalorder %s113, %s116
      %p122 = scmp.eq.s32.totalorder %s23, 0
      %p123 = por %p121, %p122
      %p124 = scmp.ne.s32.totalorder %s113, %s116
      %p125 = scmp.eq.s32.totalorder %s28, 1
      %p126 = por %p124, %p125
      %p127 = scmp.ne.s32.totalorder %s116, %s117
      %p128 = scmp.eq.s32.totalorder %s28, 0
      %p129 = por %p127, %p128
      %p130 = scmp.ne.s32.totalorder %s116, %s117
      %p131 = scmp.eq.s32.totalorder %s29, 1
      %p132 = por %p130, %p131
      %p134 = scmp.ne.s32.totalorder %s117, %s133
      %p135 = scmp.eq.s32.totalorder %s29, 0
      %p136 = por %p134, %p135
      %s137 = ssub.s32 %s30, %s42
      %s138 = ssub.s32 %s31, %s38
      %s139 = sor.u32 %s137, %s138
      %p140 = scmp.eq.s32.totalorder %s139, 0
      %s142 = sadd.s32 %s141, 1
      %s143 = scalar_select %p140, %s141, %s142
      %p146 = pneg %p140
      %p147 = scmp.eq.s32.totalorder %s23, 1
      %p148 = por %p146, %p147
      %p149 = scmp.ne.s32.totalorder %s141, %s144
      %p150 = scmp.eq.s32.totalorder %s23, 0
      %p151 = por %p149, %p150
      %p152 = scmp.ne.s32.totalorder %s141, %s144
      %p153 = scmp.eq.s32.totalorder %s28, 1
      %p154 = por %p152, %p153
      %p155 = scmp.ne.s32.totalorder %s144, %s145
      %p156 = scmp.eq.s32.totalorder %s28, 0
      %p157 = por %p155, %p156
      %p158 = scmp.ne.s32.totalorder %s144, %s145
      %p159 = scmp.eq.s32.totalorder %s29, 1
      %p160 = por %p158, %p159
      %p162 = scmp.ne.s32.totalorder %s145, %s161
      %p163 = scmp.eq.s32.totalorder %s29, 0
      %p164 = por %p162, %p163
      %s165 = ssub.s32 %s30, %s42
      %s166 = ssub.s32 %s31, %s38
      %s167 = sor.u32 %s165, %s166
      %p168 = scmp.eq.s32.totalorder %s167, 0
      %s170 = sadd.s32 %s169, 1
      %s171 = scalar_select %p168, %s169, %s170
      %p174 = pneg %p168
      %p175 = scmp.eq.s32.totalorder %s23, 1
      %p176 = por %p174, %p175
      %p177 = scmp.ne.s32.totalorder %s169, %s172
      %p178 = scmp.eq.s32.totalorder %s23, 0
      %p179 = por %p177, %p178
      %p180 = scmp.ne.s32.totalorder %s169, %s172
      %p181 = scmp.eq.s32.totalorder %s28, 1
      %p182 = por %p180, %p181
      %p183 = scmp.ne.s32.totalorder %s172, %s173
      %p184 = scmp.eq.s32.totalorder %s28, 0
      %p185 = por %p183, %p184
      %p186 = scmp.ne.s32.totalorder %s172, %s173
      %p187 = scmp.eq.s32.totalorder %s29, 1
      %p188 = por %p186, %p187
      %p190 = scmp.ne.s32.totalorder %s173, %s189
      %p191 = scmp.eq.s32.totalorder %s29, 0
      %p192 = por %p190, %p191
      %p193 = scmp.le.s32.totalorder 1, %s23
      %p194 = scmp.lt.s32.totalorder %s23, 3
      %p195 = pnand %p193, %p194
      %p196 = pneg %p195
      // Predicated region
      $region9: #{tpu_custom_call.1} parent=5 // pred_check
        _
      $region10: #{tpu_custom_call.1} parent=5 // pred_check_branch
        %198 = sbr.rel (%p195) target = $region12
      $region11: #{tpu_custom_call.1} parent=5 // pred_region
        %s199 = ssub.s32 %s23, 1
        // Predicated region
        $region13: #{tpu_custom_call.1} parent=11 // pred_check
          %p200 = pneg %p56
        $region14: #{tpu_custom_call.1} parent=11 // pred_check_branch
          %202 = sbr.rel (%p200) target = $region16
        $region15: #{tpu_custom_call.1} parent=11 // pred_region
          _
        $region16: #{tpu_custom_call.1} parent=11 // pred_fallthru
          _
        // Predicated region
        $region17: #{tpu_custom_call.1} parent=11 // pred_check
          %p203 = pneg %p103
        $region18: #{tpu_custom_call.1} parent=11 // pred_check_branch
          %205 = sbr.rel (%p203) target = $region20
        $region19: #{tpu_custom_call.1} parent=11 // pred_region
          %s207 = ssub.s32 4096, 4096
          %208 = vsyncadd [#allocation10], %s207
          %s209 = sshll.u32 [#allocation9], 4
          %s210 = int_to_ptr.vmem [resolvable:$true] %s209
          %215 = dma.hbm_to_vmem [thread:$0]  %s2, 4096, %s210, [#allocation10], 256, 256, 16
        $region20: #{tpu_custom_call.1} parent=11 // pred_fallthru
          _
      $region12: #{tpu_custom_call.1} parent=5 // pred_fallthru
        _
      %p216 = scmp.lt.s32.totalorder %s23, 2
      // Predicated region
      $region21: #{tpu_custom_call.1} parent=5 // pred_check
        %p217 = pneg %p216
      $region22: #{tpu_custom_call.1} parent=5 // pred_check_branch
        %219 = sbr.rel (%p217) target = $region24
      $region23: #{tpu_custom_call.1} parent=5 // pred_region
        // Predicated region
        $region25: #{tpu_custom_call.1} parent=23 // pred_check
          %p220 = pneg %p76
        $region26: #{tpu_custom_call.1} parent=23 // pred_check_branch
          %222 = sbr.rel (%p220) target = $region28
        $region27: #{tpu_custom_call.1} parent=23 // pred_region
          %s223 = sand.u32 %s66, 1
          %s224 = scalar_lea.sflag [#allocation7], %s223
          %s225 = sand.u32 %s66, 1
          %s226 = smul.addr %s225, 256
          %s227 = scalar_lea.vmem [#allocation6], %s226
          %s228 = smul.u32 32, %s30
          %s230 = ssub.s32 4096, 4096
          %231 = vsyncadd %s224, %s230
          %s232 = smul.addr %s228, 128
          %s233 = scalar_lea.hbm %s1, %s232
          %s234 = sshll.u32 %s227, 4
          %s235 = int_to_ptr.vmem [resolvable:$true] %s234
          %240 = dma.hbm_to_vmem [thread:$0]  %s233, 4096, %s235, %s224, 128, 128, 8
        $region28: #{tpu_custom_call.1} parent=23 // pred_fallthru
          _
      $region24: #{tpu_custom_call.1} parent=5 // pred_fallthru
        _
      %p241 = scmp.le.s32.totalorder 1, %s23
      %p242 = scmp.lt.s32.totalorder %s23, 3
      %p243 = pnand %p241, %p242
      %p244 = pneg %p243
      // Predicated region
      $region29: #{tpu_custom_call.1} parent=5 // pred_check
        _
      $region30: #{tpu_custom_call.1} parent=5 // pred_check_branch
        %246 = sbr.rel (%p243) target = $region32
      $region31: #{tpu_custom_call.1} parent=5 // pred_region
        %s247 = ssub.s32 %s23, 1
        %s248 = sand.u32 %s69, 1
        %s249 = scalar_lea.sflag [#allocation7], %s248
        %s250 = sand.u32 %s69, 1
        %s251 = smul.addr %s250, 256
        %s252 = scalar_lea.vmem [#allocation6], %s251
        // Predicated region
        $region33: #{tpu_custom_call.1} parent=31 // pred_check
          %p253 = pneg %p82
        $region34: #{tpu_custom_call.1} parent=31 // pred_check_branch
          %255 = sbr.rel (%p253) target = $region36
        $region35: #{tpu_custom_call.1} parent=31 // pred_region
          %256 = dma.done %s249, 4096
        $region36: #{tpu_custom_call.1} parent=31 // pred_fallthru
          _
        // Predicated region
        $region37: #{tpu_custom_call.1} parent=31 // pred_check
          %p257 = pneg %p103
        $region38: #{tpu_custom_call.1} parent=31 // pred_check_branch
          %259 = sbr.rel (%p257) target = $region40
        $region39: #{tpu_custom_call.1} parent=31 // pred_region
          %260 = dma.done [#allocation10], 4096
        $region40: #{tpu_custom_call.1} parent=31 // pred_fallthru
          _
        %p261 = pneg %p56
        %p262 = pneg %p53
        %s263 = sand.u32 %s69, 1
        %s264 = scalar_lea.sflag [#allocation7], %s263
        %s265 = sand.u32 %s69, 1
        %s266 = smul.addr %s265, 256
        %s267 = scalar_lea.vmem [#allocation6], %s266
        %p268 = pneg %p82
        %p269 = pneg %p79
        %p270 = pneg %p103
        %p271 = pneg %p100
        %p272 = pneg %p129
        %p273 = pneg %p126
        %s274 = smul.u32 32, %s32
        %p275 = scmp.lt.s32.totalorder %s274, 63
        %s276 = scalar_select %p275, %s274, 63
        %s277 = smul.addr %s276, 8
        %s278 = scalar_lea.vmem %s3, %s277
        %p279 = pneg %p157
        %p280 = pneg %p154
        %s281 = sand.u32 %s144, 1
        %s282 = scalar_lea.sflag [#allocation8], %s281
        %s283 = sand.u32 %s144, 1
        %s284 = smul.addr %s283, 4
        %s285 = scalar_lea.vmem [#allocation11], %s284
        %p286 = pneg %p185
        %p287 = pneg %p182
        %s288 = sand.u32 %s172, 1
        %s289 = scalar_lea.sflag [#allocation13], %s288
        %s290 = sand.u32 %s172, 1
        %s291 = smul.addr %s290, 4
        %s292 = scalar_lea.vmem [#allocation12], %s291
        %s293 = smul.u32 32, %s32
        %s294 = smul.u32 32, %s32
        %p295 = scmp.lt.s32.totalorder %s294, 63
        %s296 = scalar_select %p295, %s294, 63
        %s297 = smul.addr %s296, 8
        %s298 = scalar_lea.vmem %s3, %s297
        %s299 = smul.u32 32, %s32
        %s300 = smul.u32 4, %s33
        %s301 = smul.u32 4, %s33
        %p303 = scmp.eq.s32.totalorder %s33, 0
        // Predicated region
        $region41: #{tpu_custom_call.1} parent=31 // pred_check
          %p304 = pneg %p303
        $region42: #{tpu_custom_call.1} parent=31 // pred_check_branch
          %306 = sbr.rel (%p304) target = $region44
        $region43: #{tpu_custom_call.1} parent=31 // pred_region
          %v307 = vld [vmem:[%s252] sm:$0xff]
          %v308 = vld [vmem:[%s252 + $0x8] sm:$0xff]
          %v309 = vld [vmem:[%s252 + $0x10] sm:$0xff]
          %v310 = vld [vmem:[%s252 + $0x18] sm:$0xff]
          %v311 = vld [vmem:[%s252 + $0x20] sm:$0xff]
          %v312 = vld [vmem:[%s252 + $0x28] sm:$0xff]
          %v313 = vld [vmem:[%s252 + $0x30] sm:$0xff]
          %v314 = vld [vmem:[%s252 + $0x38] sm:$0xff]
          %v315 = vld [vmem:[%s252 + $0x40] sm:$0xff]
          %v316 = vld [vmem:[%s252 + $0x48] sm:$0xff]
          %v317 = vld [vmem:[%s252 + $0x50] sm:$0xff]
          %v318 = vld [vmem:[%s252 + $0x58] sm:$0xff]
          %v319 = vld [vmem:[%s252 + $0x60] sm:$0xff]
          %v320 = vld [vmem:[%s252 + $0x68] sm:$0xff]
          %v321 = vld [vmem:[%s252 + $0x70] sm:$0xff]
          %v322 = vld [vmem:[%s252 + $0x78] sm:$0xff]
          %v323 = vld [vmem:[%s252 + $0x80] sm:$0xff]
          %v324 = vld [vmem:[%s252 + $0x88] sm:$0xff]
          %v325 = vld [vmem:[%s252 + $0x90] sm:$0xff]
          %v326 = vld [vmem:[%s252 + $0x98] sm:$0xff]
          %v327 = vld [vmem:[%s252 + $0xa0] sm:$0xff]
          %v328 = vld [vmem:[%s252 + $0xa8] sm:$0xff]
          %v329 = vld [vmem:[%s252 + $0xb0] sm:$0xff]
          %v330 = vld [vmem:[%s252 + $0xb8] sm:$0xff]
          %v331 = vld [vmem:[%s252 + $0xc0] sm:$0xff]
          %v332 = vld [vmem:[%s252 + $0xc8] sm:$0xff]
          %v333 = vld [vmem:[%s252 + $0xd0] sm:$0xff]
          %v334 = vld [vmem:[%s252 + $0xd8] sm:$0xff]
          %v335 = vld [vmem:[%s252 + $0xe0] sm:$0xff]
          %v336 = vld [vmem:[%s252 + $0xe8] sm:$0xff]
          %v337 = vld [vmem:[%s252 + $0xf0] sm:$0xff]
          %v338 = vld [vmem:[%s252 + $0xf8] sm:$0xff]
          %s339 = sld [smem:[#allocation5]]
          %v340 = vstv %s339
          %v341 = vmul.f32 %v307, %v340
          %v342 = vmul.f32 %v308, %v340
          %v343 = vmul.f32 %v309, %v340
          %v344 = vmul.f32 %v310, %v340
          %v345 = vmul.f32 %v311, %v340
          %v346 = vmul.f32 %v312, %v340
          %v347 = vmul.f32 %v313, %v340
          %v348 = vmul.f32 %v314, %v340
          %v349 = vmul.f32 %v315, %v340
          %v350 = vmul.f32 %v316, %v340
          %v351 = vmul.f32 %v317, %v340
          %v352 = vmul.f32 %v318, %v340
          %v353 = vmul.f32 %v319, %v340
          %v354 = vmul.f32 %v320, %v340
          %v355 = vmul.f32 %v321, %v340
          %v356 = vmul.f32 %v322, %v340
          %v357 = vmul.f32 %v323, %v340
          %v358 = vmul.f32 %v324, %v340
          %v359 = vmul.f32 %v325, %v340
          %v360 = vmul.f32 %v326, %v340
          %v361 = vmul.f32 %v327, %v340
          %v362 = vmul.f32 %v328, %v340
          %v363 = vmul.f32 %v329, %v340
          %v364 = vmul.f32 %v330, %v340
          %v365 = vmul.f32 %v331, %v340
          %v366 = vmul.f32 %v332, %v340
          %v367 = vmul.f32 %v333, %v340
          %v368 = vmul.f32 %v334, %v340
          %v369 = vmul.f32 %v335, %v340
          %v370 = vmul.f32 %v336, %v340
          %v371 = vmul.f32 %v337, %v340
          %v372 = vmul.f32 %v338, %v340
          %v373 = vpack.c.bf16 %v342, %v341
          %v374 = vpack.c.bf16 %v344, %v343
          %v375 = vpack.c.bf16 %v346, %v345
          %v376 = vpack.c.bf16 %v348, %v347
          %v377 = vpack.c.bf16 %v350, %v349
          %v378 = vpack.c.bf16 %v352, %v351
          %v379 = vpack.c.bf16 %v354, %v353
          %v380 = vpack.c.bf16 %v356, %v355
          %v381 = vpack.c.bf16 %v358, %v357
          %v382 = vpack.c.bf16 %v360, %v359
          %v383 = vpack.c.bf16 %v362, %v361
          %v384 = vpack.c.bf16 %v364, %v363
          %v385 = vpack.c.bf16 %v366, %v365
          %v386 = vpack.c.bf16 %v368, %v367
          %v387 = vpack.c.bf16 %v370, %v369
          %v388 = vpack.c.bf16 %v372, %v371
          %389 = vst [vmem:[#allocation2] sm:$0xff] %v373
          %390 = vst [vmem:[#allocation2 + $0x8] sm:$0xff] %v374
          %391 = vst [vmem:[#allocation2 + $0x10] sm:$0xff] %v375
          %392 = vst [vmem:[#allocation2 + $0x18] sm:$0xff] %v376
          %393 = vst [vmem:[#allocation2 + $0x20] sm:$0xff] %v377
          %394 = vst [vmem:[#allocation2 + $0x28] sm:$0xff] %v378
          %395 = vst [vmem:[#allocation2 + $0x30] sm:$0xff] %v379
          %396 = vst [vmem:[#allocation2 + $0x38] sm:$0xff] %v380
          %397 = vst [vmem:[#allocation2 + $0x40] sm:$0xff] %v381
          %398 = vst [vmem:[#allocation2 + $0x48] sm:$0xff] %v382
          %399 = vst [vmem:[#allocation2 + $0x50] sm:$0xff] %v383
          %400 = vst [vmem:[#allocation2 + $0x58] sm:$0xff] %v384
          %401 = vst [vmem:[#allocation2 + $0x60] sm:$0xff] %v385
          %402 = vst [vmem:[#allocation2 + $0x68] sm:$0xff] %v386
          %403 = vst [vmem:[#allocation2 + $0x70] sm:$0xff] %v387
          %404 = vst [vmem:[#allocation2 + $0x78] sm:$0xff] %v388
          %vm405 = vcmask 7168
          %406 = vst.msk [vmem:[#allocation3] sm:$0xff] %vm405, -inf
          %407 = vst.msk [vmem:[#allocation3 + $0x8] sm:$0xff] %vm405, -inf
          %408 = vst.msk [vmem:[#allocation3 + $0x10] sm:$0xff] %vm405, -inf
          %409 = vst.msk [vmem:[#allocation3 + $0x18] sm:$0xff] %vm405, -inf
          %410 = vst.msk [vmem:[#allocation3 + $0x20] sm:$0xff] %vm405, -inf
          %411 = vst.msk [vmem:[#allocation3 + $0x28] sm:$0xff] %vm405, -inf
          %412 = vst.msk [vmem:[#allocation3 + $0x30] sm:$0xff] %vm405, -inf
          %413 = vst.msk [vmem:[#allocation3 + $0x38] sm:$0xff] %vm405, -inf
          %414 = vst.msk [vmem:[#allocation3 + $0x40] sm:$0xff] %vm405, -inf
          %415 = vst.msk [vmem:[#allocation3 + $0x48] sm:$0xff] %vm405, -inf
          %416 = vst.msk [vmem:[#allocation3 + $0x50] sm:$0xff] %vm405, -inf
          %417 = vst.msk [vmem:[#allocation3 + $0x58] sm:$0xff] %vm405, -inf
          %418 = vst.msk [vmem:[#allocation3 + $0x60] sm:$0xff] %vm405, -inf
          %419 = vst.msk [vmem:[#allocation3 + $0x68] sm:$0xff] %vm405, -inf
          %420 = vst.msk [vmem:[#allocation3 + $0x70] sm:$0xff] %vm405, -inf
          %421 = vst.msk [vmem:[#allocation3 + $0x78] sm:$0xff] %vm405, -inf
          %422 = vst.msk [vmem:[#allocation3 + $0x80] sm:$0xff] %vm405, -inf
          %423 = vst.msk [vmem:[#allocation3 + $0x88] sm:$0xff] %vm405, -inf
          %424 = vst.msk [vmem:[#allocation3 + $0x90] sm:$0xff] %vm405, -inf
          %425 = vst.msk [vmem:[#allocation3 + $0x98] sm:$0xff] %vm405, -inf
          %426 = vst.msk [vmem:[#allocation3 + $0xa0] sm:$0xff] %vm405, -inf
          %427 = vst.msk [vmem:[#allocation3 + $0xa8] sm:$0xff] %vm405, -inf
          %428 = vst.msk [vmem:[#allocation3 + $0xb0] sm:$0xff] %vm405, -inf
          %429 = vst.msk [vmem:[#allocation3 + $0xb8] sm:$0xff] %vm405, -inf
          %430 = vst.msk [vmem:[#allocation3 + $0xc0] sm:$0xff] %vm405, -inf
          %431 = vst.msk [vmem:[#allocation3 + $0xc8] sm:$0xff] %vm405, -inf
          %432 = vst.msk [vmem:[#allocation3 + $0xd0] sm:$0xff] %vm405, -inf
          %433 = vst.msk [vmem:[#allocation3 + $0xd8] sm:$0xff] %vm405, -inf
          %434 = vst.msk [vmem:[#allocation3 + $0xe0] sm:$0xff] %vm405, -inf
          %435 = vst.msk [vmem:[#allocation3 + $0xe8] sm:$0xff] %vm405, -inf
          %436 = vst.msk [vmem:[#allocation3 + $0xf0] sm:$0xff] %vm405, -inf
          %437 = vst.msk [vmem:[#allocation3 + $0xf8] sm:$0xff] %vm405, -inf
          %438 = vst.msk [vmem:[#allocation4] sm:$0xff] %vm405, 0.0
          %439 = vst.msk [vmem:[#allocation4 + $0x8] sm:$0xff] %vm405, 0.0
          %440 = vst.msk [vmem:[#allocation4 + $0x10] sm:$0xff] %vm405, 0.0
          %441 = vst.msk [vmem:[#allocation4 + $0x18] sm:$0xff] %vm405, 0.0
          %442 = vst.msk [vmem:[#allocation4 + $0x20] sm:$0xff] %vm405, 0.0
          %443 = vst.msk [vmem:[#allocation4 + $0x28] sm:$0xff] %vm405, 0.0
          %444 = vst.msk [vmem:[#allocation4 + $0x30] sm:$0xff] %vm405, 0.0
          %445 = vst.msk [vmem:[#allocation4 + $0x38] sm:$0xff] %vm405, 0.0
          %446 = vst.msk [vmem:[#allocation4 + $0x40] sm:$0xff] %vm405, 0.0
          %447 = vst.msk [vmem:[#allocation4 + $0x48] sm:$0xff] %vm405, 0.0
          %448 = vst.msk [vmem:[#allocation4 + $0x50] sm:$0xff] %vm405, 0.0
          %449 = vst.msk [vmem:[#allocation4 + $0x58] sm:$0xff] %vm405, 0.0
          %450 = vst.msk [vmem:[#allocation4 + $0x60] sm:$0xff] %vm405, 0.0
          %451 = vst.msk [vmem:[#allocation4 + $0x68] sm:$0xff] %vm405, 0.0
          %452 = vst.msk [vmem:[#allocation4 + $0x70] sm:$0xff] %vm405, 0.0
          %453 = vst.msk [vmem:[#allocation4 + $0x78] sm:$0xff] %vm405, 0.0
          %454 = vst.msk [vmem:[#allocation4 + $0x80] sm:$0xff] %vm405, 0.0
          %455 = vst.msk [vmem:[#allocation4 + $0x88] sm:$0xff] %vm405, 0.0
          %456 = vst.msk [vmem:[#allocation4 + $0x90] sm:$0xff] %vm405, 0.0
          %457 = vst.msk [vmem:[#allocation4 + $0x98] sm:$0xff] %vm405, 0.0
          %458 = vst.msk [vmem:[#allocation4 + $0xa0] sm:$0xff] %vm405, 0.0
          %459 = vst.msk [vmem:[#allocation4 + $0xa8] sm:$0xff] %vm405, 0.0
          %460 = vst.msk [vmem:[#allocation4 + $0xb0] sm:$0xff] %vm405, 0.0
          %461 = vst.msk [vmem:[#allocation4 + $0xb8] sm:$0xff] %vm405, 0.0
          %462 = vst.msk [vmem:[#allocation4 + $0xc0] sm:$0xff] %vm405, 0.0
          %463 = vst.msk [vmem:[#allocation4 + $0xc8] sm:$0xff] %vm405, 0.0
          %464 = vst.msk [vmem:[#allocation4 + $0xd0] sm:$0xff] %vm405, 0.0
          %465 = vst.msk [vmem:[#allocation4 + $0xd8] sm:$0xff] %vm405, 0.0
          %466 = vst.msk [vmem:[#allocation4 + $0xe0] sm:$0xff] %vm405, 0.0
          %467 = vst.msk [vmem:[#allocation4 + $0xe8] sm:$0xff] %vm405, 0.0
          %468 = vst.msk [vmem:[#allocation4 + $0xf0] sm:$0xff] %vm405, 0.0
          %469 = vst.msk [vmem:[#allocation4 + $0xf8] sm:$0xff] %vm405, 0.0
        $region44: #{tpu_custom_call.1} parent=31 // pred_fallthru
          _
        %v470 = vld [vmem:[#allocation9] sm:$0xff]
        %v471 = vld [vmem:[#allocation9 + $0x8] sm:$0xff]
        %v472 = vld [vmem:[#allocation9 + $0x10] sm:$0xff]
        %v473 = vld [vmem:[#allocation9 + $0x18] sm:$0xff]
        %v474 = vld [vmem:[#allocation9 + $0x20] sm:$0xff]
        %v475 = vld [vmem:[#allocation9 + $0x28] sm:$0xff]
        %v476 = vld [vmem:[#allocation9 + $0x30] sm:$0xff]
        %v477 = vld [vmem:[#allocation9 + $0x38] sm:$0xff]
        %v478 = vld [vmem:[#allocation9 + $0x40] sm:$0xff]
        %v479 = vld [vmem:[#allocation9 + $0x48] sm:$0xff]
        %v480 = vld [vmem:[#allocation9 + $0x50] sm:$0xff]
        %v481 = vld [vmem:[#allocation9 + $0x58] sm:$0xff]
        %v482 = vld [vmem:[#allocation9 + $0x60] sm:$0xff]
        %v483 = vld [vmem:[#allocation9 + $0x68] sm:$0xff]
        %v484 = vld [vmem:[#allocation9 + $0x70] sm:$0xff]
        %v485 = vld [vmem:[#allocation9 + $0x78] sm:$0xff]
        %v486 = vld [vmem:[#allocation9 + $0x80] sm:$0xff]
        %v487 = vld [vmem:[#allocation9 + $0x88] sm:$0xff]
        %v488 = vld [vmem:[#allocation9 + $0x90] sm:$0xff]
        %v489 = vld [vmem:[#allocation9 + $0x98] sm:$0xff]
        %v490 = vld [vmem:[#allocation9 + $0xa0] sm:$0xff]
        %v491 = vld [vmem:[#allocation9 + $0xa8] sm:$0xff]
        %v492 = vld [vmem:[#allocation9 + $0xb0] sm:$0xff]
        %v493 = vld [vmem:[#allocation9 + $0xb8] sm:$0xff]
        %v494 = vld [vmem:[#allocation9 + $0xc0] sm:$0xff]
        %v495 = vld [vmem:[#allocation9 + $0xc8] sm:$0xff]
        %v496 = vld [vmem:[#allocation9 + $0xd0] sm:$0xff]
        %v497 = vld [vmem:[#allocation9 + $0xd8] sm:$0xff]
        %v498 = vld [vmem:[#allocation9 + $0xe0] sm:$0xff]
        %v499 = vld [vmem:[#allocation9 + $0xe8] sm:$0xff]
        %v500 = vld [vmem:[#allocation9 + $0xf0] sm:$0xff]
        %v501 = vld [vmem:[#allocation9 + $0xf8] sm:$0xff]
        %v502 = vld [vmem:[#allocation2] sm:$0xff]
        %v503 = vld [vmem:[#allocation2 + $0x8] sm:$0xff]
        %v504 = vld [vmem:[#allocation2 + $0x10] sm:$0xff]
        %v505 = vld [vmem:[#allocation2 + $0x18] sm:$0xff]
        %v506 = vld [vmem:[#allocation2 + $0x20] sm:$0xff]
        %v507 = vld [vmem:[#allocation2 + $0x28] sm:$0xff]
        %v508 = vld [vmem:[#allocation2 + $0x30] sm:$0xff]
        %v509 = vld [vmem:[#allocation2 + $0x38] sm:$0xff]
        %v510 = vld [vmem:[#allocation2 + $0x40] sm:$0xff]
        %v511 = vld [vmem:[#allocation2 + $0x48] sm:$0xff]
        %v512 = vld [vmem:[#allocation2 + $0x50] sm:$0xff]
        %v513 = vld [vmem:[#allocation2 + $0x58] sm:$0xff]
        %v514 = vld [vmem:[#allocation2 + $0x60] sm:$0xff]
        %v515 = vld [vmem:[#allocation2 + $0x68] sm:$0xff]
        %v516 = vld [vmem:[#allocation2 + $0x70] sm:$0xff]
        %v517 = vld [vmem:[#allocation2 + $0x78] sm:$0xff]
        %v550 = vunpack.c.l.b16 %v470
        %v551 = vunpack.c.h.b16 %v470
        %v552 = vunpack.c.l.b16 %v471
        %v553 = vunpack.c.h.b16 %v471
        %v554 = vunpack.c.l.b16 %v472
        %v555 = vunpack.c.h.b16 %v472
        %v556 = vunpack.c.l.b16 %v473
        %v557 = vunpack.c.h.b16 %v473
        %v558 = vunpack.c.l.b16 %v474
        %v559 = vunpack.c.h.b16 %v474
        %v560 = vunpack.c.l.b16 %v475
        %v561 = vunpack.c.h.b16 %v475
        %v562 = vunpack.c.l.b16 %v476
        %v563 = vunpack.c.h.b16 %v476
        %v564 = vunpack.c.l.b16 %v477
        %v565 = vunpack.c.h.b16 %v477
        %v566 = vunpack.c.l.b16 %v478
        %v567 = vunpack.c.h.b16 %v478
        %v568 = vunpack.c.l.b16 %v479
        %v569 = vunpack.c.h.b16 %v479
        %v570 = vunpack.c.l.b16 %v480
        %v571 = vunpack.c.h.b16 %v480
        %v572 = vunpack.c.l.b16 %v481
        %v573 = vunpack.c.h.b16 %v481
        %v574 = vunpack.c.l.b16 %v482
        %v575 = vunpack.c.h.b16 %v482
        %v576 = vunpack.c.l.b16 %v483
        %v577 = vunpack.c.h.b16 %v483
        %v578 = vunpack.c.l.b16 %v484
        %v579 = vunpack.c.h.b16 %v484
        %v580 = vunpack.c.l.b16 %v485
        %v581 = vunpack.c.h.b16 %v485
        %v582 = vunpack.c.l.b16 %v486
        %v583 = vunpack.c.h.b16 %v486
        %v584 = vunpack.c.l.b16 %v487
        %v585 = vunpack.c.h.b16 %v487
        %v586 = vunpack.c.l.b16 %v488
        %v587 = vunpack.c.h.b16 %v488
        %v588 = vunpack.c.l.b16 %v489
        %v589 = vunpack.c.h.b16 %v489
        %v590 = vunpack.c.l.b16 %v490
        %v591 = vunpack.c.h.b16 %v490
        %v592 = vunpack.c.l.b16 %v491
        %v593 = vunpack.c.h.b16 %v491
        %v594 = vunpack.c.l.b16 %v492
        %v595 = vunpack.c.h.b16 %v492
        %v596 = vunpack.c.l.b16 %v493
        %v597 = vunpack.c.h.b16 %v493
        %v598 = vunpack.c.l.b16 %v494
        %v599 = vunpack.c.h.b16 %v494
        %v600 = vunpack.c.l.b16 %v495
        %v601 = vunpack.c.h.b16 %v495
        %v602 = vunpack.c.l.b16 %v496
        %v603 = vunpack.c.h.b16 %v496
        %v604 = vunpack.c.l.b16 %v497
        %v605 = vunpack.c.h.b16 %v497
        %v606 = vunpack.c.l.b16 %v498
        %v607 = vunpack.c.h.b16 %v498
        %v608 = vunpack.c.l.b16 %v499
        %v609 = vunpack.c.h.b16 %v499
        %v610 = vunpack.c.l.b16 %v500
        %v611 = vunpack.c.h.b16 %v500
        %v612 = vunpack.c.l.b16 %v501
        %v613 = vunpack.c.h.b16 %v501
        %v614 = vpack.c.b16 %v554, %v550
        %v615 = vpack.c.b16 %v555, %v551
        %v616 = vpack.c.b16 %v556, %v552
        %v617 = vpack.c.b16 %v557, %v553
        %v618 = vpack.c.b16 %v562, %v558
        %v619 = vpack.c.b16 %v563, %v559
        %v620 = vpack.c.b16 %v564, %v560
        %v621 = vpack.c.b16 %v565, %v561
        %v622 = vpack.c.b16 %v570, %v566
        %v623 = vpack.c.b16 %v571, %v567
        %v624 = vpack.c.b16 %v572, %v568
        %v625 = vpack.c.b16 %v573, %v569
        %v626 = vpack.c.b16 %v578, %v574
        %v627 = vpack.c.b16 %v579, %v575
        %v628 = vpack.c.b16 %v580, %v576
        %v629 = vpack.c.b16 %v581, %v577
        %v630 = vpack.c.b16 %v586, %v582
        %v631 = vpack.c.b16 %v587, %v583
        %v632 = vpack.c.b16 %v588, %v584
        %v633 = vpack.c.b16 %v589, %v585
        %v634 = vpack.c.b16 %v594, %v590
        %v635 = vpack.c.b16 %v595, %v591
        %v636 = vpack.c.b16 %v596, %v592
        %v637 = vpack.c.b16 %v597, %v593
        %v638 = vpack.c.b16 %v602, %v598
        %v639 = vpack.c.b16 %v603, %v599
        %v640 = vpack.c.b16 %v604, %v600
        %v641 = vpack.c.b16 %v605, %v601
        %v642 = vpack.c.b16 %v610, %v606
        %v643 = vpack.c.b16 %v611, %v607
        %v644 = vpack.c.b16 %v612, %v608
        %v645 = vpack.c.b16 %v613, %v609
        %678 = vmatprep.subr.bf16.mxu0 %v615
        %679 = vmatpush1.bf16.msra.mxu0 %v614
        %680 = vmatprep.subr.bf16.mxu0 %v619
        %681 = vmatpush1.bf16.msra.mxu0 %v618
        %682 = vmatprep.subr.bf16.mxu0 %v623
        %683 = vmatpush1.bf16.msra.mxu0 %v622
        %684 = vmatprep.subr.bf16.mxu0 %v627
        %685 = vmatpush1.bf16.msra.mxu0 %v626
        %686 = vmatprep.subr.bf16.mxu0 %v631
        %687 = vmatpush1.bf16.msra.mxu0 %v630
        %688 = vmatprep.subr.bf16.mxu0 %v635
        %689 = vmatpush1.bf16.msra.mxu0 %v634
        %690 = vmatprep.subr.bf16.mxu0 %v639
        %691 = vmatpush1.bf16.msra.mxu0 %v638
        %692 = vmatprep.subr.bf16.mxu0 %v643
        %693 = vmatpush1.bf16.msra.mxu0 %v642
        %694 = vmatprep.subr.bf16.mxu0 0
        %695 = vmatpush1.bf16.msra.mxu0 0
        %696 = vmatprep.subr.bf16.mxu0 0
        %697 = vmatpush1.bf16.msra.mxu0 0
        %698 = vmatprep.subr.bf16.mxu0 0
        %699 = vmatpush1.bf16.msra.mxu0 0
        %700 = vmatprep.subr.bf16.mxu0 0
        %701 = vmatpush1.bf16.msra.mxu0 0
        %702 = vmatprep.subr.bf16.mxu0 0
        %703 = vmatpush1.bf16.msra.mxu0 0
        %704 = vmatprep.subr.bf16.mxu0 0
        %705 = vmatpush1.bf16.msra.mxu0 0
        %706 = vmatprep.subr.bf16.mxu0 0
        %707 = vmatpush1.bf16.msra.mxu0 0
        %708 = vmatprep.subr.bf16.mxu0 0
        %709 = vmatpush1.bf16.msra.mxu0 0
        %710 = vmatprep.mubr.bf16.mxu0 0
        %711 = vmatmul.mubr.bf16.gmra.mrb[0].mxu0 %v502
        %v712 = vpop.f32.mrb[0].mxu0
        %v713 = vadd.f32 0.0, %v712
        %v714 = vpop.f32.mrb[0].mxu0
        %v715 = vadd.f32 0.0, %v714
        %v716 = vpop.f32.mrb[0].mxu0
        %v717 = vadd.f32 0.0, %v716
        %v718 = vpop.f32.mrb[0].mxu0
        %v719 = vadd.f32 0.0, %v718
        %720 = vmatprep.mubr.bf16.mxu0 0
        %721 = vmatmul.mubr.bf16.gmra.mrb[0].mxu0 %v503
        %v722 = vpop.f32.mrb[0].mxu0
        %v723 = vadd.f32 0.0, %v722
        %v724 = vpop.f32.mrb[0].mxu0
        %v725 = vadd.f32 0.0, %v724
        %v726 = vpop.f32.mrb[0].mxu0
        %v727 = vadd.f32 0.0, %v726
        %v728 = vpop.f32.mrb[0].mxu0
        %v729 = vadd.f32 0.0, %v728
        %730 = vmatprep.mubr.bf16.mxu0 0
        %731 = vmatmul.mubr.bf16.gmra.mrb[0].mxu0 %v504
        %v732 = vpop.f32.mrb[0].mxu0
        %v733 = vadd.f32 0.0, %v732
        %v734 = vpop.f32.mrb[0].mxu0
        %v735 = vadd.f32 0.0, %v734
        %v736 = vpop.f32.mrb[0].mxu0
        %v737 = vadd.f32 0.0, %v736
        %v738 = vpop.f32.mrb[0].mxu0
        %v739 = vadd.f32 0.0, %v738
        %740 = vmatprep.mubr.bf16.mxu0 0
        %741 = vmatmul.mubr.bf16.gmra.mrb[0].mxu0 %v505
        %v742 = vpop.f32.mrb[0].mxu0
        %v743 = vadd.f32 0.0, %v742
        %v744 = vpop.f32.mrb[0].mxu0
        %v745 = vadd.f32 0.0, %v744
        %v746 = vpop.f32.mrb[0].mxu0
        %v747 = vadd.f32 0.0, %v746
        %v748 = vpop.f32.mrb[0].mxu0
        %v749 = vadd.f32 0.0, %v748
        %750 = vmatprep.mubr.bf16.mxu0 0
        %751 = vmatmul.mubr.bf16.gmra.mrb[0].mxu0 %v506
        %v752 = vpop.f32.mrb[0].mxu0
        %v753 = vadd.f32 0.0, %v752
        %v754 = vpop.f32.mrb[0].mxu0
        %v755 = vadd.f32 0.0, %v754
        %v756 = vpop.f32.mrb[0].mxu0
        %v757 = vadd.f32 0.0, %v756
        %v758 = vpop.f32.mrb[0].mxu0
        %v759 = vadd.f32 0.0, %v758
        %760 = vmatprep.mubr.bf16.mxu0 0
        %761 = vmatmul.mubr.bf16.gmra.mrb[0].mxu0 %v507
        %v762 = vpop.f32.mrb[0].mxu0
        %v763 = vadd.f32 0.0, %v762
        %v764 = vpop.f32.mrb[0].mxu0
        %v765 = vadd.f32 0.0, %v764
        %v766 = vpop.f32.mrb[0].mxu0
        %v767 = vadd.f32 0.0, %v766
        %v768 = vpop.f32.mrb[0].mxu0
        %v769 = vadd.f32 0.0, %v768
        %770 = vmatprep.mubr.bf16.mxu0 0
        %771 = vmatmul.mubr.bf16.gmra.mrb[0].mxu0 %v508
        %v772 = vpop.f32.mrb[0].mxu0
        %v773 = vadd.f32 0.0, %v772
        %v774 = vpop.f32.mrb[0].mxu0
        %v775 = vadd.f32 0.0, %v774
        %v776 = vpop.f32.mrb[0].mxu0
        %v777 = vadd.f32 0.0, %v776
        %v778 = vpop.f32.mrb[0].mxu0
        %v779 = vadd.f32 0.0, %v778
        %780 = vmatprep.mubr.bf16.mxu0 0
        %781 = vmatmul.mubr.bf16.gmra.mrb[0].mxu0 %v509
        %v782 = vpop.f32.mrb[0].mxu0
        %v783 = vadd.f32 0.0, %v782
        %v784 = vpop.f32.mrb[0].mxu0
        %v785 = vadd.f32 0.0, %v784
        %v786 = vpop.f32.mrb[0].mxu0
        %v787 = vadd.f32 0.0, %v786
        %v788 = vpop.f32.mrb[0].mxu0
        %v789 = vadd.f32 0.0, %v788
        %790 = vmatprep.mubr.bf16.mxu0 0
        %791 = vmatmul.mubr.bf16.gmra.mrb[0].mxu0 %v510
        %v792 = vpop.f32.mrb[0].mxu0
        %v793 = vadd.f32 0.0, %v792
        %v794 = vpop.f32.mrb[0].mxu0
        %v795 = vadd.f32 0.0, %v794
        %v796 = vpop.f32.mrb[0].mxu0
        %v797 = vadd.f32 0.0, %v796
        %v798 = vpop.f32.mrb[0].mxu0
        %v799 = vadd.f32 0.0, %v798
        %800 = vmatprep.mubr.bf16.mxu0 0
        %801 = vmatmul.mubr.bf16.gmra.mrb[0].mxu0 %v511
        %v802 = vpop.f32.mrb[0].mxu0
        %v803 = vadd.f32 0.0, %v802
        %v804 = vpop.f32.mrb[0].mxu0
        %v805 = vadd.f32 0.0, %v804
        %v806 = vpop.f32.mrb[0].mxu0
        %v807 = vadd.f32 0.0, %v806
        %v808 = vpop.f32.mrb[0].mxu0
        %v809 = vadd.f32 0.0, %v808
        %810 = vmatprep.mubr.bf16.mxu0 0
        %811 = vmatmul.mubr.bf16.gmra.mrb[0].mxu0 %v512
        %v812 = vpop.f32.mrb[0].mxu0
        %v813 = vadd.f32 0.0, %v812
        %v814 = vpop.f32.mrb[0].mxu0
        %v815 = vadd.f32 0.0, %v814
        %v816 = vpop.f32.mrb[0].mxu0
        %v817 = vadd.f32 0.0, %v816
        %v818 = vpop.f32.mrb[0].mxu0
        %v819 = vadd.f32 0.0, %v818
        %820 = vmatprep.mubr.bf16.mxu0 0
        %821 = vmatmul.mubr.bf16.gmra.mrb[0].mxu0 %v513
        %v822 = vpop.f32.mrb[0].mxu0
        %v823 = vadd.f32 0.0, %v822
        %v824 = vpop.f32.mrb[0].mxu0
        %v825 = vadd.f32 0.0, %v824
        %v826 = vpop.f32.mrb[0].mxu0
        %v827 = vadd.f32 0.0, %v826
        %v828 = vpop.f32.mrb[0].mxu0
        %v829 = vadd.f32 0.0, %v828
        %830 = vmatprep.mubr.bf16.mxu0 0
        %831 = vmatmul.mubr.bf16.gmra.mrb[0].mxu0 %v514
        %v832 = vpop.f32.mrb[0].mxu0
        %v833 = vadd.f32 0.0, %v832
        %v834 = vpop.f32.mrb[0].mxu0
        %v835 = vadd.f32 0.0, %v834
        %v836 = vpop.f32.mrb[0].mxu0
        %v837 = vadd.f32 0.0, %v836
        %v838 = vpop.f32.mrb[0].mxu0
        %v839 = vadd.f32 0.0, %v838
        %840 = vmatprep.mubr.bf16.mxu0 0
        %841 = vmatmul.mubr.bf16.gmra.mrb[0].mxu0 %v515
        %v842 = vpop.f32.mrb[0].mxu0
        %v843 = vadd.f32 0.0, %v842
        %v844 = vpop.f32.mrb[0].mxu0
        %v845 = vadd.f32 0.0, %v844
        %v846 = vpop.f32.mrb[0].mxu0
        %v847 = vadd.f32 0.0, %v846
        %v848 = vpop.f32.mrb[0].mxu0
        %v849 = vadd.f32 0.0, %v848
        %850 = vmatprep.mubr.bf16.mxu0 0
        %851 = vmatmul.mubr.bf16.gmra.mrb[0].mxu0 %v516
        %v852 = vpop.f32.mrb[0].mxu0
        %v853 = vadd.f32 0.0, %v852
        %v854 = vpop.f32.mrb[0].mxu0
        %v855 = vadd.f32 0.0, %v854
        %v856 = vpop.f32.mrb[0].mxu0
        %v857 = vadd.f32 0.0, %v856
        %v858 = vpop.f32.mrb[0].mxu0
        %v859 = vadd.f32 0.0, %v858
        %860 = vmatprep.mubr.bf16.mxu0 0
        %861 = vmatmul.mubr.bf16.gmra.mrb[0].mxu0 %v517
        %v862 = vpop.f32.mrb[0].mxu0
        %v863 = vadd.f32 0.0, %v862
        %v864 = vpop.f32.mrb[0].mxu0
        %v865 = vadd.f32 0.0, %v864
        %v866 = vpop.f32.mrb[0].mxu0
        %v867 = vadd.f32 0.0, %v866
        %v868 = vpop.f32.mrb[0].mxu0
        %v869 = vadd.f32 0.0, %v868
        %870 = vdwg.mxu0
        %871 = vmatprep.subr.bf16.mxu0 %v617
        %872 = vmatpush1.bf16.msra.mxu0 %v616
        %873 = vmatprep.subr.bf16.mxu0 %v621
        %874 = vmatpush1.bf16.msra.mxu0 %v620
        %875 = vmatprep.subr.bf16.mxu0 %v625
        %876 = vmatpush1.bf16.msra.mxu0 %v624
        %877 = vmatprep.subr.bf16.mxu0 %v629
        %878 = vmatpush1.bf16.msra.mxu0 %v628
        %879 = vmatprep.subr.bf16.mxu0 %v633
        %880 = vmatpush1.bf16.msra.mxu0 %v632
        %881 = vmatprep.subr.bf16.mxu0 %v637
        %882 = vmatpush1.bf16.msra.mxu0 %v636
        %883 = vmatprep.subr.bf16.mxu0 %v641
        %884 = vmatpush1.bf16.msra.mxu0 %v640
        %885 = vmatprep.subr.bf16.mxu0 %v645
        %886 = vmatpush1.bf16.msra.mxu0 %v644
        %887 = vmatprep.subr.bf16.mxu0 0
        %888 = vmatpush1.bf16.msra.mxu0 0
        %889 = vmatprep.subr.bf16.mxu0 0
        %890 = vmatpush1.bf16.msra.mxu0 0
        %891 = vmatprep.subr.bf16.mxu0 0
        %892 = vmatpush1.bf16.msra.mxu0 0
        %893 = vmatprep.subr.bf16.mxu0 0
        %894 = vmatpush1.bf16.msra.mxu0 0
        %895 = vmatprep.subr.bf16.mxu0 0
        %896 = vmatpush1.bf16.msra.mxu0 0
        %897 = vmatprep.subr.bf16.mxu0 0
        %898 = vmatpush1.bf16.msra.mxu0 0
        %899 = vmatprep.subr.bf16.mxu0 0
        %900 = vmatpush1.bf16.msra.mxu0 0
        %901 = vmatprep.subr.bf16.mxu0 0
        %902 = vmatpush1.bf16.msra.mxu0 0
        %903 = vmatprep.mubr.bf16.mxu0 0
        %904 = vmatmul.mubr.bf16.gmra.mrb[0].mxu0 %v502
        %v905 = vpop.f32.mrb[0].mxu0
        %v906 = vadd.f32 0.0, %v905
        %v907 = vpop.f32.mrb[0].mxu0
        %v908 = vadd.f32 0.0, %v907
        %v909 = vpop.f32.mrb[0].mxu0
        %v910 = vadd.f32 0.0, %v909
        %v911 = vpop.f32.mrb[0].mxu0
        %v912 = vadd.f32 0.0, %v911
        %913 = vmatprep.mubr.bf16.mxu0 0
        %914 = vmatmul.mubr.bf16.gmra.mrb[0].mxu0 %v503
        %v915 = vpop.f32.mrb[0].mxu0
        %v916 = vadd.f32 0.0, %v915
        %v917 = vpop.f32.mrb[0].mxu0
        %v918 = vadd.f32 0.0, %v917
        %v919 = vpop.f32.mrb[0].mxu0
        %v920 = vadd.f32 0.0, %v919
        %v921 = vpop.f32.mrb[0].mxu0
        %v922 = vadd.f32 0.0, %v921
        %923 = vmatprep.mubr.bf16.mxu0 0
        %924 = vmatmul.mubr.bf16.gmra.mrb[0].mxu0 %v504
        %v925 = vpop.f32.mrb[0].mxu0
        %v926 = vadd.f32 0.0, %v925
        %v927 = vpop.f32.mrb[0].mxu0
        %v928 = vadd.f32 0.0, %v927
        %v929 = vpop.f32.mrb[0].mxu0
        %v930 = vadd.f32 0.0, %v929
        %v931 = vpop.f32.mrb[0].mxu0
        %v932 = vadd.f32 0.0, %v931
        %933 = vmatprep.mubr.bf16.mxu0 0
        %934 = vmatmul.mubr.bf16.gmra.mrb[0].mxu0 %v505
        %v935 = vpop.f32.mrb[0].mxu0
        %v936 = vadd.f32 0.0, %v935
        %v937 = vpop.f32.mrb[0].mxu0
        %v938 = vadd.f32 0.0, %v937
        %v939 = vpop.f32.mrb[0].mxu0
        %v940 = vadd.f32 0.0, %v939
        %v941 = vpop.f32.mrb[0].mxu0
        %v942 = vadd.f32 0.0, %v941
        %943 = vmatprep.mubr.bf16.mxu0 0
        %944 = vmatmul.mubr.bf16.gmra.mrb[0].mxu0 %v506
        %v945 = vpop.f32.mrb[0].mxu0
        %v946 = vadd.f32 0.0, %v945
        %v947 = vpop.f32.mrb[0].mxu0
        %v948 = vadd.f32 0.0, %v947
        %v949 = vpop.f32.mrb[0].mxu0
        %v950 = vadd.f32 0.0, %v949
        %v951 = vpop.f32.mrb[0].mxu0
        %v952 = vadd.f32 0.0, %v951
        %953 = vmatprep.mubr.bf16.mxu0 0
        %954 = vmatmul.mubr.bf16.gmra.mrb[0].mxu0 %v507
        %v955 = vpop.f32.mrb[0].mxu0
        %v956 = vadd.f32 0.0, %v955
        %v957 = vpop.f32.mrb[0].mxu0
        %v958 = vadd.f32 0.0, %v957
        %v959 = vpop.f32.mrb[0].mxu0
        %v960 = vadd.f32 0.0, %v959
        %v961 = vpop.f32.mrb[0].mxu0
        %v962 = vadd.f32 0.0, %v961
        %963 = vmatprep.mubr.bf16.mxu0 0
        %964 = vmatmul.mubr.bf16.gmra.mrb[0].mxu0 %v508
        %v965 = vpop.f32.mrb[0].mxu0
        %v966 = vadd.f32 0.0, %v965
        %v967 = vpop.f32.mrb[0].mxu0
        %v968 = vadd.f32 0.0, %v967
        %v969 = vpop.f32.mrb[0].mxu0
        %v970 = vadd.f32 0.0, %v969
        %v971 = vpop.f32.mrb[0].mxu0
        %v972 = vadd.f32 0.0, %v971
        %973 = vmatprep.mubr.bf16.mxu0 0
        %974 = vmatmul.mubr.bf16.gmra.mrb[0].mxu0 %v509
        %v975 = vpop.f32.mrb[0].mxu0
        %v976 = vadd.f32 0.0, %v975
        %v977 = vpop.f32.mrb[0].mxu0
        %v978 = vadd.f32 0.0, %v977
        %v979 = vpop.f32.mrb[0].mxu0
        %v980 = vadd.f32 0.0, %v979
        %v981 = vpop.f32.mrb[0].mxu0
        %v982 = vadd.f32 0.0, %v981
        %983 = vmatprep.mubr.bf16.mxu0 0
        %984 = vmatmul.mubr.bf16.gmra.mrb[0].mxu0 %v510
        %v985 = vpop.f32.mrb[0].mxu0
        %v986 = vadd.f32 0.0, %v985
        %v987 = vpop.f32.mrb[0].mxu0
        %v988 = vadd.f32 0.0, %v987
        %v989 = vpop.f32.mrb[0].mxu0
        %v990 = vadd.f32 0.0, %v989
        %v991 = vpop.f32.mrb[0].mxu0
        %v992 = vadd.f32 0.0, %v991
        %993 = vmatprep.mubr.bf16.mxu0 0
        %994 = vmatmul.mubr.bf16.gmra.mrb[0].mxu0 %v511
        %v995 = vpop.f32.mrb[0].mxu0
        %v996 = vadd.f32 0.0, %v995
        %v997 = vpop.f32.mrb[0].mxu0
        %v998 = vadd.f32 0.0, %v997
        %v999 = vpop.f32.mrb[0].mxu0
        %v1000 = vadd.f32 0.0, %v999
        %v1001 = vpop.f32.mrb[0].mxu0
        %v1002 = vadd.f32 0.0, %v1001
        %1003 = vmatprep.mubr.bf16.mxu0 0
        %1004 = vmatmul.mubr.bf16.gmra.mrb[0].mxu0 %v512
        %v1005 = vpop.f32.mrb[0].mxu0
        %v1006 = vadd.f32 0.0, %v1005
        %v1007 = vpop.f32.mrb[0].mxu0
        %v1008 = vadd.f32 0.0, %v1007
        %v1009 = vpop.f32.mrb[0].mxu0
        %v1010 = vadd.f32 0.0, %v1009
        %v1011 = vpop.f32.mrb[0].mxu0
        %v1012 = vadd.f32 0.0, %v1011
        %1013 = vmatprep.mubr.bf16.mxu0 0
        %1014 = vmatmul.mubr.bf16.gmra.mrb[0].mxu0 %v513
        %v1015 = vpop.f32.mrb[0].mxu0
        %v1016 = vadd.f32 0.0, %v1015
        %v1017 = vpop.f32.mrb[0].mxu0
        %v1018 = vadd.f32 0.0, %v1017
        %v1019 = vpop.f32.mrb[0].mxu0
        %v1020 = vadd.f32 0.0, %v1019
        %v1021 = vpop.f32.mrb[0].mxu0
        %v1022 = vadd.f32 0.0, %v1021
        %1023 = vmatprep.mubr.bf16.mxu0 0
        %1024 = vmatmul.mubr.bf16.gmra.mrb[0].mxu0 %v514
        %v1025 = vpop.f32.mrb[0].mxu0
        %v1026 = vadd.f32 0.0, %v1025
        %v1027 = vpop.f32.mrb[0].mxu0
        %v1028 = vadd.f32 0.0, %v1027
        %v1029 = vpop.f32.mrb[0].mxu0
        %v1030 = vadd.f32 0.0, %v1029
        %v1031 = vpop.f32.mrb[0].mxu0
        %v1032 = vadd.f32 0.0, %v1031
        %1033 = vmatprep.mubr.bf16.mxu0 0
        %1034 = vmatmul.mubr.bf16.gmra.mrb[0].mxu0 %v515
        %v1035 = vpop.f32.mrb[0].mxu0
        %v1036 = vadd.f32 0.0, %v1035
        %v1037 = vpop.f32.mrb[0].mxu0
        %v1038 = vadd.f32 0.0, %v1037
        %v1039 = vpop.f32.mrb[0].mxu0
        %v1040 = vadd.f32 0.0, %v1039
        %v1041 = vpop.f32.mrb[0].mxu0
        %v1042 = vadd.f32 0.0, %v1041
        %1043 = vmatprep.mubr.bf16.mxu0 0
        %1044 = vmatmul.mubr.bf16.gmra.mrb[0].mxu0 %v516
        %v1045 = vpop.f32.mrb[0].mxu0
        %v1046 = vadd.f32 0.0, %v1045
        %v1047 = vpop.f32.mrb[0].mxu0
        %v1048 = vadd.f32 0.0, %v1047
        %v1049 = vpop.f32.mrb[0].mxu0
        %v1050 = vadd.f32 0.0, %v1049
        %v1051 = vpop.f32.mrb[0].mxu0
        %v1052 = vadd.f32 0.0, %v1051
        %1053 = vmatprep.mubr.bf16.mxu0 0
        %1054 = vmatmul.mubr.bf16.gmra.mrb[0].mxu0 %v517
        %v1055 = vpop.f32.mrb[0].mxu0
        %v1056 = vadd.f32 0.0, %v1055
        %v1057 = vpop.f32.mrb[0].mxu0
        %v1058 = vadd.f32 0.0, %v1057
        %v1059 = vpop.f32.mrb[0].mxu0
        %v1060 = vadd.f32 0.0, %v1059
        %v1061 = vpop.f32.mrb[0].mxu0
        %v1062 = vadd.f32 0.0, %v1061
        %1063 = vdwg.mxu0
        %v1064 = vmax.f32 %v713, %v715
        %v1065 = vmax.f32 %v1064, %v906
        %v1066 = vmax.f32 %v1065, %v908
        %1067 = vmax.xlane.f32.xlu0 %v1066
        %v1068 = vpop.xlane.xlu0 %1067
        %v1069 = vmax.f32 %v717, %v719
        %v1070 = vmax.f32 %v1069, %v910
        %v1071 = vmax.f32 %v1070, %v912
        %1072 = vmax.xlane.f32.xlu0 %v1071
        %v1073 = vpop.xlane.xlu0 %1072
        %v1074 = vmax.f32 %v723, %v725
        %v1075 = vmax.f32 %v1074, %v916
        %v1076 = vmax.f32 %v1075, %v918
        %1077 = vmax.xlane.f32.xlu0 %v1076
        %v1078 = vpop.xlane.xlu0 %1077
        %v1079 = vmax.f32 %v727, %v729
        %v1080 = vmax.f32 %v1079, %v920
        %v1081 = vmax.f32 %v1080, %v922
        %1082 = vmax.xlane.f32.xlu0 %v1081
        %v1083 = vpop.xlane.xlu0 %1082
        %v1084 = vmax.f32 %v733, %v735
        %v1085 = vmax.f32 %v1084, %v926
        %v1086 = vmax.f32 %v1085, %v928
        %1087 = vmax.xlane.f32.xlu0 %v1086
        %v1088 = vpop.xlane.xlu0 %1087
        %v1089 = vmax.f32 %v737, %v739
        %v1090 = vmax.f32 %v1089, %v930
        %v1091 = vmax.f32 %v1090, %v932
        %1092 = vmax.xlane.f32.xlu0 %v1091
        %v1093 = vpop.xlane.xlu0 %1092
        %v1094 = vmax.f32 %v743, %v745
        %v1095 = vmax.f32 %v1094, %v936
        %v1096 = vmax.f32 %v1095, %v938
        %1097 = vmax.xlane.f32.xlu0 %v1096
        %v1098 = vpop.xlane.xlu0 %1097
        %v1099 = vmax.f32 %v747, %v749
        %v1100 = vmax.f32 %v1099, %v940
        %v1101 = vmax.f32 %v1100, %v942
        %1102 = vmax.xlane.f32.xlu0 %v1101
        %v1103 = vpop.xlane.xlu0 %1102
        %v1104 = vmax.f32 %v753, %v755
        %v1105 = vmax.f32 %v1104, %v946
        %v1106 = vmax.f32 %v1105, %v948
        %1107 = vmax.xlane.f32.xlu0 %v1106
        %v1108 = vpop.xlane.xlu0 %1107
        %v1109 = vmax.f32 %v757, %v759
        %v1110 = vmax.f32 %v1109, %v950
        %v1111 = vmax.f32 %v1110, %v952
        %1112 = vmax.xlane.f32.xlu0 %v1111
        %v1113 = vpop.xlane.xlu0 %1112
        %v1114 = vmax.f32 %v763, %v765
        %v1115 = vmax.f32 %v1114, %v956
        %v1116 = vmax.f32 %v1115, %v958
        %1117 = vmax.xlane.f32.xlu0 %v1116
        %v1118 = vpop.xlane.xlu0 %1117
        %v1119 = vmax.f32 %v767, %v769
        %v1120 = vmax.f32 %v1119, %v960
        %v1121 = vmax.f32 %v1120, %v962
        %1122 = vmax.xlane.f32.xlu0 %v1121
        %v1123 = vpop.xlane.xlu0 %1122
        %v1124 = vmax.f32 %v773, %v775
        %v1125 = vmax.f32 %v1124, %v966
        %v1126 = vmax.f32 %v1125, %v968
        %1127 = vmax.xlane.f32.xlu0 %v1126
        %v1128 = vpop.xlane.xlu0 %1127
        %v1129 = vmax.f32 %v777, %v779
        %v1130 = vmax.f32 %v1129, %v970
        %v1131 = vmax.f32 %v1130, %v972
        %1132 = vmax.xlane.f32.xlu0 %v1131
        %v1133 = vpop.xlane.xlu0 %1132
        %v1134 = vmax.f32 %v783, %v785
        %v1135 = vmax.f32 %v1134, %v976
        %v1136 = vmax.f32 %v1135, %v978
        %1137 = vmax.xlane.f32.xlu0 %v1136
        %v1138 = vpop.xlane.xlu0 %1137
        %v1139 = vmax.f32 %v787, %v789
        %v1140 = vmax.f32 %v1139, %v980
        %v1141 = vmax.f32 %v1140, %v982
        %1142 = vmax.xlane.f32.xlu0 %v1141
        %v1143 = vpop.xlane.xlu0 %1142
        %v1144 = vmax.f32 %v793, %v795
        %v1145 = vmax.f32 %v1144, %v986
        %v1146 = vmax.f32 %v1145, %v988
        %1147 = vmax.xlane.f32.xlu0 %v1146
        %v1148 = vpop.xlane.xlu0 %1147
        %v1149 = vmax.f32 %v797, %v799
        %v1150 = vmax.f32 %v1149, %v990
        %v1151 = vmax.f32 %v1150, %v992
        %1152 = vmax.xlane.f32.xlu0 %v1151
        %v1153 = vpop.xlane.xlu0 %1152
        %v1154 = vmax.f32 %v803, %v805
        %v1155 = vmax.f32 %v1154, %v996
        %v1156 = vmax.f32 %v1155, %v998
        %1157 = vmax.xlane.f32.xlu0 %v1156
        %v1158 = vpop.xlane.xlu0 %1157
        %v1159 = vmax.f32 %v807, %v809
        %v1160 = vmax.f32 %v1159, %v1000
        %v1161 = vmax.f32 %v1160, %v1002
        %1162 = vmax.xlane.f32.xlu0 %v1161
        %v1163 = vpop.xlane.xlu0 %1162
        %v1164 = vmax.f32 %v813, %v815
        %v1165 = vmax.f32 %v1164, %v1006
        %v1166 = vmax.f32 %v1165, %v1008
        %1167 = vmax.xlane.f32.xlu0 %v1166
        %v1168 = vpop.xlane.xlu0 %1167
        %v1169 = vmax.f32 %v817, %v819
        %v1170 = vmax.f32 %v1169, %v1010
        %v1171 = vmax.f32 %v1170, %v1012
        %1172 = vmax.xlane.f32.xlu0 %v1171
        %v1173 = vpop.xlane.xlu0 %1172
        %v1174 = vmax.f32 %v823, %v825
        %v1175 = vmax.f32 %v1174, %v1016
        %v1176 = vmax.f32 %v1175, %v1018
        %1177 = vmax.xlane.f32.xlu0 %v1176
        %v1178 = vpop.xlane.xlu0 %1177
        %v1179 = vmax.f32 %v827, %v829
        %v1180 = vmax.f32 %v1179, %v1020
        %v1181 = vmax.f32 %v1180, %v1022
        %1182 = vmax.xlane.f32.xlu0 %v1181
        %v1183 = vpop.xlane.xlu0 %1182
        %v1184 = vmax.f32 %v833, %v835
        %v1185 = vmax.f32 %v1184, %v1026
        %v1186 = vmax.f32 %v1185, %v1028
        %1187 = vmax.xlane.f32.xlu0 %v1186
        %v1188 = vpop.xlane.xlu0 %1187
        %v1189 = vmax.f32 %v837, %v839
        %v1190 = vmax.f32 %v1189, %v1030
        %v1191 = vmax.f32 %v1190, %v1032
        %1192 = vmax.xlane.f32.xlu0 %v1191
        %v1193 = vpop.xlane.xlu0 %1192
        %v1194 = vmax.f32 %v843, %v845
        %v1195 = vmax.f32 %v1194, %v1036
        %v1196 = vmax.f32 %v1195, %v1038
        %1197 = vmax.xlane.f32.xlu0 %v1196
        %v1198 = vpop.xlane.xlu0 %1197
        %v1199 = vmax.f32 %v847, %v849
        %v1200 = vmax.f32 %v1199, %v1040
        %v1201 = vmax.f32 %v1200, %v1042
        %1202 = vmax.xlane.f32.xlu0 %v1201
        %v1203 = vpop.xlane.xlu0 %1202
        %v1204 = vmax.f32 %v853, %v855
        %v1205 = vmax.f32 %v1204, %v1046
        %v1206 = vmax.f32 %v1205, %v1048
        %1207 = vmax.xlane.f32.xlu0 %v1206
        %v1208 = vpop.xlane.xlu0 %1207
        %v1209 = vmax.f32 %v857, %v859
        %v1210 = vmax.f32 %v1209, %v1050
        %v1211 = vmax.f32 %v1210, %v1052
        %1212 = vmax.xlane.f32.xlu0 %v1211
        %v1213 = vpop.xlane.xlu0 %1212
        %v1214 = vmax.f32 %v863, %v865
        %v1215 = vmax.f32 %v1214, %v1056
        %v1216 = vmax.f32 %v1215, %v1058
        %1217 = vmax.xlane.f32.xlu0 %v1216
        %v1218 = vpop.xlane.xlu0 %1217
        %v1219 = vmax.f32 %v867, %v869
        %v1220 = vmax.f32 %v1219, %v1060
        %v1221 = vmax.f32 %v1220, %v1062
        %1222 = vmax.xlane.f32.xlu0 %v1221
        %v1223 = vpop.xlane.xlu0 %1222
        %v1224 = vsub.f32 %v713, %v1068
        %v1225 = vsub.f32 %v715, %v1068
        %v1226 = vsub.f32 %v906, %v1068
        %v1227 = vsub.f32 %v908, %v1068
        %v1228 = vsub.f32 %v717, %v1073
        %v1229 = vsub.f32 %v719, %v1073
        %v1230 = vsub.f32 %v910, %v1073
        %v1231 = vsub.f32 %v912, %v1073
        %v1232 = vsub.f32 %v723, %v1078
        %v1233 = vsub.f32 %v725, %v1078
        %v1234 = vsub.f32 %v916, %v1078
        %v1235 = vsub.f32 %v918, %v1078
        %v1236 = vsub.f32 %v727, %v1083
        %v1237 = vsub.f32 %v729, %v1083
        %v1238 = vsub.f32 %v920, %v1083
        %v1239 = vsub.f32 %v922, %v1083
        %v1240 = vsub.f32 %v733, %v1088
        %v1241 = vsub.f32 %v735, %v1088
        %v1242 = vsub.f32 %v926, %v1088
        %v1243 = vsub.f32 %v928, %v1088
        %v1244 = vsub.f32 %v737, %v1093
        %v1245 = vsub.f32 %v739, %v1093
        %v1246 = vsub.f32 %v930, %v1093
        %v1247 = vsub.f32 %v932, %v1093
        %v1248 = vsub.f32 %v743, %v1098
        %v1249 = vsub.f32 %v745, %v1098
        %v1250 = vsub.f32 %v936, %v1098
        %v1251 = vsub.f32 %v938, %v1098
        %v1252 = vsub.f32 %v747, %v1103
        %v1253 = vsub.f32 %v749, %v1103
        %v1254 = vsub.f32 %v940, %v1103
        %v1255 = vsub.f32 %v942, %v1103
        %v1256 = vsub.f32 %v753, %v1108
        %v1257 = vsub.f32 %v755, %v1108
        %v1258 = vsub.f32 %v946, %v1108
        %v1259 = vsub.f32 %v948, %v1108
        %v1260 = vsub.f32 %v757, %v1113
        %v1261 = vsub.f32 %v759, %v1113
        %v1262 = vsub.f32 %v950, %v1113
        %v1263 = vsub.f32 %v952, %v1113
        %v1264 = vsub.f32 %v763, %v1118
        %v1265 = vsub.f32 %v765, %v1118
        %v1266 = vsub.f32 %v956, %v1118
        %v1267 = vsub.f32 %v958, %v1118
        %v1268 = vsub.f32 %v767, %v1123
        %v1269 = vsub.f32 %v769, %v1123
        %v1270 = vsub.f32 %v960, %v1123
        %v1271 = vsub.f32 %v962, %v1123
        %v1272 = vsub.f32 %v773, %v1128
        %v1273 = vsub.f32 %v775, %v1128
        %v1274 = vsub.f32 %v966, %v1128
        %v1275 = vsub.f32 %v968, %v1128
        %v1276 = vsub.f32 %v777, %v1133
        %v1277 = vsub.f32 %v779, %v1133
        %v1278 = vsub.f32 %v970, %v1133
        %v1279 = vsub.f32 %v972, %v1133
        %v1280 = vsub.f32 %v783, %v1138
        %v1281 = vsub.f32 %v785, %v1138
        %v1282 = vsub.f32 %v976, %v1138
        %v1283 = vsub.f32 %v978, %v1138
        %v1284 = vsub.f32 %v787, %v1143
        %v1285 = vsub.f32 %v789, %v1143
        %v1286 = vsub.f32 %v980, %v1143
        %v1287 = vsub.f32 %v982, %v1143
        %v1288 = vsub.f32 %v793, %v1148
        %v1289 = vsub.f32 %v795, %v1148
        %v1290 = vsub.f32 %v986, %v1148
        %v1291 = vsub.f32 %v988, %v1148
        %v1292 = vsub.f32 %v797, %v1153
        %v1293 = vsub.f32 %v799, %v1153
        %v1294 = vsub.f32 %v990, %v1153
        %v1295 = vsub.f32 %v992, %v1153
        %v1296 = vsub.f32 %v803, %v1158
        %v1297 = vsub.f32 %v805, %v1158
        %v1298 = vsub.f32 %v996, %v1158
        %v1299 = vsub.f32 %v998, %v1158
        %v1300 = vsub.f32 %v807, %v1163
        %v1301 = vsub.f32 %v809, %v1163
        %v1302 = vsub.f32 %v1000, %v1163
        %v1303 = vsub.f32 %v1002, %v1163
        %v1304 = vsub.f32 %v813, %v1168
        %v1305 = vsub.f32 %v815, %v1168
        %v1306 = vsub.f32 %v1006, %v1168
        %v1307 = vsub.f32 %v1008, %v1168
        %v1308 = vsub.f32 %v817, %v1173
        %v1309 = vsub.f32 %v819, %v1173
        %v1310 = vsub.f32 %v1010, %v1173
        %v1311 = vsub.f32 %v1012, %v1173
        %v1312 = vsub.f32 %v823, %v1178
        %v1313 = vsub.f32 %v825, %v1178
        %v1314 = vsub.f32 %v1016, %v1178
        %v1315 = vsub.f32 %v1018, %v1178
        %v1316 = vsub.f32 %v827, %v1183
        %v1317 = vsub.f32 %v829, %v1183
        %v1318 = vsub.f32 %v1020, %v1183
        %v1319 = vsub.f32 %v1022, %v1183
        %v1320 = vsub.f32 %v833, %v1188
        %v1321 = vsub.f32 %v835, %v1188
        %v1322 = vsub.f32 %v1026, %v1188
        %v1323 = vsub.f32 %v1028, %v1188
        %v1324 = vsub.f32 %v837, %v1193
        %v1325 = vsub.f32 %v839, %v1193
        %v1326 = vsub.f32 %v1030, %v1193
        %v1327 = vsub.f32 %v1032, %v1193
        %v1328 = vsub.f32 %v843, %v1198
        %v1329 = vsub.f32 %v845, %v1198
        %v1330 = vsub.f32 %v1036, %v1198
        %v1331 = vsub.f32 %v1038, %v1198
        %v1332 = vsub.f32 %v847, %v1203
        %v1333 = vsub.f32 %v849, %v1203
        %v1334 = vsub.f32 %v1040, %v1203
        %v1335 = vsub.f32 %v1042, %v1203
        %v1336 = vsub.f32 %v853, %v1208
        %v1337 = vsub.f32 %v855, %v1208
        %v1338 = vsub.f32 %v1046, %v1208
        %v1339 = vsub.f32 %v1048, %v1208
        %v1340 = vsub.f32 %v857, %v1213
        %v1341 = vsub.f32 %v859, %v1213
        %v1342 = vsub.f32 %v1050, %v1213
        %v1343 = vsub.f32 %v1052, %v1213
        %v1344 = vsub.f32 %v863, %v1218
        %v1345 = vsub.f32 %v865, %v1218
        %v1346 = vsub.f32 %v1056, %v1218
        %v1347 = vsub.f32 %v1058, %v1218
        %v1348 = vsub.f32 %v867, %v1223
        %v1349 = vsub.f32 %v869, %v1223
        %v1350 = vsub.f32 %v1060, %v1223
        %v1351 = vsub.f32 %v1062, %v1223
        %v1352 = vmul.f32 %v1224, 1.442695
        %v1353 = vpow.pop %v1352
        %v1354 = vmul.f32 %v1225, 1.442695
        %v1355 = vpow.pop %v1354
        %v1356 = vmul.f32 %v1226, 1.442695
        %v1357 = vpow.pop %v1356
        %v1358 = vmul.f32 %v1227, 1.442695
        %v1359 = vpow.pop %v1358
        %v1360 = vmul.f32 %v1228, 1.442695
        %v1361 = vpow.pop %v1360
        %v1362 = vmul.f32 %v1229, 1.442695
        %v1363 = vpow.pop %v1362
        %v1364 = vmul.f32 %v1230, 1.442695
        %v1365 = vpow.pop %v1364
        %v1366 = vmul.f32 %v1231, 1.442695
        %v1367 = vpow.pop %v1366
        %v1368 = vmul.f32 %v1232, 1.442695
        %v1369 = vpow.pop %v1368
        %v1370 = vmul.f32 %v1233, 1.442695
        %v1371 = vpow.pop %v1370
        %v1372 = vmul.f32 %v1234, 1.442695
        %v1373 = vpow.pop %v1372
        %v1374 = vmul.f32 %v1235, 1.442695
        %v1375 = vpow.pop %v1374
        %v1376 = vmul.f32 %v1236, 1.442695
        %v1377 = vpow.pop %v1376
        %v1378 = vmul.f32 %v1237, 1.442695
        %v1379 = vpow.pop %v1378
        %v1380 = vmul.f32 %v1238, 1.442695
        %v1381 = vpow.pop %v1380
        %v1382 = vmul.f32 %v1239, 1.442695
        %v1383 = vpow.pop %v1382
        %v1384 = vmul.f32 %v1240, 1.442695
        %v1385 = vpow.pop %v1384
        %v1386 = vmul.f32 %v1241, 1.442695
        %v1387 = vpow.pop %v1386
        %v1388 = vmul.f32 %v1242, 1.442695
        %v1389 = vpow.pop %v1388
        %v1390 = vmul.f32 %v1243, 1.442695
        %v1391 = vpow.pop %v1390
        %v1392 = vmul.f32 %v1244, 1.442695
        %v1393 = vpow.pop %v1392
        %v1394 = vmul.f32 %v1245, 1.442695
        %v1395 = vpow.pop %v1394
        %v1396 = vmul.f32 %v1246, 1.442695
        %v1397 = vpow.pop %v1396
        %v1398 = vmul.f32 %v1247, 1.442695
        %v1399 = vpow.pop %v1398
        %v1400 = vmul.f32 %v1248, 1.442695
        %v1401 = vpow.pop %v1400
        %v1402 = vmul.f32 %v1249, 1.442695
        %v1403 = vpow.pop %v1402
        %v1404 = vmul.f32 %v1250, 1.442695
        %v1405 = vpow.pop %v1404
        %v1406 = vmul.f32 %v1251, 1.442695
        %v1407 = vpow.pop %v1406
        %v1408 = vmul.f32 %v1252, 1.442695
        %v1409 = vpow.pop %v1408
        %v1410 = vmul.f32 %v1253, 1.442695
        %v1411 = vpow.pop %v1410
        %v1412 = vmul.f32 %v1254, 1.442695
        %v1413 = vpow.pop %v1412
        %v1414 = vmul.f32 %v1255, 1.442695
        %v1415 = vpow.pop %v1414
        %v1416 = vmul.f32 %v1256, 1.442695
        %v1417 = vpow.pop %v1416
        %v1418 = vmul.f32 %v1257, 1.442695
        %v1419 = vpow.pop %v1418
        %v1420 = vmul.f32 %v1258, 1.442695
        %v1421 = vpow.pop %v1420
        %v1422 = vmul.f32 %v1259, 1.442695
        %v1423 = vpow.pop %v1422
        %v1424 = vmul.f32 %v1260, 1.442695
        %v1425 = vpow.pop %v1424
        %v1426 = vmul.f32 %v1261, 1.442695
        %v1427 = vpow.pop %v1426
        %v1428 = vmul.f32 %v1262, 1.442695
        %v1429 = vpow.pop %v1428
        %v1430 = vmul.f32 %v1263, 1.442695
        %v1431 = vpow.pop %v1430
        %v1432 = vmul.f32 %v1264, 1.442695
        %v1433 = vpow.pop %v1432
        %v1434 = vmul.f32 %v1265, 1.442695
        %v1435 = vpow.pop %v1434
        %v1436 = vmul.f32 %v1266, 1.442695
        %v1437 = vpow.pop %v1436
        %v1438 = vmul.f32 %v1267, 1.442695
        %v1439 = vpow.pop %v1438
        %v1440 = vmul.f32 %v1268, 1.442695
        %v1441 = vpow.pop %v1440
        %v1442 = vmul.f32 %v1269, 1.442695
        %v1443 = vpow.pop %v1442
        %v1444 = vmul.f32 %v1270, 1.442695
        %v1445 = vpow.pop %v1444
        %v1446 = vmul.f32 %v1271, 1.442695
        %v1447 = vpow.pop %v1446
        %v1448 = vmul.f32 %v1272, 1.442695
        %v1449 = vpow.pop %v1448
        %v1450 = vmul.f32 %v1273, 1.442695
        %v1451 = vpow.pop %v1450
        %v1452 = vmul.f32 %v1274, 1.442695
        %v1453 = vpow.pop %v1452
        %v1454 = vmul.f32 %v1275, 1.442695
        %v1455 = vpow.pop %v1454
        %v1456 = vmul.f32 %v1276, 1.442695
        %v1457 = vpow.pop %v1456
        %v1458 = vmul.f32 %v1277, 1.442695
        %v1459 = vpow.pop %v1458
        %v1460 = vmul.f32 %v1278, 1.442695
        %v1461 = vpow.pop %v1460
        %v1462 = vmul.f32 %v1279, 1.442695
        %v1463 = vpow.pop %v1462
        %v1464 = vmul.f32 %v1280, 1.442695
        %v1465 = vpow.pop %v1464
        %v1466 = vmul.f32 %v1281, 1.442695
        %v1467 = vpow.pop %v1466
        %v1468 = vmul.f32 %v1282, 1.442695
        %v1469 = vpow.pop %v1468
        %v1470 = vmul.f32 %v1283, 1.442695
        %v1471 = vpow.pop %v1470
        %v1472 = vmul.f32 %v1284, 1.442695
        %v1473 = vpow.pop %v1472
        %v1474 = vmul.f32 %v1285, 1.442695
        %v1475 = vpow.pop %v1474
        %v1476 = vmul.f32 %v1286, 1.442695
        %v1477 = vpow.pop %v1476
        %v1478 = vmul.f32 %v1287, 1.442695
        %v1479 = vpow.pop %v1478
        %v1480 = vmul.f32 %v1288, 1.442695
        %v1481 = vpow.pop %v1480
        %v1482 = vmul.f32 %v1289, 1.442695
        %v1483 = vpow.pop %v1482
        %v1484 = vmul.f32 %v1290, 1.442695
        %v1485 = vpow.pop %v1484
        %v1486 = vmul.f32 %v1291, 1.442695
        %v1487 = vpow.pop %v1486
        %v1488 = vmul.f32 %v1292, 1.442695
        %v1489 = vpow.pop %v1488
        %v1490 = vmul.f32 %v1293, 1.442695
        %v1491 = vpow.pop %v1490
        %v1492 = vmul.f32 %v1294, 1.442695
        %v1493 = vpow.pop %v1492
        %v1494 = vmul.f32 %v1295, 1.442695
        %v1495 = vpow.pop %v1494
        %v1496 = vmul.f32 %v1296, 1.442695
        %v1497 = vpow.pop %v1496
        %v1498 = vmul.f32 %v1297, 1.442695
        %v1499 = vpow.pop %v1498
        %v1500 = vmul.f32 %v1298, 1.442695
        %v1501 = vpow.pop %v1500
        %v1502 = vmul.f32 %v1299, 1.442695
        %v1503 = vpow.pop %v1502
        %v1504 = vmul.f32 %v1300, 1.442695
        %v1505 = vpow.pop %v1504
        %v1506 = vmul.f32 %v1301, 1.442695
        %v1507 = vpow.pop %v1506
        %v1508 = vmul.f32 %v1302, 1.442695
        %v1509 = vpow.pop %v1508
        %v1510 = vmul.f32 %v1303, 1.442695
        %v1511 = vpow.pop %v1510
        %v1512 = vmul.f32 %v1304, 1.442695
        %v1513 = vpow.pop %v1512
        %v1514 = vmul.f32 %v1305, 1.442695
        %v1515 = vpow.pop %v1514
        %v1516 = vmul.f32 %v1306, 1.442695
        %v1517 = vpow.pop %v1516
        %v1518 = vmul.f32 %v1307, 1.442695
        %v1519 = vpow.pop %v1518
        %v1520 = vmul.f32 %v1308, 1.442695
        %v1521 = vpow.pop %v1520
        %v1522 = vmul.f32 %v1309, 1.442695
        %v1523 = vpow.pop %v1522
        %v1524 = vmul.f32 %v1310, 1.442695
        %v1525 = vpow.pop %v1524
        %v1526 = vmul.f32 %v1311, 1.442695
        %v1527 = vpow.pop %v1526
        %v1528 = vmul.f32 %v1312, 1.442695
        %v1529 = vpow.pop %v1528
        %v1530 = vmul.f32 %v1313, 1.442695
        %v1531 = vpow.pop %v1530
        %v1532 = vmul.f32 %v1314, 1.442695
        %v1533 = vpow.pop %v1532
        %v1534 = vmul.f32 %v1315, 1.442695
        %v1535 = vpow.pop %v1534
        %v1536 = vmul.f32 %v1316, 1.442695
        %v1537 = vpow.pop %v1536
        %v1538 = vmul.f32 %v1317, 1.442695
        %v1539 = vpow.pop %v1538
        %v1540 = vmul.f32 %v1318, 1.442695
        %v1541 = vpow.pop %v1540
        %v1542 = vmul.f32 %v1319, 1.442695
        %v1543 = vpow.pop %v1542
        %v1544 = vmul.f32 %v1320, 1.442695
        %v1545 = vpow.pop %v1544
        %v1546 = vmul.f32 %v1321, 1.442695
        %v1547 = vpow.pop %v1546
        %v1548 = vmul.f32 %v1322, 1.442695
        %v1549 = vpow.pop %v1548
        %v1550 = vmul.f32 %v1323, 1.442695
        %v1551 = vpow.pop %v1550
        %v1552 = vmul.f32 %v1324, 1.442695
        %v1553 = vpow.pop %v1552
        %v1554 = vmul.f32 %v1325, 1.442695
        %v1555 = vpow.pop %v1554
        %v1556 = vmul.f32 %v1326, 1.442695
        %v1557 = vpow.pop %v1556
        %v1558 = vmul.f32 %v1327, 1.442695
        %v1559 = vpow.pop %v1558
        %v1560 = vmul.f32 %v1328, 1.442695
        %v1561 = vpow.pop %v1560
        %v1562 = vmul.f32 %v1329, 1.442695
        %v1563 = vpow.pop %v1562
        %v1564 = vmul.f32 %v1330, 1.442695
        %v1565 = vpow.pop %v1564
        %v1566 = vmul.f32 %v1331, 1.442695
        %v1567 = vpow.pop %v1566
        %v1568 = vmul.f32 %v1332, 1.442695
        %v1569 = vpow.pop %v1568
        %v1570 = vmul.f32 %v1333, 1.442695
        %v1571 = vpow.pop %v1570
        %v1572 = vmul.f32 %v1334, 1.442695
        %v1573 = vpow.pop %v1572
        %v1574 = vmul.f32 %v1335, 1.442695
        %v1575 = vpow.pop %v1574
        %v1576 = vmul.f32 %v1336, 1.442695
        %v1577 = vpow.pop %v1576
        %v1578 = vmul.f32 %v1337, 1.442695
        %v1579 = vpow.pop %v1578
        %v1580 = vmul.f32 %v1338, 1.442695
        %v1581 = vpow.pop %v1580
        %v1582 = vmul.f32 %v1339, 1.442695
        %v1583 = vpow.pop %v1582
        %v1584 = vmul.f32 %v1340, 1.442695
        %v1585 = vpow.pop %v1584
        %v1586 = vmul.f32 %v1341, 1.442695
        %v1587 = vpow.pop %v1586
        %v1588 = vmul.f32 %v1342, 1.442695
        %v1589 = vpow.pop %v1588
        %v1590 = vmul.f32 %v1343, 1.442695
        %v1591 = vpow.pop %v1590
        %v1592 = vmul.f32 %v1344, 1.442695
        %v1593 = vpow.pop %v1592
        %v1594 = vmul.f32 %v1345, 1.442695
        %v1595 = vpow.pop %v1594
        %v1596 = vmul.f32 %v1346, 1.442695
        %v1597 = vpow.pop %v1596
        %v1598 = vmul.f32 %v1347, 1.442695
        %v1599 = vpow.pop %v1598
        %v1600 = vmul.f32 %v1348, 1.442695
        %v1601 = vpow.pop %v1600
        %v1602 = vmul.f32 %v1349, 1.442695
        %v1603 = vpow.pop %v1602
        %v1604 = vmul.f32 %v1350, 1.442695
        %v1605 = vpow.pop %v1604
        %v1606 = vmul.f32 %v1351, 1.442695
        %v1607 = vpow.pop %v1606
        %v1608 = vadd.f32 %v1353, %v1355
        %v1609 = vadd.f32 %v1608, %v1357
        %v1610 = vadd.f32 %v1609, %v1359
        %1611 = vadd.xlane.f32.xlu0 %v1610
        %v1612 = vpop.xlane.xlu0 %1611
        %v1613 = vadd.f32 %v1361, %v1363
        %v1614 = vadd.f32 %v1613, %v1365
        %v1615 = vadd.f32 %v1614, %v1367
        %1616 = vadd.xlane.f32.xlu0 %v1615
        %v1617 = vpop.xlane.xlu0 %1616
        %v1618 = vadd.f32 %v1369, %v1371
        %v1619 = vadd.f32 %v1618, %v1373
        %v1620 = vadd.f32 %v1619, %v1375
        %1621 = vadd.xlane.f32.xlu0 %v1620
        %v1622 = vpop.xlane.xlu0 %1621
        %v1623 = vadd.f32 %v1377, %v1379
        %v1624 = vadd.f32 %v1623, %v1381
        %v1625 = vadd.f32 %v1624, %v1383
        %1626 = vadd.xlane.f32.xlu0 %v1625
        %v1627 = vpop.xlane.xlu0 %1626
        %v1628 = vadd.f32 %v1385, %v1387
        %v1629 = vadd.f32 %v1628, %v1389
        %v1630 = vadd.f32 %v1629, %v1391
        %1631 = vadd.xlane.f32.xlu0 %v1630
        %v1632 = vpop.xlane.xlu0 %1631
        %v1633 = vadd.f32 %v1393, %v1395
        %v1634 = vadd.f32 %v1633, %v1397
        %v1635 = vadd.f32 %v1634, %v1399
        %1636 = vadd.xlane.f32.xlu0 %v1635
        %v1637 = vpop.xlane.xlu0 %1636
        %v1638 = vadd.f32 %v1401, %v1403
        %v1639 = vadd.f32 %v1638, %v1405
        %v1640 = vadd.f32 %v1639, %v1407
        %1641 = vadd.xlane.f32.xlu0 %v1640
        %v1642 = vpop.xlane.xlu0 %1641
        %v1643 = vadd.f32 %v1409, %v1411
        %v1644 = vadd.f32 %v1643, %v1413
        %v1645 = vadd.f32 %v1644, %v1415
        %1646 = vadd.xlane.f32.xlu0 %v1645
        %v1647 = vpop.xlane.xlu0 %1646
        %v1648 = vadd.f32 %v1417, %v1419
        %v1649 = vadd.f32 %v1648, %v1421
        %v1650 = vadd.f32 %v1649, %v1423
        %1651 = vadd.xlane.f32.xlu0 %v1650
        %v1652 = vpop.xlane.xlu0 %1651
        %v1653 = vadd.f32 %v1425, %v1427
        %v1654 = vadd.f32 %v1653, %v1429
        %v1655 = vadd.f32 %v1654, %v1431
        %1656 = vadd.xlane.f32.xlu0 %v1655
        %v1657 = vpop.xlane.xlu0 %1656
        %v1658 = vadd.f32 %v1433, %v1435
        %v1659 = vadd.f32 %v1658, %v1437
        %v1660 = vadd.f32 %v1659, %v1439
        %1661 = vadd.xlane.f32.xlu0 %v1660
        %v1662 = vpop.xlane.xlu0 %1661
        %v1663 = vadd.f32 %v1441, %v1443
        %v1664 = vadd.f32 %v1663, %v1445
        %v1665 = vadd.f32 %v1664, %v1447
        %1666 = vadd.xlane.f32.xlu0 %v1665
        %v1667 = vpop.xlane.xlu0 %1666
        %v1668 = vadd.f32 %v1449, %v1451
        %v1669 = vadd.f32 %v1668, %v1453
        %v1670 = vadd.f32 %v1669, %v1455
        %1671 = vadd.xlane.f32.xlu0 %v1670
        %v1672 = vpop.xlane.xlu0 %1671
        %v1673 = vadd.f32 %v1457, %v1459
        %v1674 = vadd.f32 %v1673, %v1461
        %v1675 = vadd.f32 %v1674, %v1463
        %1676 = vadd.xlane.f32.xlu0 %v1675
        %v1677 = vpop.xlane.xlu0 %1676
        %v1678 = vadd.f32 %v1465, %v1467
        %v1679 = vadd.f32 %v1678, %v1469
        %v1680 = vadd.f32 %v1679, %v1471
        %1681 = vadd.xlane.f32.xlu0 %v1680
        %v1682 = vpop.xlane.xlu0 %1681
        %v1683 = vadd.f32 %v1473, %v1475
        %v1684 = vadd.f32 %v1683, %v1477
        %v1685 = vadd.f32 %v1684, %v1479
        %1686 = vadd.xlane.f32.xlu0 %v1685
        %v1687 = vpop.xlane.xlu0 %1686
        %v1688 = vadd.f32 %v1481, %v1483
        %v1689 = vadd.f32 %v1688, %v1485
        %v1690 = vadd.f32 %v1689, %v1487
        %1691 = vadd.xlane.f32.xlu0 %v1690
        %v1692 = vpop.xlane.xlu0 %1691
        %v1693 = vadd.f32 %v1489, %v1491
        %v1694 = vadd.f32 %v1693, %v1493
        %v1695 = vadd.f32 %v1694, %v1495
        %1696 = vadd.xlane.f32.xlu0 %v1695
        %v1697 = vpop.xlane.xlu0 %1696
        %v1698 = vadd.f32 %v1497, %v1499
        %v1699 = vadd.f32 %v1698, %v1501
        %v1700 = vadd.f32 %v1699, %v1503
        %1701 = vadd.xlane.f32.xlu0 %v1700
        %v1702 = vpop.xlane.xlu0 %1701
        %v1703 = vadd.f32 %v1505, %v1507
        %v1704 = vadd.f32 %v1703, %v1509
        %v1705 = vadd.f32 %v1704, %v1511
        %1706 = vadd.xlane.f32.xlu0 %v1705
        %v1707 = vpop.xlane.xlu0 %1706
        %v1708 = vadd.f32 %v1513, %v1515
        %v1709 = vadd.f32 %v1708, %v1517
        %v1710 = vadd.f32 %v1709, %v1519
        %1711 = vadd.xlane.f32.xlu0 %v1710
        %v1712 = vpop.xlane.xlu0 %1711
        %v1713 = vadd.f32 %v1521, %v1523
        %v1714 = vadd.f32 %v1713, %v1525
        %v1715 = vadd.f32 %v1714, %v1527
        %1716 = vadd.xlane.f32.xlu0 %v1715
        %v1717 = vpop.xlane.xlu0 %1716
        %v1718 = vadd.f32 %v1529, %v1531
        %v1719 = vadd.f32 %v1718, %v1533
        %v1720 = vadd.f32 %v1719, %v1535
        %1721 = vadd.xlane.f32.xlu0 %v1720
        %v1722 = vpop.xlane.xlu0 %1721
        %v1723 = vadd.f32 %v1537, %v1539
        %v1724 = vadd.f32 %v1723, %v1541
        %v1725 = vadd.f32 %v1724, %v1543
        %1726 = vadd.xlane.f32.xlu0 %v1725
        %v1727 = vpop.xlane.xlu0 %1726
        %v1728 = vadd.f32 %v1545, %v1547
        %v1729 = vadd.f32 %v1728, %v1549
        %v1730 = vadd.f32 %v1729, %v1551
        %1731 = vadd.xlane.f32.xlu0 %v1730
        %v1732 = vpop.xlane.xlu0 %1731
        %v1733 = vadd.f32 %v1553, %v1555
        %v1734 = vadd.f32 %v1733, %v1557
        %v1735 = vadd.f32 %v1734, %v1559
        %1736 = vadd.xlane.f32.xlu0 %v1735
        %v1737 = vpop.xlane.xlu0 %1736
        %v1738 = vadd.f32 %v1561, %v1563
        %v1739 = vadd.f32 %v1738, %v1565
        %v1740 = vadd.f32 %v1739, %v1567
        %1741 = vadd.xlane.f32.xlu0 %v1740
        %v1742 = vpop.xlane.xlu0 %1741
        %v1743 = vadd.f32 %v1569, %v1571
        %v1744 = vadd.f32 %v1743, %v1573
        %v1745 = vadd.f32 %v1744, %v1575
        %1746 = vadd.xlane.f32.xlu0 %v1745
        %v1747 = vpop.xlane.xlu0 %1746
        %v1748 = vadd.f32 %v1577, %v1579
        %v1749 = vadd.f32 %v1748, %v1581
        %v1750 = vadd.f32 %v1749, %v1583
        %1751 = vadd.xlane.f32.xlu0 %v1750
        %v1752 = vpop.xlane.xlu0 %1751
        %v1753 = vadd.f32 %v1585, %v1587
        %v1754 = vadd.f32 %v1753, %v1589
        %v1755 = vadd.f32 %v1754, %v1591
        %1756 = vadd.xlane.f32.xlu0 %v1755
        %v1757 = vpop.xlane.xlu0 %1756
        %v1758 = vadd.f32 %v1593, %v1595
        %v1759 = vadd.f32 %v1758, %v1597
        %v1760 = vadd.f32 %v1759, %v1599
        %1761 = vadd.xlane.f32.xlu0 %v1760
        %v1762 = vpop.xlane.xlu0 %1761
        %v1763 = vadd.f32 %v1601, %v1603
        %v1764 = vadd.f32 %v1763, %v1605
        %v1765 = vadd.f32 %v1764, %v1607
        %1766 = vadd.xlane.f32.xlu0 %v1765
        %v1767 = vpop.xlane.xlu0 %1766
        %v1768 = vld [vmem:[#allocation3] sm:$0xff]
        %v1769 = vld [vmem:[#allocation3 + $0x8] sm:$0xff]
        %v1770 = vld [vmem:[#allocation3 + $0x10] sm:$0xff]
        %v1771 = vld [vmem:[#allocation3 + $0x18] sm:$0xff]
        %v1772 = vld [vmem:[#allocation3 + $0x20] sm:$0xff]
        %v1773 = vld [vmem:[#allocation3 + $0x28] sm:$0xff]
        %v1774 = vld [vmem:[#allocation3 + $0x30] sm:$0xff]
        %v1775 = vld [vmem:[#allocation3 + $0x38] sm:$0xff]
        %v1776 = vld [vmem:[#allocation3 + $0x40] sm:$0xff]
        %v1777 = vld [vmem:[#allocation3 + $0x48] sm:$0xff]
        %v1778 = vld [vmem:[#allocation3 + $0x50] sm:$0xff]
        %v1779 = vld [vmem:[#allocation3 + $0x58] sm:$0xff]
        %v1780 = vld [vmem:[#allocation3 + $0x60] sm:$0xff]
        %v1781 = vld [vmem:[#allocation3 + $0x68] sm:$0xff]
        %v1782 = vld [vmem:[#allocation3 + $0x70] sm:$0xff]
        %v1783 = vld [vmem:[#allocation3 + $0x78] sm:$0xff]
        %v1784 = vld [vmem:[#allocation3 + $0x80] sm:$0xff]
        %v1785 = vld [vmem:[#allocation3 + $0x88] sm:$0xff]
        %v1786 = vld [vmem:[#allocation3 + $0x90] sm:$0xff]
        %v1787 = vld [vmem:[#allocation3 + $0x98] sm:$0xff]
        %v1788 = vld [vmem:[#allocation3 + $0xa0] sm:$0xff]
        %v1789 = vld [vmem:[#allocation3 + $0xa8] sm:$0xff]
        %v1790 = vld [vmem:[#allocation3 + $0xb0] sm:$0xff]
        %v1791 = vld [vmem:[#allocation3 + $0xb8] sm:$0xff]
        %v1792 = vld [vmem:[#allocation3 + $0xc0] sm:$0xff]
        %v1793 = vld [vmem:[#allocation3 + $0xc8] sm:$0xff]
        %v1794 = vld [vmem:[#allocation3 + $0xd0] sm:$0xff]
        %v1795 = vld [vmem:[#allocation3 + $0xd8] sm:$0xff]
        %v1796 = vld [vmem:[#allocation3 + $0xe0] sm:$0xff]
        %v1797 = vld [vmem:[#allocation3 + $0xe8] sm:$0xff]
        %v1798 = vld [vmem:[#allocation3 + $0xf0] sm:$0xff]
        %v1799 = vld [vmem:[#allocation3 + $0xf8] sm:$0xff]
        %v1800 = vmax.f32 %v1768, %v1068
        %v1801 = vmax.f32 %v1769, %v1073
        %v1802 = vmax.f32 %v1770, %v1078
        %v1803 = vmax.f32 %v1771, %v1083
        %v1804 = vmax.f32 %v1772, %v1088
        %v1805 = vmax.f32 %v1773, %v1093
        %v1806 = vmax.f32 %v1774, %v1098
        %v1807 = vmax.f32 %v1775, %v1103
        %v1808 = vmax.f32 %v1776, %v1108
        %v1809 = vmax.f32 %v1777, %v1113
        %v1810 = vmax.f32 %v1778, %v1118
        %v1811 = vmax.f32 %v1779, %v1123
        %v1812 = vmax.f32 %v1780, %v1128
        %v1813 = vmax.f32 %v1781, %v1133
        %v1814 = vmax.f32 %v1782, %v1138
        %v1815 = vmax.f32 %v1783, %v1143
        %v1816 = vmax.f32 %v1784, %v1148
        %v1817 = vmax.f32 %v1785, %v1153
        %v1818 = vmax.f32 %v1786, %v1158
        %v1819 = vmax.f32 %v1787, %v1163
        %v1820 = vmax.f32 %v1788, %v1168
        %v1821 = vmax.f32 %v1789, %v1173
        %v1822 = vmax.f32 %v1790, %v1178
        %v1823 = vmax.f32 %v1791, %v1183
        %v1824 = vmax.f32 %v1792, %v1188
        %v1825 = vmax.f32 %v1793, %v1193
        %v1826 = vmax.f32 %v1794, %v1198
        %v1827 = vmax.f32 %v1795, %v1203
        %v1828 = vmax.f32 %v1796, %v1208
        %v1829 = vmax.f32 %v1797, %v1213
        %v1830 = vmax.f32 %v1798, %v1218
        %v1831 = vmax.f32 %v1799, %v1223
        %v1832 = vsub.f32 %v1768, %v1800
        %v1833 = vsub.f32 %v1769, %v1801
        %v1834 = vsub.f32 %v1770, %v1802
        %v1835 = vsub.f32 %v1771, %v1803
        %v1836 = vsub.f32 %v1772, %v1804
        %v1837 = vsub.f32 %v1773, %v1805
        %v1838 = vsub.f32 %v1774, %v1806
        %v1839 = vsub.f32 %v1775, %v1807
        %v1840 = vsub.f32 %v1776, %v1808
        %v1841 = vsub.f32 %v1777, %v1809
        %v1842 = vsub.f32 %v1778, %v1810
        %v1843 = vsub.f32 %v1779, %v1811
        %v1844 = vsub.f32 %v1780, %v1812
        %v1845 = vsub.f32 %v1781, %v1813
        %v1846 = vsub.f32 %v1782, %v1814
        %v1847 = vsub.f32 %v1783, %v1815
        %v1848 = vsub.f32 %v1784, %v1816
        %v1849 = vsub.f32 %v1785, %v1817
        %v1850 = vsub.f32 %v1786, %v1818
        %v1851 = vsub.f32 %v1787, %v1819
        %v1852 = vsub.f32 %v1788, %v1820
        %v1853 = vsub.f32 %v1789, %v1821
        %v1854 = vsub.f32 %v1790, %v1822
        %v1855 = vsub.f32 %v1791, %v1823
        %v1856 = vsub.f32 %v1792, %v1824
        %v1857 = vsub.f32 %v1793, %v1825
        %v1858 = vsub.f32 %v1794, %v1826
        %v1859 = vsub.f32 %v1795, %v1827
        %v1860 = vsub.f32 %v1796, %v1828
        %v1861 = vsub.f32 %v1797, %v1829
        %v1862 = vsub.f32 %v1798, %v1830
        %v1863 = vsub.f32 %v1799, %v1831
        %v1864 = vmul.f32 %v1832, 1.442695
        %v1865 = vpow.pop %v1864
        %v1866 = vmul.f32 %v1833, 1.442695
        %v1867 = vpow.pop %v1866
        %v1868 = vmul.f32 %v1834, 1.442695
        %v1869 = vpow.pop %v1868
        %v1870 = vmul.f32 %v1835, 1.442695
        %v1871 = vpow.pop %v1870
        %v1872 = vmul.f32 %v1836, 1.442695
        %v1873 = vpow.pop %v1872
        %v1874 = vmul.f32 %v1837, 1.442695
        %v1875 = vpow.pop %v1874
        %v1876 = vmul.f32 %v1838, 1.442695
        %v1877 = vpow.pop %v1876
        %v1878 = vmul.f32 %v1839, 1.442695
        %v1879 = vpow.pop %v1878
        %v1880 = vmul.f32 %v1840, 1.442695
        %v1881 = vpow.pop %v1880
        %v1882 = vmul.f32 %v1841, 1.442695
        %v1883 = vpow.pop %v1882
        %v1884 = vmul.f32 %v1842, 1.442695
        %v1885 = vpow.pop %v1884
        %v1886 = vmul.f32 %v1843, 1.442695
        %v1887 = vpow.pop %v1886
        %v1888 = vmul.f32 %v1844, 1.442695
        %v1889 = vpow.pop %v1888
        %v1890 = vmul.f32 %v1845, 1.442695
        %v1891 = vpow.pop %v1890
        %v1892 = vmul.f32 %v1846, 1.442695
        %v1893 = vpow.pop %v1892
        %v1894 = vmul.f32 %v1847, 1.442695
        %v1895 = vpow.pop %v1894
        %v1896 = vmul.f32 %v1848, 1.442695
        %v1897 = vpow.pop %v1896
        %v1898 = vmul.f32 %v1849, 1.442695
        %v1899 = vpow.pop %v1898
        %v1900 = vmul.f32 %v1850, 1.442695
        %v1901 = vpow.pop %v1900
        %v1902 = vmul.f32 %v1851, 1.442695
        %v1903 = vpow.pop %v1902
        %v1904 = vmul.f32 %v1852, 1.442695
        %v1905 = vpow.pop %v1904
        %v1906 = vmul.f32 %v1853, 1.442695
        %v1907 = vpow.pop %v1906
        %v1908 = vmul.f32 %v1854, 1.442695
        %v1909 = vpow.pop %v1908
        %v1910 = vmul.f32 %v1855, 1.442695
        %v1911 = vpow.pop %v1910
        %v1912 = vmul.f32 %v1856, 1.442695
        %v1913 = vpow.pop %v1912
        %v1914 = vmul.f32 %v1857, 1.442695
        %v1915 = vpow.pop %v1914
        %v1916 = vmul.f32 %v1858, 1.442695
        %v1917 = vpow.pop %v1916
        %v1918 = vmul.f32 %v1859, 1.442695
        %v1919 = vpow.pop %v1918
        %v1920 = vmul.f32 %v1860, 1.442695
        %v1921 = vpow.pop %v1920
        %v1922 = vmul.f32 %v1861, 1.442695
        %v1923 = vpow.pop %v1922
        %v1924 = vmul.f32 %v1862, 1.442695
        %v1925 = vpow.pop %v1924
        %v1926 = vmul.f32 %v1863, 1.442695
        %v1927 = vpow.pop %v1926
        %v1928 = vld [vmem:[#allocation4] sm:$0xff]
        %v1929 = vld [vmem:[#allocation4 + $0x8] sm:$0xff]
        %v1930 = vld [vmem:[#allocation4 + $0x10] sm:$0xff]
        %v1931 = vld [vmem:[#allocation4 + $0x18] sm:$0xff]
        %v1932 = vld [vmem:[#allocation4 + $0x20] sm:$0xff]
        %v1933 = vld [vmem:[#allocation4 + $0x28] sm:$0xff]
        %v1934 = vld [vmem:[#allocation4 + $0x30] sm:$0xff]
        %v1935 = vld [vmem:[#allocation4 + $0x38] sm:$0xff]
        %v1936 = vld [vmem:[#allocation4 + $0x40] sm:$0xff]
        %v1937 = vld [vmem:[#allocation4 + $0x48] sm:$0xff]
        %v1938 = vld [vmem:[#allocation4 + $0x50] sm:$0xff]
        %v1939 = vld [vmem:[#allocation4 + $0x58] sm:$0xff]
        %v1940 = vld [vmem:[#allocation4 + $0x60] sm:$0xff]
        %v1941 = vld [vmem:[#allocation4 + $0x68] sm:$0xff]
        %v1942 = vld [vmem:[#allocation4 + $0x70] sm:$0xff]
        %v1943 = vld [vmem:[#allocation4 + $0x78] sm:$0xff]
        %v1944 = vld [vmem:[#allocation4 + $0x80] sm:$0xff]
        %v1945 = vld [vmem:[#allocation4 + $0x88] sm:$0xff]
        %v1946 = vld [vmem:[#allocation4 + $0x90] sm:$0xff]
        %v1947 = vld [vmem:[#allocation4 + $0x98] sm:$0xff]
        %v1948 = vld [vmem:[#allocation4 + $0xa0] sm:$0xff]
        %v1949 = vld [vmem:[#allocation4 + $0xa8] sm:$0xff]
        %v1950 = vld [vmem:[#allocation4 + $0xb0] sm:$0xff]
        %v1951 = vld [vmem:[#allocation4 + $0xb8] sm:$0xff]
        %v1952 = vld [vmem:[#allocation4 + $0xc0] sm:$0xff]
        %v1953 = vld [vmem:[#allocation4 + $0xc8] sm:$0xff]
        %v1954 = vld [vmem:[#allocation4 + $0xd0] sm:$0xff]
        %v1955 = vld [vmem:[#allocation4 + $0xd8] sm:$0xff]
        %v1956 = vld [vmem:[#allocation4 + $0xe0] sm:$0xff]
        %v1957 = vld [vmem:[#allocation4 + $0xe8] sm:$0xff]
        %v1958 = vld [vmem:[#allocation4 + $0xf0] sm:$0xff]
        %v1959 = vld [vmem:[#allocation4 + $0xf8] sm:$0xff]
        %v1960 = vmul.f32 %v1865, %v1928
        %v1961 = vmul.f32 %v1867, %v1929
        %v1962 = vmul.f32 %v1869, %v1930
        %v1963 = vmul.f32 %v1871, %v1931
        %v1964 = vmul.f32 %v1873, %v1932
        %v1965 = vmul.f32 %v1875, %v1933
        %v1966 = vmul.f32 %v1877, %v1934
        %v1967 = vmul.f32 %v1879, %v1935
        %v1968 = vmul.f32 %v1881, %v1936
        %v1969 = vmul.f32 %v1883, %v1937
        %v1970 = vmul.f32 %v1885, %v1938
        %v1971 = vmul.f32 %v1887, %v1939
        %v1972 = vmul.f32 %v1889, %v1940
        %v1973 = vmul.f32 %v1891, %v1941
        %v1974 = vmul.f32 %v1893, %v1942
        %v1975 = vmul.f32 %v1895, %v1943
        %v1976 = vmul.f32 %v1897, %v1944
        %v1977 = vmul.f32 %v1899, %v1945
        %v1978 = vmul.f32 %v1901, %v1946
        %v1979 = vmul.f32 %v1903, %v1947
        %v1980 = vmul.f32 %v1905, %v1948
        %v1981 = vmul.f32 %v1907, %v1949
        %v1982 = vmul.f32 %v1909, %v1950
        %v1983 = vmul.f32 %v1911, %v1951
        %v1984 = vmul.f32 %v1913, %v1952
        %v1985 = vmul.f32 %v1915, %v1953
        %v1986 = vmul.f32 %v1917, %v1954
        %v1987 = vmul.f32 %v1919, %v1955
        %v1988 = vmul.f32 %v1921, %v1956
        %v1989 = vmul.f32 %v1923, %v1957
        %v1990 = vmul.f32 %v1925, %v1958
        %v1991 = vmul.f32 %v1927, %v1959
        %v1992 = vsub.f32 %v1068, %v1800
        %v1993 = vsub.f32 %v1073, %v1801
        %v1994 = vsub.f32 %v1078, %v1802
        %v1995 = vsub.f32 %v1083, %v1803
        %v1996 = vsub.f32 %v1088, %v1804
        %v1997 = vsub.f32 %v1093, %v1805
        %v1998 = vsub.f32 %v1098, %v1806
        %v1999 = vsub.f32 %v1103, %v1807
        %v2000 = vsub.f32 %v1108, %v1808
        %v2001 = vsub.f32 %v1113, %v1809
        %v2002 = vsub.f32 %v1118, %v1810
        %v2003 = vsub.f32 %v1123, %v1811
        %v2004 = vsub.f32 %v1128, %v1812
        %v2005 = vsub.f32 %v1133, %v1813
        %v2006 = vsub.f32 %v1138, %v1814
        %v2007 = vsub.f32 %v1143, %v1815
        %v2008 = vsub.f32 %v1148, %v1816
        %v2009 = vsub.f32 %v1153, %v1817
        %v2010 = vsub.f32 %v1158, %v1818
        %v2011 = vsub.f32 %v1163, %v1819
        %v2012 = vsub.f32 %v1168, %v1820
        %v2013 = vsub.f32 %v1173, %v1821
        %v2014 = vsub.f32 %v1178, %v1822
        %v2015 = vsub.f32 %v1183, %v1823
        %v2016 = vsub.f32 %v1188, %v1824
        %v2017 = vsub.f32 %v1193, %v1825
        %v2018 = vsub.f32 %v1198, %v1826
        %v2019 = vsub.f32 %v1203, %v1827
        %v2020 = vsub.f32 %v1208, %v1828
        %v2021 = vsub.f32 %v1213, %v1829
        %v2022 = vsub.f32 %v1218, %v1830
        %v2023 = vsub.f32 %v1223, %v1831
        %v2024 = vmul.f32 %v1992, 1.442695
        %v2025 = vpow.pop %v2024
        %v2026 = vmul.f32 %v1993, 1.442695
        %v2027 = vpow.pop %v2026
        %v2028 = vmul.f32 %v1994, 1.442695
        %v2029 = vpow.pop %v2028
        %v2030 = vmul.f32 %v1995, 1.442695
        %v2031 = vpow.pop %v2030
        %v2032 = vmul.f32 %v1996, 1.442695
        %v2033 = vpow.pop %v2032
        %v2034 = vmul.f32 %v1997, 1.442695
        %v2035 = vpow.pop %v2034
        %v2036 = vmul.f32 %v1998, 1.442695
        %v2037 = vpow.pop %v2036
        %v2038 = vmul.f32 %v1999, 1.442695
        %v2039 = vpow.pop %v2038
        %v2040 = vmul.f32 %v2000, 1.442695
        %v2041 = vpow.pop %v2040
        %v2042 = vmul.f32 %v2001, 1.442695
        %v2043 = vpow.pop %v2042
        %v2044 = vmul.f32 %v2002, 1.442695
        %v2045 = vpow.pop %v2044
        %v2046 = vmul.f32 %v2003, 1.442695
        %v2047 = vpow.pop %v2046
        %v2048 = vmul.f32 %v2004, 1.442695
        %v2049 = vpow.pop %v2048
        %v2050 = vmul.f32 %v2005, 1.442695
        %v2051 = vpow.pop %v2050
        %v2052 = vmul.f32 %v2006, 1.442695
        %v2053 = vpow.pop %v2052
        %v2054 = vmul.f32 %v2007, 1.442695
        %v2055 = vpow.pop %v2054
        %v2056 = vmul.f32 %v2008, 1.442695
        %v2057 = vpow.pop %v2056
        %v2058 = vmul.f32 %v2009, 1.442695
        %v2059 = vpow.pop %v2058
        %v2060 = vmul.f32 %v2010, 1.442695
        %v2061 = vpow.pop %v2060
        %v2062 = vmul.f32 %v2011, 1.442695
        %v2063 = vpow.pop %v2062
        %v2064 = vmul.f32 %v2012, 1.442695
        %v2065 = vpow.pop %v2064
        %v2066 = vmul.f32 %v2013, 1.442695
        %v2067 = vpow.pop %v2066
        %v2068 = vmul.f32 %v2014, 1.442695
        %v2069 = vpow.pop %v2068
        %v2070 = vmul.f32 %v2015, 1.442695
        %v2071 = vpow.pop %v2070
        %v2072 = vmul.f32 %v2016, 1.442695
        %v2073 = vpow.pop %v2072
        %v2074 = vmul.f32 %v2017, 1.442695
        %v2075 = vpow.pop %v2074
        %v2076 = vmul.f32 %v2018, 1.442695
        %v2077 = vpow.pop %v2076
        %v2078 = vmul.f32 %v2019, 1.442695
        %v2079 = vpow.pop %v2078
        %v2080 = vmul.f32 %v2020, 1.442695
        %v2081 = vpow.pop %v2080
        %v2082 = vmul.f32 %v2021, 1.442695
        %v2083 = vpow.pop %v2082
        %v2084 = vmul.f32 %v2022, 1.442695
        %v2085 = vpow.pop %v2084
        %v2086 = vmul.f32 %v2023, 1.442695
        %v2087 = vpow.pop %v2086
        %v2088 = vmul.f32 %v2025, %v1612
        %v2089 = vmul.f32 %v2027, %v1617
        %v2090 = vmul.f32 %v2029, %v1622
        %v2091 = vmul.f32 %v2031, %v1627
        %v2092 = vmul.f32 %v2033, %v1632
        %v2093 = vmul.f32 %v2035, %v1637
        %v2094 = vmul.f32 %v2037, %v1642
        %v2095 = vmul.f32 %v2039, %v1647
        %v2096 = vmul.f32 %v2041, %v1652
        %v2097 = vmul.f32 %v2043, %v1657
        %v2098 = vmul.f32 %v2045, %v1662
        %v2099 = vmul.f32 %v2047, %v1667
        %v2100 = vmul.f32 %v2049, %v1672
        %v2101 = vmul.f32 %v2051, %v1677
        %v2102 = vmul.f32 %v2053, %v1682
        %v2103 = vmul.f32 %v2055, %v1687
        %v2104 = vmul.f32 %v2057, %v1692
        %v2105 = vmul.f32 %v2059, %v1697
        %v2106 = vmul.f32 %v2061, %v1702
        %v2107 = vmul.f32 %v2063, %v1707
        %v2108 = vmul.f32 %v2065, %v1712
        %v2109 = vmul.f32 %v2067, %v1717
        %v2110 = vmul.f32 %v2069, %v1722
        %v2111 = vmul.f32 %v2071, %v1727
        %v2112 = vmul.f32 %v2073, %v1732
        %v2113 = vmul.f32 %v2075, %v1737
        %v2114 = vmul.f32 %v2077, %v1742
        %v2115 = vmul.f32 %v2079, %v1747
        %v2116 = vmul.f32 %v2081, %v1752
        %v2117 = vmul.f32 %v2083, %v1757
        %v2118 = vmul.f32 %v2085, %v1762
        %v2119 = vmul.f32 %v2087, %v1767
        %v2120 = vadd.f32 %v1960, %v2088
        %v2121 = vadd.f32 %v1961, %v2089
        %v2122 = vadd.f32 %v1962, %v2090
        %v2123 = vadd.f32 %v1963, %v2091
        %v2124 = vadd.f32 %v1964, %v2092
        %v2125 = vadd.f32 %v1965, %v2093
        %v2126 = vadd.f32 %v1966, %v2094
        %v2127 = vadd.f32 %v1967, %v2095
        %v2128 = vadd.f32 %v1968, %v2096
        %v2129 = vadd.f32 %v1969, %v2097
        %v2130 = vadd.f32 %v1970, %v2098
        %v2131 = vadd.f32 %v1971, %v2099
        %v2132 = vadd.f32 %v1972, %v2100
        %v2133 = vadd.f32 %v1973, %v2101
        %v2134 = vadd.f32 %v1974, %v2102
        %v2135 = vadd.f32 %v1975, %v2103
        %v2136 = vadd.f32 %v1976, %v2104
        %v2137 = vadd.f32 %v1977, %v2105
        %v2138 = vadd.f32 %v1978, %v2106
        %v2139 = vadd.f32 %v1979, %v2107
        %v2140 = vadd.f32 %v1980, %v2108
        %v2141 = vadd.f32 %v1981, %v2109
        %v2142 = vadd.f32 %v1982, %v2110
        %v2143 = vadd.f32 %v1983, %v2111
        %v2144 = vadd.f32 %v1984, %v2112
        %v2145 = vadd.f32 %v1985, %v2113
        %v2146 = vadd.f32 %v1986, %v2114
        %v2147 = vadd.f32 %v1987, %v2115
        %v2148 = vadd.f32 %v1988, %v2116
        %v2149 = vadd.f32 %v1989, %v2117
        %v2150 = vadd.f32 %v1990, %v2118
        %v2151 = vadd.f32 %v1991, %v2119
        %vm2152 = vcmask 7168
        %2153 = vst.msk [vmem:[#allocation4] sm:$0xff] %vm2152, %v2120
        %2154 = vst.msk [vmem:[#allocation4 + $0x8] sm:$0xff] %vm2152, %v2121
        %2155 = vst.msk [vmem:[#allocation4 + $0x10] sm:$0xff] %vm2152, %v2122
        %2156 = vst.msk [vmem:[#allocation4 + $0x18] sm:$0xff] %vm2152, %v2123
        %2157 = vst.msk [vmem:[#allocation4 + $0x20] sm:$0xff] %vm2152, %v2124
        %2158 = vst.msk [vmem:[#allocation4 + $0x28] sm:$0xff] %vm2152, %v2125
        %2159 = vst.msk [vmem:[#allocation4 + $0x30] sm:$0xff] %vm2152, %v2126
        %2160 = vst.msk [vmem:[#allocation4 + $0x38] sm:$0xff] %vm2152, %v2127
        %2161 = vst.msk [vmem:[#allocation4 + $0x40] sm:$0xff] %vm2152, %v2128
        %2162 = vst.msk [vmem:[#allocation4 + $0x48] sm:$0xff] %vm2152, %v2129
        %2163 = vst.msk [vmem:[#allocation4 + $0x50] sm:$0xff] %vm2152, %v2130
        %2164 = vst.msk [vmem:[#allocation4 + $0x58] sm:$0xff] %vm2152, %v2131
        %2165 = vst.msk [vmem:[#allocation4 + $0x60] sm:$0xff] %vm2152, %v2132
        %2166 = vst.msk [vmem:[#allocation4 + $0x68] sm:$0xff] %vm2152, %v2133
        %2167 = vst.msk [vmem:[#allocation4 + $0x70] sm:$0xff] %vm2152, %v2134
        %2168 = vst.msk [vmem:[#allocation4 + $0x78] sm:$0xff] %vm2152, %v2135
        %2169 = vst.msk [vmem:[#allocation4 + $0x80] sm:$0xff] %vm2152, %v2136
        %2170 = vst.msk [vmem:[#allocation4 + $0x88] sm:$0xff] %vm2152, %v2137
        %2171 = vst.msk [vmem:[#allocation4 + $0x90] sm:$0xff] %vm2152, %v2138
        %2172 = vst.msk [vmem:[#allocation4 + $0x98] sm:$0xff] %vm2152, %v2139
        %2173 = vst.msk [vmem:[#allocation4 + $0xa0] sm:$0xff] %vm2152, %v2140
        %2174 = vst.msk [vmem:[#allocation4 + $0xa8] sm:$0xff] %vm2152, %v2141
        %2175 = vst.msk [vmem:[#allocation4 + $0xb0] sm:$0xff] %vm2152, %v2142
        %2176 = vst.msk [vmem:[#allocation4 + $0xb8] sm:$0xff] %vm2152, %v2143
        %2177 = vst.msk [vmem:[#allocation4 + $0xc0] sm:$0xff] %vm2152, %v2144
        %2178 = vst.msk [vmem:[#allocation4 + $0xc8] sm:$0xff] %vm2152, %v2145
        %2179 = vst.msk [vmem:[#allocation4 + $0xd0] sm:$0xff] %vm2152, %v2146
        %2180 = vst.msk [vmem:[#allocation4 + $0xd8] sm:$0xff] %vm2152, %v2147
        %2181 = vst.msk [vmem:[#allocation4 + $0xe0] sm:$0xff] %vm2152, %v2148
        %2182 = vst.msk [vmem:[#allocation4 + $0xe8] sm:$0xff] %vm2152, %v2149
        %2183 = vst.msk [vmem:[#allocation4 + $0xf0] sm:$0xff] %vm2152, %v2150
        %2184 = vst.msk [vmem:[#allocation4 + $0xf8] sm:$0xff] %vm2152, %v2151
        %2185 = vst.msk [vmem:[#allocation3] sm:$0xff] %vm2152, %v1800
        %2186 = vst.msk [vmem:[#allocation3 + $0x8] sm:$0xff] %vm2152, %v1801
        %2187 = vst.msk [vmem:[#allocation3 + $0x10] sm:$0xff] %vm2152, %v1802
        %2188 = vst.msk [vmem:[#allocation3 + $0x18] sm:$0xff] %vm2152, %v1803
        %2189 = vst.msk [vmem:[#allocation3 + $0x20] sm:$0xff] %vm2152, %v1804
        %2190 = vst.msk [vmem:[#allocation3 + $0x28] sm:$0xff] %vm2152, %v1805
        %2191 = vst.msk [vmem:[#allocation3 + $0x30] sm:$0xff] %vm2152, %v1806
        %2192 = vst.msk [vmem:[#allocation3 + $0x38] sm:$0xff] %vm2152, %v1807
        %2193 = vst.msk [vmem:[#allocation3 + $0x40] sm:$0xff] %vm2152, %v1808
        %2194 = vst.msk [vmem:[#allocation3 + $0x48] sm:$0xff] %vm2152, %v1809
        %2195 = vst.msk [vmem:[#allocation3 + $0x50] sm:$0xff] %vm2152, %v1810
        %2196 = vst.msk [vmem:[#allocation3 + $0x58] sm:$0xff] %vm2152, %v1811
        %2197 = vst.msk [vmem:[#allocation3 + $0x60] sm:$0xff] %vm2152, %v1812
        %2198 = vst.msk [vmem:[#allocation3 + $0x68] sm:$0xff] %vm2152, %v1813
        %2199 = vst.msk [vmem:[#allocation3 + $0x70] sm:$0xff] %vm2152, %v1814
        %2200 = vst.msk [vmem:[#allocation3 + $0x78] sm:$0xff] %vm2152, %v1815
        %2201 = vst.msk [vmem:[#allocation3 + $0x80] sm:$0xff] %vm2152, %v1816
        %2202 = vst.msk [vmem:[#allocation3 + $0x88] sm:$0xff] %vm2152, %v1817
        %2203 = vst.msk [vmem:[#allocation3 + $0x90] sm:$0xff] %vm2152, %v1818
        %2204 = vst.msk [vmem:[#allocation3 + $0x98] sm:$0xff] %vm2152, %v1819
        %2205 = vst.msk [vmem:[#allocation3 + $0xa0] sm:$0xff] %vm2152, %v1820
        %2206 = vst.msk [vmem:[#allocation3 + $0xa8] sm:$0xff] %vm2152, %v1821
        %2207 = vst.msk [vmem:[#allocation3 + $0xb0] sm:$0xff] %vm2152, %v1822
        %2208 = vst.msk [vmem:[#allocation3 + $0xb8] sm:$0xff] %vm2152, %v1823
        %2209 = vst.msk [vmem:[#allocation3 + $0xc0] sm:$0xff] %vm2152, %v1824
        %2210 = vst.msk [vmem:[#allocation3 + $0xc8] sm:$0xff] %vm2152, %v1825
        %2211 = vst.msk [vmem:[#allocation3 + $0xd0] sm:$0xff] %vm2152, %v1826
        %2212 = vst.msk [vmem:[#allocation3 + $0xd8] sm:$0xff] %vm2152, %v1827
        %2213 = vst.msk [vmem:[#allocation3 + $0xe0] sm:$0xff] %vm2152, %v1828
        %2214 = vst.msk [vmem:[#allocation3 + $0xe8] sm:$0xff] %vm2152, %v1829
        %2215 = vst.msk [vmem:[#allocation3 + $0xf0] sm:$0xff] %vm2152, %v1830
        %2216 = vst.msk [vmem:[#allocation3 + $0xf8] sm:$0xff] %vm2152, %v1831
        %v2217 = vld [vmem:[#allocation3] sm:$0xff]
        %v2218 = vld [vmem:[#allocation3 + $0x8] sm:$0xff]
        %v2219 = vld [vmem:[#allocation3 + $0x10] sm:$0xff]
        %v2220 = vld [vmem:[#allocation3 + $0x18] sm:$0xff]
        %v2221 = vld [vmem:[#allocation3 + $0x20] sm:$0xff]
        %v2222 = vld [vmem:[#allocation3 + $0x28] sm:$0xff]
        %v2223 = vld [vmem:[#allocation3 + $0x30] sm:$0xff]
        %v2224 = vld [vmem:[#allocation3 + $0x38] sm:$0xff]
        %v2225 = vld [vmem:[#allocation3 + $0x40] sm:$0xff]
        %v2226 = vld [vmem:[#allocation3 + $0x48] sm:$0xff]
        %v2227 = vld [vmem:[#allocation3 + $0x50] sm:$0xff]
        %v2228 = vld [vmem:[#allocation3 + $0x58] sm:$0xff]
        %v2229 = vld [vmem:[#allocation3 + $0x60] sm:$0xff]
        %v2230 = vld [vmem:[#allocation3 + $0x68] sm:$0xff]
        %v2231 = vld [vmem:[#allocation3 + $0x70] sm:$0xff]
        %v2232 = vld [vmem:[#allocation3 + $0x78] sm:$0xff]
        %v2233 = vld [vmem:[#allocation3 + $0x80] sm:$0xff]
        %v2234 = vld [vmem:[#allocation3 + $0x88] sm:$0xff]
        %v2235 = vld [vmem:[#allocation3 + $0x90] sm:$0xff]
        %v2236 = vld [vmem:[#allocation3 + $0x98] sm:$0xff]
        %v2237 = vld [vmem:[#allocation3 + $0xa0] sm:$0xff]
        %v2238 = vld [vmem:[#allocation3 + $0xa8] sm:$0xff]
        %v2239 = vld [vmem:[#allocation3 + $0xb0] sm:$0xff]
        %v2240 = vld [vmem:[#allocation3 + $0xb8] sm:$0xff]
        %v2241 = vld [vmem:[#allocation3 + $0xc0] sm:$0xff]
        %v2242 = vld [vmem:[#allocation3 + $0xc8] sm:$0xff]
        %v2243 = vld [vmem:[#allocation3 + $0xd0] sm:$0xff]
        %v2244 = vld [vmem:[#allocation3 + $0xd8] sm:$0xff]
        %v2245 = vld [vmem:[#allocation3 + $0xe0] sm:$0xff]
        %v2246 = vld [vmem:[#allocation3 + $0xe8] sm:$0xff]
        %v2247 = vld [vmem:[#allocation3 + $0xf0] sm:$0xff]
        %v2248 = vld [vmem:[#allocation3 + $0xf8] sm:$0xff]
        %v2249 = vld [vmem:[#allocation4] sm:$0xff]
        %v2250 = vld [vmem:[#allocation4 + $0x8] sm:$0xff]
        %v2251 = vld [vmem:[#allocation4 + $0x10] sm:$0xff]
        %v2252 = vld [vmem:[#allocation4 + $0x18] sm:$0xff]
        %v2253 = vld [vmem:[#allocation4 + $0x20] sm:$0xff]
        %v2254 = vld [vmem:[#allocation4 + $0x28] sm:$0xff]
        %v2255 = vld [vmem:[#allocation4 + $0x30] sm:$0xff]
        %v2256 = vld [vmem:[#allocation4 + $0x38] sm:$0xff]
        %v2257 = vld [vmem:[#allocation4 + $0x40] sm:$0xff]
        %v2258 = vld [vmem:[#allocation4 + $0x48] sm:$0xff]
        %v2259 = vld [vmem:[#allocation4 + $0x50] sm:$0xff]
        %v2260 = vld [vmem:[#allocation4 + $0x58] sm:$0xff]
        %v2261 = vld [vmem:[#allocation4 + $0x60] sm:$0xff]
        %v2262 = vld [vmem:[#allocation4 + $0x68] sm:$0xff]
        %v2263 = vld [vmem:[#allocation4 + $0x70] sm:$0xff]
        %v2264 = vld [vmem:[#allocation4 + $0x78] sm:$0xff]
        %v2265 = vld [vmem:[#allocation4 + $0x80] sm:$0xff]
        %v2266 = vld [vmem:[#allocation4 + $0x88] sm:$0xff]
        %v2267 = vld [vmem:[#allocation4 + $0x90] sm:$0xff]
        %v2268 = vld [vmem:[#allocation4 + $0x98] sm:$0xff]
        %v2269 = vld [vmem:[#allocation4 + $0xa0] sm:$0xff]
        %v2270 = vld [vmem:[#allocation4 + $0xa8] sm:$0xff]
        %v2271 = vld [vmem:[#allocation4 + $0xb0] sm:$0xff]
        %v2272 = vld [vmem:[#allocation4 + $0xb8] sm:$0xff]
        %v2273 = vld [vmem:[#allocation4 + $0xc0] sm:$0xff]
        %v2274 = vld [vmem:[#allocation4 + $0xc8] sm:$0xff]
        %v2275 = vld [vmem:[#allocation4 + $0xd0] sm:$0xff]
        %v2276 = vld [vmem:[#allocation4 + $0xd8] sm:$0xff]
        %v2277 = vld [vmem:[#allocation4 + $0xe0] sm:$0xff]
        %v2278 = vld [vmem:[#allocation4 + $0xe8] sm:$0xff]
        %v2279 = vld [vmem:[#allocation4 + $0xf0] sm:$0xff]
        %v2280 = vld [vmem:[#allocation4 + $0xf8] sm:$0xff]
        %v2281 = vlog2.pop %v2249
        %v2282 = vmul.f32 %v2281, 0.6931472
        %v2283 = vlog2.pop %v2250
        %v2284 = vmul.f32 %v2283, 0.6931472
        %v2285 = vlog2.pop %v2251
        %v2286 = vmul.f32 %v2285, 0.6931472
        %v2287 = vlog2.pop %v2252
        %v2288 = vmul.f32 %v2287, 0.6931472
        %v2289 = vlog2.pop %v2253
        %v2290 = vmul.f32 %v2289, 0.6931472
        %v2291 = vlog2.pop %v2254
        %v2292 = vmul.f32 %v2291, 0.6931472
        %v2293 = vlog2.pop %v2255
        %v2294 = vmul.f32 %v2293, 0.6931472
        %v2295 = vlog2.pop %v2256
        %v2296 = vmul.f32 %v2295, 0.6931472
        %v2297 = vlog2.pop %v2257
        %v2298 = vmul.f32 %v2297, 0.6931472
        %v2299 = vlog2.pop %v2258
        %v2300 = vmul.f32 %v2299, 0.6931472
        %v2301 = vlog2.pop %v2259
        %v2302 = vmul.f32 %v2301, 0.6931472
        %v2303 = vlog2.pop %v2260
        %v2304 = vmul.f32 %v2303, 0.6931472
        %v2305 = vlog2.pop %v2261
        %v2306 = vmul.f32 %v2305, 0.6931472
        %v2307 = vlog2.pop %v2262
        %v2308 = vmul.f32 %v2307, 0.6931472
        %v2309 = vlog2.pop %v2263
        %v2310 = vmul.f32 %v2309, 0.6931472
        %v2311 = vlog2.pop %v2264
        %v2312 = vmul.f32 %v2311, 0.6931472
        %v2313 = vlog2.pop %v2265
        %v2314 = vmul.f32 %v2313, 0.6931472
        %v2315 = vlog2.pop %v2266
        %v2316 = vmul.f32 %v2315, 0.6931472
        %v2317 = vlog2.pop %v2267
        %v2318 = vmul.f32 %v2317, 0.6931472
        %v2319 = vlog2.pop %v2268
        %v2320 = vmul.f32 %v2319, 0.6931472
        %v2321 = vlog2.pop %v2269
        %v2322 = vmul.f32 %v2321, 0.6931472
        %v2323 = vlog2.pop %v2270
        %v2324 = vmul.f32 %v2323, 0.6931472
        %v2325 = vlog2.pop %v2271
        %v2326 = vmul.f32 %v2325, 0.6931472
        %v2327 = vlog2.pop %v2272
        %v2328 = vmul.f32 %v2327, 0.6931472
        %v2329 = vlog2.pop %v2273
        %v2330 = vmul.f32 %v2329, 0.6931472
        %v2331 = vlog2.pop %v2274
        %v2332 = vmul.f32 %v2331, 0.6931472
        %v2333 = vlog2.pop %v2275
        %v2334 = vmul.f32 %v2333, 0.6931472
        %v2335 = vlog2.pop %v2276
        %v2336 = vmul.f32 %v2335, 0.6931472
        %v2337 = vlog2.pop %v2277
        %v2338 = vmul.f32 %v2337, 0.6931472
        %v2339 = vlog2.pop %v2278
        %v2340 = vmul.f32 %v2339, 0.6931472
        %v2341 = vlog2.pop %v2279
        %v2342 = vmul.f32 %v2341, 0.6931472
        %v2343 = vlog2.pop %v2280
        %v2344 = vmul.f32 %v2343, 0.6931472
        %v2345 = vadd.f32 %v2217, %v2282
        %v2346 = vadd.f32 %v2218, %v2284
        %v2347 = vadd.f32 %v2219, %v2286
        %v2348 = vadd.f32 %v2220, %v2288
        %v2349 = vadd.f32 %v2221, %v2290
        %v2350 = vadd.f32 %v2222, %v2292
        %v2351 = vadd.f32 %v2223, %v2294
        %v2352 = vadd.f32 %v2224, %v2296
        %v2353 = vadd.f32 %v2225, %v2298
        %v2354 = vadd.f32 %v2226, %v2300
        %v2355 = vadd.f32 %v2227, %v2302
        %v2356 = vadd.f32 %v2228, %v2304
        %v2357 = vadd.f32 %v2229, %v2306
        %v2358 = vadd.f32 %v2230, %v2308
        %v2359 = vadd.f32 %v2231, %v2310
        %v2360 = vadd.f32 %v2232, %v2312
        %v2361 = vadd.f32 %v2233, %v2314
        %v2362 = vadd.f32 %v2234, %v2316
        %v2363 = vadd.f32 %v2235, %v2318
        %v2364 = vadd.f32 %v2236, %v2320
        %v2365 = vadd.f32 %v2237, %v2322
        %v2366 = vadd.f32 %v2238, %v2324
        %v2367 = vadd.f32 %v2239, %v2326
        %v2368 = vadd.f32 %v2240, %v2328
        %v2369 = vadd.f32 %v2241, %v2330
        %v2370 = vadd.f32 %v2242, %v2332
        %v2371 = vadd.f32 %v2243, %v2334
        %v2372 = vadd.f32 %v2244, %v2336
        %v2373 = vadd.f32 %v2245, %v2338
        %v2374 = vadd.f32 %v2246, %v2340
        %v2375 = vadd.f32 %v2247, %v2342
        %v2376 = vadd.f32 %v2248, %v2344
        %2377 = vst.msk [vmem:[%s298] sm:$0xff] %vm2152, %v2345
        %2378 = vst.msk [vmem:[%s298 + $0x8] sm:$0xff] %vm2152, %v2346
        %2379 = vst.msk [vmem:[%s298 + $0x10] sm:$0xff] %vm2152, %v2347
        %2380 = vst.msk [vmem:[%s298 + $0x18] sm:$0xff] %vm2152, %v2348
        %2381 = vst.msk [vmem:[%s298 + $0x20] sm:$0xff] %vm2152, %v2349
        %2382 = vst.msk [vmem:[%s298 + $0x28] sm:$0xff] %vm2152, %v2350
        %2383 = vst.msk [vmem:[%s298 + $0x30] sm:$0xff] %vm2152, %v2351
        %2384 = vst.msk [vmem:[%s298 + $0x38] sm:$0xff] %vm2152, %v2352
        %2385 = vst.msk [vmem:[%s298 + $0x40] sm:$0xff] %vm2152, %v2353
        %2386 = vst.msk [vmem:[%s298 + $0x48] sm:$0xff] %vm2152, %v2354
        %2387 = vst.msk [vmem:[%s298 + $0x50] sm:$0xff] %vm2152, %v2355
        %2388 = vst.msk [vmem:[%s298 + $0x58] sm:$0xff] %vm2152, %v2356
        %2389 = vst.msk [vmem:[%s298 + $0x60] sm:$0xff] %vm2152, %v2357
        %2390 = vst.msk [vmem:[%s298 + $0x68] sm:$0xff] %vm2152, %v2358
        %2391 = vst.msk [vmem:[%s298 + $0x70] sm:$0xff] %vm2152, %v2359
        %2392 = vst.msk [vmem:[%s298 + $0x78] sm:$0xff] %vm2152, %v2360
        %2393 = vst.msk [vmem:[%s298 + $0x80] sm:$0xff] %vm2152, %v2361
        %2394 = vst.msk [vmem:[%s298 + $0x88] sm:$0xff] %vm2152, %v2362
        %2395 = vst.msk [vmem:[%s298 + $0x90] sm:$0xff] %vm2152, %v2363
        %2396 = vst.msk [vmem:[%s298 + $0x98] sm:$0xff] %vm2152, %v2364
        %2397 = vst.msk [vmem:[%s298 + $0xa0] sm:$0xff] %vm2152, %v2365
        %2398 = vst.msk [vmem:[%s298 + $0xa8] sm:$0xff] %vm2152, %v2366
        %2399 = vst.msk [vmem:[%s298 + $0xb0] sm:$0xff] %vm2152, %v2367
        %2400 = vst.msk [vmem:[%s298 + $0xb8] sm:$0xff] %vm2152, %v2368
        %2401 = vst.msk [vmem:[%s298 + $0xc0] sm:$0xff] %vm2152, %v2369
        %2402 = vst.msk [vmem:[%s298 + $0xc8] sm:$0xff] %vm2152, %v2370
        %2403 = vst.msk [vmem:[%s298 + $0xd0] sm:$0xff] %vm2152, %v2371
        %2404 = vst.msk [vmem:[%s298 + $0xd8] sm:$0xff] %vm2152, %v2372
        %2405 = vst.msk [vmem:[%s298 + $0xe0] sm:$0xff] %vm2152, %v2373
        %2406 = vst.msk [vmem:[%s298 + $0xe8] sm:$0xff] %vm2152, %v2374
        %2407 = vst.msk [vmem:[%s298 + $0xf0] sm:$0xff] %vm2152, %v2375
        %2408 = vst.msk [vmem:[%s298 + $0xf8] sm:$0xff] %vm2152, %v2376
        %v2409 = vmax.f32 %v1068, %v1088
        %v2410 = vmax.f32 %v1073, %v1093
        %v2411 = vmax.f32 %v1078, %v1098
        %v2412 = vmax.f32 %v1083, %v1103
        %v2413 = vmax.f32 %v2409, %v1108
        %v2414 = vmax.f32 %v2410, %v1113
        %v2415 = vmax.f32 %v2411, %v1118
        %v2416 = vmax.f32 %v2412, %v1123
        %v2417 = vmax.f32 %v2413, %v1128
        %v2418 = vmax.f32 %v2414, %v1133
        %v2419 = vmax.f32 %v2415, %v1138
        %v2420 = vmax.f32 %v2416, %v1143
        %v2421 = vmax.f32 %v2417, %v1148
        %v2422 = vmax.f32 %v2418, %v1153
        %v2423 = vmax.f32 %v2419, %v1158
        %v2424 = vmax.f32 %v2420, %v1163
        %v2425 = vmax.f32 %v2421, %v1168
        %v2426 = vmax.f32 %v2422, %v1173
        %v2427 = vmax.f32 %v2423, %v1178
        %v2428 = vmax.f32 %v2424, %v1183
        %v2429 = vmax.f32 %v2425, %v1188
        %v2430 = vmax.f32 %v2426, %v1193
        %v2431 = vmax.f32 %v2427, %v1198
        %v2432 = vmax.f32 %v2428, %v1203
        %v2433 = vmax.f32 %v2429, %v1208
        %v2434 = vmax.f32 %v2430, %v1213
        %v2435 = vmax.f32 %v2431, %v1218
        %v2436 = vmax.f32 %v2432, %v1223
        %v2437 = vmax.f32 %v2433, %v2434
        %v2438 = vmax.f32 %v2435, %v2436
        %v2439 = vmax.f32 %v2437, %v2438
        %v2440 = vrot.slane %v2439, 4
        %v2441 = vmax.f32 %v2439, %v2440
        %v2442 = vrot.slane %v2441, 2
        %v2443 = vmax.f32 %v2441, %v2442
        %v2444 = vrot.slane %v2443, 1
        %v2445 = vmax.f32 %v2443, %v2444
        %s2446 = vtos %v2445
        %v2447 = vstv %s2446
        %v2448 = vsub.f32 %v1068, %v2447
        %v2449 = vsub.f32 %v1073, %v2447
        %v2450 = vsub.f32 %v1078, %v2447
        %v2451 = vsub.f32 %v1083, %v2447
        %v2452 = vsub.f32 %v1088, %v2447
        %v2453 = vsub.f32 %v1093, %v2447
        %v2454 = vsub.f32 %v1098, %v2447
        %v2455 = vsub.f32 %v1103, %v2447
        %v2456 = vsub.f32 %v1108, %v2447
        %v2457 = vsub.f32 %v1113, %v2447
        %v2458 = vsub.f32 %v1118, %v2447
        %v2459 = vsub.f32 %v1123, %v2447
        %v2460 = vsub.f32 %v1128, %v2447
        %v2461 = vsub.f32 %v1133, %v2447
        %v2462 = vsub.f32 %v1138, %v2447
        %v2463 = vsub.f32 %v1143, %v2447
        %v2464 = vsub.f32 %v1148, %v2447
        %v2465 = vsub.f32 %v1153, %v2447
        %v2466 = vsub.f32 %v1158, %v2447
        %v2467 = vsub.f32 %v1163, %v2447
        %v2468 = vsub.f32 %v1168, %v2447
        %v2469 = vsub.f32 %v1173, %v2447
        %v2470 = vsub.f32 %v1178, %v2447
        %v2471 = vsub.f32 %v1183, %v2447
        %v2472 = vsub.f32 %v1188, %v2447
        %v2473 = vsub.f32 %v1193, %v2447
        %v2474 = vsub.f32 %v1198, %v2447
        %v2475 = vsub.f32 %v1203, %v2447
        %v2476 = vsub.f32 %v1208, %v2447
        %v2477 = vsub.f32 %v1213, %v2447
        %v2478 = vsub.f32 %v1218, %v2447
        %v2479 = vsub.f32 %v1223, %v2447
        %v2480 = vmul.f32 %v2448, 1.442695
        %v2481 = vpow.pop %v2480
        %v2482 = vmul.f32 %v2449, 1.442695
        %v2483 = vpow.pop %v2482
        %v2484 = vmul.f32 %v2450, 1.442695
        %v2485 = vpow.pop %v2484
        %v2486 = vmul.f32 %v2451, 1.442695
        %v2487 = vpow.pop %v2486
        %v2488 = vmul.f32 %v2452, 1.442695
        %v2489 = vpow.pop %v2488
        %v2490 = vmul.f32 %v2453, 1.442695
        %v2491 = vpow.pop %v2490
        %v2492 = vmul.f32 %v2454, 1.442695
        %v2493 = vpow.pop %v2492
        %v2494 = vmul.f32 %v2455, 1.442695
        %v2495 = vpow.pop %v2494
        %v2496 = vmul.f32 %v2456, 1.442695
        %v2497 = vpow.pop %v2496
        %v2498 = vmul.f32 %v2457, 1.442695
        %v2499 = vpow.pop %v2498
        %v2500 = vmul.f32 %v2458, 1.442695
        %v2501 = vpow.pop %v2500
        %v2502 = vmul.f32 %v2459, 1.442695
        %v2503 = vpow.pop %v2502
        %v2504 = vmul.f32 %v2460, 1.442695
        %v2505 = vpow.pop %v2504
        %v2506 = vmul.f32 %v2461, 1.442695
        %v2507 = vpow.pop %v2506
        %v2508 = vmul.f32 %v2462, 1.442695
        %v2509 = vpow.pop %v2508
        %v2510 = vmul.f32 %v2463, 1.442695
        %v2511 = vpow.pop %v2510
        %v2512 = vmul.f32 %v2464, 1.442695
        %v2513 = vpow.pop %v2512
        %v2514 = vmul.f32 %v2465, 1.442695
        %v2515 = vpow.pop %v2514
        %v2516 = vmul.f32 %v2466, 1.442695
        %v2517 = vpow.pop %v2516
        %v2518 = vmul.f32 %v2467, 1.442695
        %v2519 = vpow.pop %v2518
        %v2520 = vmul.f32 %v2468, 1.442695
        %v2521 = vpow.pop %v2520
        %v2522 = vmul.f32 %v2469, 1.442695
        %v2523 = vpow.pop %v2522
        %v2524 = vmul.f32 %v2470, 1.442695
        %v2525 = vpow.pop %v2524
        %v2526 = vmul.f32 %v2471, 1.442695
        %v2527 = vpow.pop %v2526
        %v2528 = vmul.f32 %v2472, 1.442695
        %v2529 = vpow.pop %v2528
        %v2530 = vmul.f32 %v2473, 1.442695
        %v2531 = vpow.pop %v2530
        %v2532 = vmul.f32 %v2474, 1.442695
        %v2533 = vpow.pop %v2532
        %v2534 = vmul.f32 %v2475, 1.442695
        %v2535 = vpow.pop %v2534
        %v2536 = vmul.f32 %v2476, 1.442695
        %v2537 = vpow.pop %v2536
        %v2538 = vmul.f32 %v2477, 1.442695
        %v2539 = vpow.pop %v2538
        %v2540 = vmul.f32 %v2478, 1.442695
        %v2541 = vpow.pop %v2540
        %v2542 = vmul.f32 %v2479, 1.442695
        %v2543 = vpow.pop %v2542
        %v2544 = vmul.f32 %v2481, %v1353
        %v2545 = vmul.f32 %v2481, %v1355
        %v2546 = vmul.f32 %v2481, %v1357
        %v2547 = vmul.f32 %v2481, %v1359
        %v2548 = vmul.f32 %v2483, %v1361
        %v2549 = vmul.f32 %v2483, %v1363
        %v2550 = vmul.f32 %v2483, %v1365
        %v2551 = vmul.f32 %v2483, %v1367
        %v2552 = vmul.f32 %v2485, %v1369
        %v2553 = vmul.f32 %v2485, %v1371
        %v2554 = vmul.f32 %v2485, %v1373
        %v2555 = vmul.f32 %v2485, %v1375
        %v2556 = vmul.f32 %v2487, %v1377
        %v2557 = vmul.f32 %v2487, %v1379
        %v2558 = vmul.f32 %v2487, %v1381
        %v2559 = vmul.f32 %v2487, %v1383
        %v2560 = vmul.f32 %v2489, %v1385
        %v2561 = vmul.f32 %v2489, %v1387
        %v2562 = vmul.f32 %v2489, %v1389
        %v2563 = vmul.f32 %v2489, %v1391
        %v2564 = vmul.f32 %v2491, %v1393
        %v2565 = vmul.f32 %v2491, %v1395
        %v2566 = vmul.f32 %v2491, %v1397
        %v2567 = vmul.f32 %v2491, %v1399
        %v2568 = vmul.f32 %v2493, %v1401
        %v2569 = vmul.f32 %v2493, %v1403
        %v2570 = vmul.f32 %v2493, %v1405
        %v2571 = vmul.f32 %v2493, %v1407
        %v2572 = vmul.f32 %v2495, %v1409
        %v2573 = vmul.f32 %v2495, %v1411
        %v2574 = vmul.f32 %v2495, %v1413
        %v2575 = vmul.f32 %v2495, %v1415
        %v2576 = vmul.f32 %v2497, %v1417
        %v2577 = vmul.f32 %v2497, %v1419
        %v2578 = vmul.f32 %v2497, %v1421
        %v2579 = vmul.f32 %v2497, %v1423
        %v2580 = vmul.f32 %v2499, %v1425
        %v2581 = vmul.f32 %v2499, %v1427
        %v2582 = vmul.f32 %v2499, %v1429
        %v2583 = vmul.f32 %v2499, %v1431
        %v2584 = vmul.f32 %v2501, %v1433
        %v2585 = vmul.f32 %v2501, %v1435
        %v2586 = vmul.f32 %v2501, %v1437
        %v2587 = vmul.f32 %v2501, %v1439
        %v2588 = vmul.f32 %v2503, %v1441
        %v2589 = vmul.f32 %v2503, %v1443
        %v2590 = vmul.f32 %v2503, %v1445
        %v2591 = vmul.f32 %v2503, %v1447
        %v2592 = vmul.f32 %v2505, %v1449
        %v2593 = vmul.f32 %v2505, %v1451
        %v2594 = vmul.f32 %v2505, %v1453
        %v2595 = vmul.f32 %v2505, %v1455
        %v2596 = vmul.f32 %v2507, %v1457
        %v2597 = vmul.f32 %v2507, %v1459
        %v2598 = vmul.f32 %v2507, %v1461
        %v2599 = vmul.f32 %v2507, %v1463
        %v2600 = vmul.f32 %v2509, %v1465
        %v2601 = vmul.f32 %v2509, %v1467
        %v2602 = vmul.f32 %v2509, %v1469
        %v2603 = vmul.f32 %v2509, %v1471
        %v2604 = vmul.f32 %v2511, %v1473
        %v2605 = vmul.f32 %v2511, %v1475
        %v2606 = vmul.f32 %v2511, %v1477
        %v2607 = vmul.f32 %v2511, %v1479
        %v2608 = vmul.f32 %v2513, %v1481
        %v2609 = vmul.f32 %v2513, %v1483
        %v2610 = vmul.f32 %v2513, %v1485
        %v2611 = vmul.f32 %v2513, %v1487
        %v2612 = vmul.f32 %v2515, %v1489
        %v2613 = vmul.f32 %v2515, %v1491
        %v2614 = vmul.f32 %v2515, %v1493
        %v2615 = vmul.f32 %v2515, %v1495
        %v2616 = vmul.f32 %v2517, %v1497
        %v2617 = vmul.f32 %v2517, %v1499
        %v2618 = vmul.f32 %v2517, %v1501
        %v2619 = vmul.f32 %v2517, %v1503
        %v2620 = vmul.f32 %v2519, %v1505
        %v2621 = vmul.f32 %v2519, %v1507
        %v2622 = vmul.f32 %v2519, %v1509
        %v2623 = vmul.f32 %v2519, %v1511
        %v2624 = vmul.f32 %v2521, %v1513
        %v2625 = vmul.f32 %v2521, %v1515
        %v2626 = vmul.f32 %v2521, %v1517
        %v2627 = vmul.f32 %v2521, %v1519
        %v2628 = vmul.f32 %v2523, %v1521
        %v2629 = vmul.f32 %v2523, %v1523
        %v2630 = vmul.f32 %v2523, %v1525
        %v2631 = vmul.f32 %v2523, %v1527
        %v2632 = vmul.f32 %v2525, %v1529
        %v2633 = vmul.f32 %v2525, %v1531
        %v2634 = vmul.f32 %v2525, %v1533
        %v2635 = vmul.f32 %v2525, %v1535
        %v2636 = vmul.f32 %v2527, %v1537
        %v2637 = vmul.f32 %v2527, %v1539
        %v2638 = vmul.f32 %v2527, %v1541
        %v2639 = vmul.f32 %v2527, %v1543
        %v2640 = vmul.f32 %v2529, %v1545
        %v2641 = vmul.f32 %v2529, %v1547
        %v2642 = vmul.f32 %v2529, %v1549
        %v2643 = vmul.f32 %v2529, %v1551
        %v2644 = vmul.f32 %v2531, %v1553
        %v2645 = vmul.f32 %v2531, %v1555
        %v2646 = vmul.f32 %v2531, %v1557
        %v2647 = vmul.f32 %v2531, %v1559
        %v2648 = vmul.f32 %v2533, %v1561
        %v2649 = vmul.f32 %v2533, %v1563
        %v2650 = vmul.f32 %v2533, %v1565
        %v2651 = vmul.f32 %v2533, %v1567
        %v2652 = vmul.f32 %v2535, %v1569
        %v2653 = vmul.f32 %v2535, %v1571
        %v2654 = vmul.f32 %v2535, %v1573
        %v2655 = vmul.f32 %v2535, %v1575
        %v2656 = vmul.f32 %v2537, %v1577
        %v2657 = vmul.f32 %v2537, %v1579
        %v2658 = vmul.f32 %v2537, %v1581
        %v2659 = vmul.f32 %v2537, %v1583
        %v2660 = vmul.f32 %v2539, %v1585
        %v2661 = vmul.f32 %v2539, %v1587
        %v2662 = vmul.f32 %v2539, %v1589
        %v2663 = vmul.f32 %v2539, %v1591
        %v2664 = vmul.f32 %v2541, %v1593
        %v2665 = vmul.f32 %v2541, %v1595
        %v2666 = vmul.f32 %v2541, %v1597
        %v2667 = vmul.f32 %v2541, %v1599
        %v2668 = vmul.f32 %v2543, %v1601
        %v2669 = vmul.f32 %v2543, %v1603
        %v2670 = vmul.f32 %v2543, %v1605
        %v2671 = vmul.f32 %v2543, %v1607
        %2672 = vmatprep.subr.mxu0 %v2545
        %2673 = vmatpush1.msra.mxu0 %v2544
        %2674 = vmatprep.subr.mxu0 %v2549
        %2675 = vmatpush1.msra.mxu0 %v2548
        %2676 = vmatprep.subr.mxu0 %v2553
        %2677 = vmatpush1.msra.mxu0 %v2552
        %2678 = vmatprep.subr.mxu0 %v2557
        %2679 = vmatpush1.msra.mxu0 %v2556
        %2680 = vmatprep.subr.mxu0 %v2561
        %2681 = vmatpush1.msra.mxu0 %v2560
        %2682 = vmatprep.subr.mxu0 %v2565
        %2683 = vmatpush1.msra.mxu0 %v2564
        %2684 = vmatprep.subr.mxu0 %v2569
        %2685 = vmatpush1.msra.mxu0 %v2568
        %2686 = vmatprep.subr.mxu0 %v2573
        %2687 = vmatpush1.msra.mxu0 %v2572
        %2688 = vmatprep.subr.mxu0 %v2577
        %2689 = vmatpush1.msra.mxu0 %v2576
        %2690 = vmatprep.subr.mxu0 %v2581
        %2691 = vmatpush1.msra.mxu0 %v2580
        %2692 = vmatprep.subr.mxu0 %v2585
        %2693 = vmatpush1.msra.mxu0 %v2584
        %2694 = vmatprep.subr.mxu0 %v2589
        %2695 = vmatpush1.msra.mxu0 %v2588
        %2696 = vmatprep.subr.mxu0 %v2593
        %2697 = vmatpush1.msra.mxu0 %v2592
        %2698 = vmatprep.subr.mxu0 %v2597
        %2699 = vmatpush1.msra.mxu0 %v2596
        %2700 = vmatprep.subr.mxu0 %v2601
        %2701 = vmatpush1.msra.mxu0 %v2600
        %2702 = vmatprep.subr.mxu0 %v2605
        %2703 = vmatpush1.msra.mxu0 %v2604
        %2704 = vmatprep.subr.mxu0 %v2609
        %2705 = vmatpush1.msra.mxu0 %v2608
        %2706 = vmatprep.subr.mxu0 %v2613
        %2707 = vmatpush1.msra.mxu0 %v2612
        %2708 = vmatprep.subr.mxu0 %v2617
        %2709 = vmatpush1.msra.mxu0 %v2616
        %2710 = vmatprep.subr.mxu0 %v2621
        %2711 = vmatpush1.msra.mxu0 %v2620
        %2712 = vmatprep.subr.mxu0 %v2625
        %2713 = vmatpush1.msra.mxu0 %v2624
        %2714 = vmatprep.subr.mxu0 %v2629
        %2715 = vmatpush1.msra.mxu0 %v2628
        %2716 = vmatprep.subr.mxu0 %v2633
        %2717 = vmatpush1.msra.mxu0 %v2632
        %2718 = vmatprep.subr.mxu0 %v2637
        %2719 = vmatpush1.msra.mxu0 %v2636
        %2720 = vmatprep.subr.mxu0 %v2641
        %2721 = vmatpush1.msra.mxu0 %v2640
        %2722 = vmatprep.subr.mxu0 %v2645
        %2723 = vmatpush1.msra.mxu0 %v2644
        %2724 = vmatprep.subr.mxu0 %v2649
        %2725 = vmatpush1.msra.mxu0 %v2648
        %2726 = vmatprep.subr.mxu0 %v2653
        %2727 = vmatpush1.msra.mxu0 %v2652
        %2728 = vmatprep.subr.mxu0 %v2657
        %2729 = vmatpush1.msra.mxu0 %v2656
        %2730 = vmatprep.subr.mxu0 %v2661
        %2731 = vmatpush1.msra.mxu0 %v2660
        %2732 = vmatprep.subr.mxu0 %v2665
        %2733 = vmatpush1.msra.mxu0 %v2664
        %2734 = vmatprep.subr.mxu0 %v2669
        %2735 = vmatpush1.msra.mxu0 %v2668
        %2736 = vmatprep.mubr.f32.mxu0 1.0
        %2737 = vmatmul.mubr.f32.gmra.mrb[0].mxu0 1.0
        %v2738 = vpop.f32.mrb[0].mxu0
        %v2739 = vadd.f32 0.0, %v2738
        %v2740 = vpop.f32.mrb[0].mxu0
        %v2741 = vadd.f32 0.0, %v2740
        %2742 = vdwg.mxu0
        %2743 = vmatprep.subr.mxu0 %v2547
        %2744 = vmatpush1.msra.mxu0 %v2546
        %2745 = vmatprep.subr.mxu0 %v2551
        %2746 = vmatpush1.msra.mxu0 %v2550
        %2747 = vmatprep.subr.mxu0 %v2555
        %2748 = vmatpush1.msra.mxu0 %v2554
        %2749 = vmatprep.subr.mxu0 %v2559
        %2750 = vmatpush1.msra.mxu0 %v2558
        %2751 = vmatprep.subr.mxu0 %v2563
        %2752 = vmatpush1.msra.mxu0 %v2562
        %2753 = vmatprep.subr.mxu0 %v2567
        %2754 = vmatpush1.msra.mxu0 %v2566
        %2755 = vmatprep.subr.mxu0 %v2571
        %2756 = vmatpush1.msra.mxu0 %v2570
        %2757 = vmatprep.subr.mxu0 %v2575
        %2758 = vmatpush1.msra.mxu0 %v2574
        %2759 = vmatprep.subr.mxu0 %v2579
        %2760 = vmatpush1.msra.mxu0 %v2578
        %2761 = vmatprep.subr.mxu0 %v2583
        %2762 = vmatpush1.msra.mxu0 %v2582
        %2763 = vmatprep.subr.mxu0 %v2587
        %2764 = vmatpush1.msra.mxu0 %v2586
        %2765 = vmatprep.subr.mxu0 %v2591
        %2766 = vmatpush1.msra.mxu0 %v2590
        %2767 = vmatprep.subr.mxu0 %v2595
        %2768 = vmatpush1.msra.mxu0 %v2594
        %2769 = vmatprep.subr.mxu0 %v2599
        %2770 = vmatpush1.msra.mxu0 %v2598
        %2771 = vmatprep.subr.mxu0 %v2603
        %2772 = vmatpush1.msra.mxu0 %v2602
        %2773 = vmatprep.subr.mxu0 %v2607
        %2774 = vmatpush1.msra.mxu0 %v2606
        %2775 = vmatprep.subr.mxu0 %v2611
        %2776 = vmatpush1.msra.mxu0 %v2610
        %2777 = vmatprep.subr.mxu0 %v2615
        %2778 = vmatpush1.msra.mxu0 %v2614
        %2779 = vmatprep.subr.mxu0 %v2619
        %2780 = vmatpush1.msra.mxu0 %v2618
        %2781 = vmatprep.subr.mxu0 %v2623
        %2782 = vmatpush1.msra.mxu0 %v2622
        %2783 = vmatprep.subr.mxu0 %v2627
        %2784 = vmatpush1.msra.mxu0 %v2626
        %2785 = vmatprep.subr.mxu0 %v2631
        %2786 = vmatpush1.msra.mxu0 %v2630
        %2787 = vmatprep.subr.mxu0 %v2635
        %2788 = vmatpush1.msra.mxu0 %v2634
        %2789 = vmatprep.subr.mxu0 %v2639
        %2790 = vmatpush1.msra.mxu0 %v2638
        %2791 = vmatprep.subr.mxu0 %v2643
        %2792 = vmatpush1.msra.mxu0 %v2642
        %2793 = vmatprep.subr.mxu0 %v2647
        %2794 = vmatpush1.msra.mxu0 %v2646
        %2795 = vmatprep.subr.mxu0 %v2651
        %2796 = vmatpush1.msra.mxu0 %v2650
        %2797 = vmatprep.subr.mxu0 %v2655
        %2798 = vmatpush1.msra.mxu0 %v2654
        %2799 = vmatprep.subr.mxu0 %v2659
        %2800 = vmatpush1.msra.mxu0 %v2658
        %2801 = vmatprep.subr.mxu0 %v2663
        %2802 = vmatpush1.msra.mxu0 %v2662
        %2803 = vmatprep.subr.mxu0 %v2667
        %2804 = vmatpush1.msra.mxu0 %v2666
        %2805 = vmatprep.subr.mxu0 %v2671
        %2806 = vmatpush1.msra.mxu0 %v2670
        %2807 = vmatprep.mubr.f32.mxu0 1.0
        %2808 = vmatmul.mubr.f32.gmra.mrb[0].mxu0 1.0
        %v2809 = vpop.f32.mrb[0].mxu0
        %v2810 = vadd.f32 0.0, %v2809
        %v2811 = vpop.f32.mrb[0].mxu0
        %v2812 = vadd.f32 0.0, %v2811
        %2813 = vdwg.mxu0
        %v2818 = vcombine.low %v2739, %v2741
        %v2819 = vcombine.low %v2810, %v2812
        %v2821 = vunpack.c.l.s4 1966171168
        %v2822 = vunpack.c.0.s8 %v2821
        %v2823 = vlaneseq
        %v2824 = vshrl.u32 %v2823, 7
        %v2825 = vsub.s32 %v2822, %v2824
        %v2826 = vrot.slane %v2818, %v2825
        %v2828 = vunpack.c.l.s4 1966171168
        %v2829 = vunpack.c.0.s8 %v2828
        %v2830 = vlaneseq
        %v2831 = vshrl.u32 %v2830, 7
        %v2832 = vsub.s32 %v2829, %v2831
        %v2833 = vrot.slane %v2819, %v2832
        %v2834 = vcombine.low %v2826, %v2833
        %v2836 = vunpack.c.l.s4 1966171168
        %v2837 = vunpack.c.0.s8 %v2836
        %v2838 = vlaneseq
        %v2839 = vshrl.u32 %v2838, 7
        %v2840 = vsub.s32 %v2837, %v2839
        %v2841 = vrot.slane %v2834, %v2840
        %v2843 = vlaneseq
        %vm2844 = vcmp.ge.s32.totalorder %v2843, 0
        %vm2845 = vcmp.lt.s32.totalorder %v2843, 512
        %vm2846 = vmand %vm2844, %vm2845
        %2847 = vst.msk [vmem:[%s292] sm:$0xf] %vm2846, %v2841
        %2848 = vst.msk [vmem:[%s285] sm:$0xf] %vm2846, %v2447
        %s2849 = smul.u32 32, %s32
        %p2850 = scmp.lt.s32.totalorder %s2849, 63
        %s2851 = scalar_select %p2850, %s2849, 63
        %s2852 = smul.addr %s2851, 8
        %s2853 = scalar_lea.vmem %s3, %s2852
        %s2854 = sand.u32 %s144, 1
        %s2855 = scalar_lea.sflag [#allocation8], %s2854
        %s2856 = sand.u32 %s144, 1
        %s2857 = smul.addr %s2856, 4
        %s2858 = scalar_lea.vmem [#allocation11], %s2857
        %s2859 = sand.u32 %s172, 1
        %s2860 = scalar_lea.sflag [#allocation13], %s2859
        %s2861 = sand.u32 %s172, 1
        %s2862 = smul.addr %s2861, 4
        %s2863 = scalar_lea.vmem [#allocation12], %s2862
        // Predicated region
        $region45: #{tpu_custom_call.1} parent=31 // pred_check
          %p2864 = pneg %p126
        $region46: #{tpu_custom_call.1} parent=31 // pred_check_branch
          %2866 = sbr.rel (%p2864) target = $region48
        $region47: #{tpu_custom_call.1} parent=31 // pred_region
          %s2867 = smul.u32 32, %s32
        $region48: #{tpu_custom_call.1} parent=31 // pred_fallthru
          _
        // Predicated region
        $region49: #{tpu_custom_call.1} parent=31 // pred_check
          %p2868 = pneg %p154
        $region50: #{tpu_custom_call.1} parent=31 // pred_check_branch
          %2870 = sbr.rel (%p2868) target = $region52
        $region51: #{tpu_custom_call.1} parent=31 // pred_region
          %s2871 = smul.u32 4, %s33
          %s2873 = ssub.s32 64, 64
          %2874 = vsyncadd %s2855, %s2873
          %s2875 = smul.addr %s32, 4
          %s2876 = sadd.s32 %s2871, %s2875
          %s2877 = smul.addr %s2876, 16
          %s2878 = scalar_lea.hbm %s4, %s2877
          %s2880 = sshll.u32 %s2858, 4
          %s2881 = int_to_ptr.vmem [resolvable:$true] %s2880
          %2883 = dma.vmem_to_hbm [thread:$0]  %s2881, 64, %s2878, %s2855
        $region52: #{tpu_custom_call.1} parent=31 // pred_fallthru
          _
        // Predicated region
        $region53: #{tpu_custom_call.1} parent=31 // pred_check
          %p2884 = pneg %p182
        $region54: #{tpu_custom_call.1} parent=31 // pred_check_branch
          %2886 = sbr.rel (%p2884) target = $region56
        $region55: #{tpu_custom_call.1} parent=31 // pred_region
          %s2887 = smul.u32 4, %s33
          %s2889 = ssub.s32 64, 64
          %2890 = vsyncadd %s2860, %s2889
          %s2891 = smul.addr %s32, 4
          %s2892 = sadd.s32 %s2887, %s2891
          %s2893 = smul.addr %s2892, 16
          %s2894 = scalar_lea.hbm %s5, %s2893
          %s2896 = sshll.u32 %s2863, 4
          %s2897 = int_to_ptr.vmem [resolvable:$true] %s2896
          %2899 = dma.vmem_to_hbm [thread:$0]  %s2897, 64, %s2894, %s2860
        $region56: #{tpu_custom_call.1} parent=31 // pred_fallthru
          _
      $region32: #{tpu_custom_call.1} parent=5 // pred_fallthru
        _
      %p2900 = scmp.le.s32.totalorder 2, %s23
      // Predicated region
      $region57: #{tpu_custom_call.1} parent=5 // pred_check
        %p2901 = pneg %p2900
      $region58: #{tpu_custom_call.1} parent=5 // pred_check_branch
        %2903 = sbr.rel (%p2901) target = $region60
      $region59: #{tpu_custom_call.1} parent=5 // pred_region
        %s2904 = ssub.s32 %s23, 2
        // Predicated region
        $region61: #{tpu_custom_call.1} parent=59 // pred_check
          %p2905 = pneg %p132
        $region62: #{tpu_custom_call.1} parent=59 // pred_check_branch
          %2907 = sbr.rel (%p2905) target = $region64
        $region63: #{tpu_custom_call.1} parent=59 // pred_region
          %s2908 = smul.u32 32, %s34
          %p2909 = scmp.lt.s32.totalorder %s2908, 63
          %s2910 = scalar_select %p2909, %s2908, 63
          %s2911 = smul.addr %s2910, 8
          %s2912 = scalar_lea.vmem %s3, %s2911
        $region64: #{tpu_custom_call.1} parent=59 // pred_fallthru
          _
        // Predicated region
        $region65: #{tpu_custom_call.1} parent=59 // pred_check
          %p2913 = pneg %p160
        $region66: #{tpu_custom_call.1} parent=59 // pred_check_branch
          %2915 = sbr.rel (%p2913) target = $region68
        $region67: #{tpu_custom_call.1} parent=59 // pred_region
          %s2916 = sand.u32 %s145, 1
          %s2917 = scalar_lea.sflag [#allocation8], %s2916
          %s2918 = sand.u32 %s145, 1
          %s2919 = smul.addr %s2918, 4
          %s2920 = scalar_lea.vmem [#allocation11], %s2919
          %2921 = dma.done %s2917, 64
        $region68: #{tpu_custom_call.1} parent=59 // pred_fallthru
          _
        // Predicated region
        $region69: #{tpu_custom_call.1} parent=59 // pred_check
          %p2922 = pneg %p188
        $region70: #{tpu_custom_call.1} parent=59 // pred_check_branch
          %2924 = sbr.rel (%p2922) target = $region72
        $region71: #{tpu_custom_call.1} parent=59 // pred_region
          %s2925 = sand.u32 %s173, 1
          %s2926 = scalar_lea.sflag [#allocation13], %s2925
          %s2927 = sand.u32 %s173, 1
          %s2928 = smul.addr %s2927, 4
          %s2929 = scalar_lea.vmem [#allocation12], %s2928
          %2930 = dma.done %s2926, 64
        $region72: #{tpu_custom_call.1} parent=59 // pred_fallthru
          _
      $region60: #{tpu_custom_call.1} parent=5 // pred_fallthru
        _
    $region6: #{tpu_custom_call.1} parent=1 // loop_footer
      %s27 = sadd.s32 1, %s23
    $region7: #{tpu_custom_call.1} parent=1 // loop_footer_branch
      %22 = sbr.rel target = $region3
    $region8: #{tpu_custom_call.1} parent=1 // loop_exit
      _
    %2931 = vsyncpa [#allocation7], 1
    %s2932 = scalar_lea.sflag [#allocation7], 1
    %2933 = vsyncpa %s2932, 1
    %2934 = vsyncpa [#allocation10], 1
    %2935 = vsyncpa [#allocation8], 1
    %s2936 = scalar_lea.sflag [#allocation8], 1
    %2937 = vsyncpa %s2936, 1
    %2938 = vsyncpa [#allocation13], 1
    %s2939 = scalar_lea.sflag [#allocation13], 1
    %2940 = vsyncpa %s2939, 1

</llo_original>
